<compile_context>
chip_gen: v7x
topology: tpu7x:2x2x1
jax: 0.10.0
libtpu: 0.0.40
codegen_flags: <defaults>
</compile_context>

<pallas_src>
import jax
import jax.numpy as jnp
from jax import lax
from jax.experimental import pallas as pl
from jax.experimental.pallas import tpu as pltpu

KS = 5                    # conv kernel size
C_IN, C1, C2 = 4, 16, 32
POOL_OUT = 20             # AdaptiveAvgPool1d target length
FC_IN = C2 * POOL_OUT     # 640
FC_H1, FC_H2 = 256, 96
BN_CAP = 256              # max samples per grid block (batch tile)


# ---------------------------------------------------------------------------
# Fused kernel: conv1 -> ReLU -> MaxPool(2) -> conv2('same') -> ReLU ->
#               AvgPool(->20) -> flatten -> 640-256-96-1 MLP
# ---------------------------------------------------------------------------
def _simple_cnn_kernel(x_ref, w1_ref, b1_ref, w2_ref, b2_ref,
                       fw1_ref, fb1_ref, fw2_ref, fb2_ref, fw3_ref, fb3_ref,
                       o_ref, hp_s, feat_s):
    bn, lp, cin = x_ref.shape
    l1 = lp - (KS - 1)          # conv1 'valid' output length
    l2 = l1 // 2                # after MaxPool1d(2)
    win = l2 // POOL_OUT        # uniform AdaptiveAvgPool1d window
    pad = (KS - 1) // 2         # conv2 'same' padding

    x = x_ref[...]                                               # (bn, lp, Cin)

    # ---- conv1 ('valid') as KS tap-accumulated matmuls (no im2col scratch) ----
    # Each tap's LHS slice is at lane offset 0 -> no masked lane-offset stores;
    # the extra MXU pushes ride in the (slack) vector-extended slot.
    h = jnp.dot(x[:, 0:l1, :].reshape(bn * l1, cin), w1_ref[0],
                preferred_element_type=jnp.float32)
    for k in range(1, KS):
        h = h + jnp.dot(x[:, k:k + l1, :].reshape(bn * l1, cin), w1_ref[k],
                        preferred_element_type=jnp.float32)
    h = jnp.maximum(h + b1_ref[...], 0.0)                        # bias + ReLU (f32 VPU)
    h = h.reshape(bn, l2, 2, C1).max(axis=2)                     # MaxPool1d(2) -> (bn, l2, C1)

    # ---- conv2 ('same'): zero only the boundary rows of the padded scratch ----
    hp_s[:, 0:pad, :] = jnp.zeros((bn, pad, C1), jnp.float32)
    hp_s[:, pad + l2:pad + l2 + pad, :] = jnp.zeros((bn, pad, C1), jnp.float32)
    hp_s[:, pad:pad + l2, :] = h
    hp = hp_s[...]                                               # (bn, l2 + 2*pad, C1)
    g = jnp.dot(hp[:, 0:l2, :].reshape(bn * l2, C1), w2_ref[0],
                preferred_element_type=jnp.float32)
    for k in range(1, KS):
        g = g + jnp.dot(hp[:, k:k + l2, :].reshape(bn * l2, C1), w2_ref[k],
                        preferred_element_type=jnp.float32)
    g = jnp.maximum(g + b2_ref[...], 0.0)                        # (bn*l2, C2)

    # ---- AdaptiveAvgPool1d(20): vectorized window reduce (no unrolled adds) ----
    pooled = g.reshape(bn, POOL_OUT, win, C2).sum(axis=2) * (1.0 / win)   # (bn, 20, C2)

    # ---- flatten in natural (L, C) order; fc1 rows were pre-permuted at init so
    #      this matches torch's (C, L) flatten without a transpose.
    for l in range(POOL_OUT):
        feat_s[:, l * C2:(l + 1) * C2] = pooled[:, l, :]

    # ---- fc: 640 -> 256 -> ReLU -> 96 -> ReLU -> 1 (dropout p=0 is identity) ----
    # fc1/fc2 weights are bf16 (halved DMA/VMEM); MXU accumulates in f32 and all
    # elementwise math stays f32 (no bf16 VPU on v5e).
    f = jnp.dot(feat_s[...].astype(jnp.bfloat16), fw1_ref[...],
                preferred_element_type=jnp.float32) + fb1_ref[...]
    f = jnp.maximum(f, 0.0)
    f = jnp.dot(f.astype(jnp.bfloat16), fw2_ref[...],
                preferred_element_type=jnp.float32) + fb2_ref[...]
    f = jnp.maximum(f, 0.0)
    # final 96 -> 1 as VPU multiply + lane reduction (avoids a 1-column MXU dot)
    o_ref[0] = jnp.sum(f * fw3_ref[...], axis=-1, keepdims=True) + fb3_ref[...]


# ---------------------------------------------------------------------------
# Wrapper
# ---------------------------------------------------------------------------
def simple_cnn_forward(x_ncl, kp):
    """x_ncl: PyTorch-layout input (N, 4, L). kp: prepared kernel params."""
    n, cin, lp = x_ncl.shape
    assert cin == C_IN
    l1 = lp - (KS - 1)
    assert l1 % 2 == 0
    l2 = l1 // 2
    assert l2 % POOL_OUT == 0, "L chosen so AdaptiveAvgPool1d(20) is a uniform window"
    # TODO(synk): general AdaptiveAvgPool1d (non-uniform windows) is not implemented.

    x = jnp.transpose(x_ncl, (0, 2, 1)).astype(jnp.float32)     # NCL -> NLC (channels in lanes)

    # Generation-aware batch split: a grid is a *sequential* loop on single-TC
    # v5e/v6e, so small batches get a single block (no per-step overhead, weights
    # streamed once); large batches get BN_CAP-sample tiles so per-block VMEM stays
    # inside v7x's 64 MiB and both v7x TensorCores get "parallel" blocks.
    if n <= BN_CAP:
        bn, nblk = n, 1
    else:
        bn = BN_CAP
        nblk = -(-n // bn)
    n_pad = nblk * bn
    if n_pad != n:
        x = jnp.concatenate([x, jnp.zeros((n_pad - n, lp, C_IN), jnp.float32)], axis=0)

    flops = 2 * n_pad * (l1 * KS * C_IN * C1 + l2 * KS * C1 * C2
                         + FC_IN * FC_H1 + FC_H1 * FC_H2 + FC_H2)
    bytes_accessed = (4 * n_pad * lp * C_IN + 4 * n_pad
                      + 4 * (KS * C_IN * C1 + KS * C1 * C2 + C1 + C2
                             + FC_H1 + FC_H2 + FC_H2 + 1)
                      + 2 * (FC_IN * FC_H1 + FC_H1 * FC_H2))

    out = pl.pallas_call(
        _simple_cnn_kernel,
        out_shape=jax.ShapeDtypeStruct((nblk, bn, 1), jnp.float32),
        grid=(nblk,),
        in_specs=[
            pl.BlockSpec((bn, lp, C_IN), lambda i: (i, 0, 0)),
            # Constant-index weights/biases (same block every grid step).
            # TODO(synk): could pin single-buffering via pipeline_mode=pl.Buffered(1).
            pl.BlockSpec((KS, C_IN, C1), lambda i: (0, 0, 0)),
            pl.BlockSpec((1, C1), lambda i: (0, 0)),
            pl.BlockSpec((KS, C1, C2), lambda i: (0, 0, 0)),
            pl.BlockSpec((1, C2), lambda i: (0, 0)),
            pl.BlockSpec((FC_IN, FC_H1), lambda i: (0, 0)),
            pl.BlockSpec((1, FC_H1), lambda i: (0, 0)),
            pl.BlockSpec((FC_H1, FC_H2), lambda i: (0, 0)),
            pl.BlockSpec((1, FC_H2), lambda i: (0, 0)),
            pl.BlockSpec((1, FC_H2), lambda i: (0, 0)),
            pl.BlockSpec((1, 1), lambda i: (0, 0)),
        ],
        out_specs=pl.BlockSpec((1, bn, 1), lambda i: (i, 0, 0)),
        scratch_shapes=[
            pltpu.VMEM((bn, l2 + 2 * ((KS - 1) // 2), C1), jnp.float32),  # conv2 'same' pad
            pltpu.VMEM((bn, FC_IN), jnp.float32),                         # flattened features
        ],
        compiler_params=pltpu.CompilerParams(dimension_semantics=("parallel",)),
        cost_estimate=pl.CostEstimate(flops=flops, transcendentals=0,
                                      bytes_accessed=bytes_accessed),
    )(x, kp["w1k"], kp["b1"], kp["w2k"], kp["b2"],
      kp["fw1p"], kp["fb1"], kp["fw2"], kp["fb2"], kp["fw3r"], kp["fb3"])
    return out.reshape(n_pad, 1)[:n]


# ---------------------------------------------------------------------------
# Parameters (synthetic, torch-layout) + one-time kernel layout prep
# ---------------------------------------------------------------------------
def init_params(key):
    ks = jax.random.split(key, 10)

    def nrm(k, shape, scale=0.1):
        return (scale * jax.random.normal(k, shape)).astype(jnp.float32)

    return {
        "w1": nrm(ks[0], (C1, C_IN, KS)),          # torch Conv1d weight (O, I, K)
        "b1": nrm(ks[1], (C1,)),
        "w2": nrm(ks[2], (C2, C1, KS)),
        "b2": nrm(ks[3], (C2,)),
        "fw1": nrm(ks[4], (FC_IN, FC_H1), 0.05),   # torch fc1 weight^T; in-index = c*20 + l
        "fb1": nrm(ks[5], (FC_H1,)),
        "fw2": nrm(ks[6], (FC_H1, FC_H2), 0.05),
        "fb2": nrm(ks[7], (FC_H2,)),
        "fw3": nrm(ks[8], (FC_H2, 1), 0.05),
        "fb3": nrm(ks[9], (1,)),
    }


def prepare_kernel_params(p):
    """One-time layout plumbing: per-tap conv weights, fc1 row permutation, bf16 fc weights."""
    j = jnp.arange(FC_IN)
    # kernel flatten index j = l*C2 + c  ->  torch flatten index c*POOL_OUT + l
    perm = (j % C2) * POOL_OUT + (j // C2)
    return {
        "w1k": jnp.transpose(p["w1"], (2, 1, 0)),                 # (KS, Cin, C1), f32
        "b1":  p["b1"].reshape(1, C1),
        "w2k": jnp.transpose(p["w2"], (2, 1, 0)),                 # (KS, C1, C2), f32
        "b2":  p["b2"].reshape(1, C2),
        "fw1p": p["fw1"][perm].astype(jnp.bfloat16),              # pre-permuted rows, bf16
        "fb1": p["fb1"].reshape(1, FC_H1),
        "fw2": p["fw2"].astype(jnp.bfloat16),
        "fb2": p["fb2"].reshape(1, FC_H2),
        "fw3r": p["fw3"].reshape(1, FC_H2),
        "fb3": p["fb3"].reshape(1, 1),
    }


# ---------------------------------------------------------------------------
# Pure-JAX reference (mirrors PyTorch semantics) for validation
# ---------------------------------------------------------------------------
def reference_forward(x_ncl, p):
    dn = ("NCH", "OIH", "NCH")
    h = lax.conv_general_dilated(x_ncl, p["w1"], (1,), "VALID", dimension_numbers=dn,
                                 precision=lax.Precision.HIGHEST)
    h = jnp.maximum(h + p["b1"][None, :, None], 0.0)
    n, c, l1 = h.shape
    h = h.reshape(n, c, l1 // 2, 2).max(-1)                        # MaxPool1d(2)
    h = lax.conv_general_dilated(h, p["w2"], (1,), [(2, 2)], dimension_numbers=dn,
                                 precision=lax.Precision.HIGHEST)  # padding='same' (k=5)
    h = jnp.maximum(h + p["b2"][None, :, None], 0.0)
    n, c, l2 = h.shape
    h = h.reshape(n, c, POOL_OUT, l2 // POOL_OUT).mean(-1)         # AdaptiveAvgPool1d(20)
    f = h.reshape(n, -1)                                           # torch flatten (C-major)
    f = jnp.maximum(f @ p["fw1"] + p["fb1"], 0.0)
    f = jnp.maximum(f @ p["fw2"] + p["fb2"], 0.0)
    return f @ p["fw3"] + p["fb3"]


# ---------------------------------------------------------------------------
if __name__ == "__main__":
    key = jax.random.PRNGKey(0)
    k_x, k_p = jax.random.split(key)

    N, L = 2, 84   # (L-4)=80 -> maxpool -> 40 -> 'same' conv -> 40 -> avgpool -> 20
    x = jax.random.normal(k_x, (N, C_IN, L), dtype=jnp.float32)    # PyTorch NCL input
    params = init_params(k_p)
    kparams = prepare_kernel_params(params)

    fwd = jax.jit(simple_cnn_forward)
    out = jax.block_until_ready(fwd(x, kparams))
    ref = jax.block_until_ready(reference_forward(x, params))

    assert out.shape == (N, 1), out.shape
    # NOTE: kernel dots use default MXU precision (bf16 passes) and bf16 fc weights,
    # while the reference uses lax.Precision.HIGHEST -> loose tolerance.
    assert jnp.allclose(out, ref, rtol=5e-2, atol=5e-2), (out, ref)

    print("KERNEL_OK")
</pallas_src>

<mosaic_0001>
module attributes {stable_mosaic.version = 11 : i64} {
  func.func @_simple_cnn_kernel(%arg0: i32, %arg1: memref<2x84x4xf32, #tpu.memory_space<vmem>>, %arg2: memref<5x4x16xf32, #tpu.memory_space<vmem>>, %arg3: memref<1x16xf32, #tpu.memory_space<vmem>>, %arg4: memref<5x16x32xf32, #tpu.memory_space<vmem>>, %arg5: memref<1x32xf32, #tpu.memory_space<vmem>>, %arg6: memref<640x256xbf16, #tpu.memory_space<vmem>>, %arg7: memref<1x256xf32, #tpu.memory_space<vmem>>, %arg8: memref<256x96xbf16, #tpu.memory_space<vmem>>, %arg9: memref<1x96xf32, #tpu.memory_space<vmem>>, %arg10: memref<1x96xf32, #tpu.memory_space<vmem>>, %arg11: memref<1x1xf32, #tpu.memory_space<vmem>>, %arg12: memref<1x2x1xf32, #tpu.memory_space<vmem>>, %arg13: memref<2x44x16xf32, #tpu.memory_space<vmem>>, %arg14: memref<2x640xf32, #tpu.memory_space<vmem>>) attributes {dimension_semantics = [#tpu.dimension_semantics<parallel>], iteration_bounds = array<i64: 1>, scalar_prefetch = 0 : i64, scratch_operands = 2 : i64, tpu.core_type = #tpu.core_type<tc>, window_params = [{transform_indices = @transform_0, window_bounds = array<i64: 2, 84, 4>}, {pipeline_mode = #tpu.pipeline_mode<synchronous>, transform_indices = @transform_1, window_bounds = array<i64: 5, 4, 16>}, {pipeline_mode = #tpu.pipeline_mode<synchronous>, transform_indices = @transform_2, window_bounds = array<i64: 1, 16>}, {pipeline_mode = #tpu.pipeline_mode<synchronous>, transform_indices = @transform_3, window_bounds = array<i64: 5, 16, 32>}, {pipeline_mode = #tpu.pipeline_mode<synchronous>, transform_indices = @transform_4, window_bounds = array<i64: 1, 32>}, {pipeline_mode = #tpu.pipeline_mode<synchronous>, transform_indices = @transform_5, window_bounds = array<i64: 640, 256>}, {pipeline_mode = #tpu.pipeline_mode<synchronous>, transform_indices = @transform_6, window_bounds = array<i64: 1, 256>}, {pipeline_mode = #tpu.pipeline_mode<synchronous>, transform_indices = @transform_7, window_bounds = array<i64: 256, 96>}, {pipeline_mode = #tpu.pipeline_mode<synchronous>, transform_indices = @transform_8, window_bounds = array<i64: 1, 96>}, {pipeline_mode = #tpu.pipeline_mode<synchronous>, transform_indices = @transform_9, window_bounds = array<i64: 1, 96>}, {pipeline_mode = #tpu.pipeline_mode<synchronous>, transform_indices = @transform_10, window_bounds = array<i64: 1, 1>}, {transform_indices = @transform_11, window_bounds = array<i64: 1, 2, 1>}]} {
    %c0 = arith.constant 0 : index
    %c0_0 = arith.constant 0 : index
    %c0_1 = arith.constant 0 : index
    %0 = vector.load %arg1[%c0, %c0_0, %c0_1] : memref<2x84x4xf32, #tpu.memory_space<vmem>>, vector<2x84x4xf32>
    %1 = vector.extract_strided_slice %0 {offsets = [0, 0, 0], sizes = [2, 80, 4], strides = [1, 1, 1]} : vector<2x84x4xf32> to vector<2x80x4xf32>
    %2 = vector.shape_cast %1 : vector<2x80x4xf32> to vector<160x4xf32>
    %c0_2 = arith.constant 0 : index
    %c0_3 = arith.constant 0 : index
    %c0_4 = arith.constant 0 : index
    %3 = vector.load %arg2[%c0_2, %c0_3, %c0_4] : memref<5x4x16xf32, #tpu.memory_space<vmem>>, vector<1x4x16xf32>
    %4 = vector.shape_cast %3 : vector<1x4x16xf32> to vector<4x16xf32>
    %cst = arith.constant dense<0.000000e+00> : vector<160x16xf32>
    %5 = tpu.matmul %2, %4, %cst {dimension_numbers = #tpu.dot_dimension_numbers<[1], [0], [0], [1], [0, 0, 1, 1], [], []>} : vector<160x4xf32>, vector<4x16xf32>, vector<160x16xf32> -> vector<160x16xf32>
    %6 = vector.extract_strided_slice %0 {offsets = [0, 1, 0], sizes = [2, 80, 4], strides = [1, 1, 1]} : vector<2x84x4xf32> to vector<2x80x4xf32>
    %7 = vector.shape_cast %6 : vector<2x80x4xf32> to vector<160x4xf32>
    %c1 = arith.constant 1 : index
    %c0_5 = arith.constant 0 : index
    %c0_6 = arith.constant 0 : index
    %8 = vector.load %arg2[%c1, %c0_5, %c0_6] : memref<5x4x16xf32, #tpu.memory_space<vmem>>, vector<1x4x16xf32>
    %9 = vector.shape_cast %8 : vector<1x4x16xf32> to vector<4x16xf32>
    %cst_7 = arith.constant dense<0.000000e+00> : vector<160x16xf32>
    %10 = tpu.matmul %7, %9, %cst_7 {dimension_numbers = #tpu.dot_dimension_numbers<[1], [0], [0], [1], [0, 0, 1, 1], [], []>} : vector<160x4xf32>, vector<4x16xf32>, vector<160x16xf32> -> vector<160x16xf32>
    %11 = arith.addf %5, %10 : vector<160x16xf32>
    %12 = vector.extract_strided_slice %0 {offsets = [0, 2, 0], sizes = [2, 80, 4], strides = [1, 1, 1]} : vector<2x84x4xf32> to vector<2x80x4xf32>
    %13 = vector.shape_cast %12 : vector<2x80x4xf32> to vector<160x4xf32>
    %c2 = arith.constant 2 : index
    %c0_8 = arith.constant 0 : index
    %c0_9 = arith.constant 0 : index
    %14 = vector.load %arg2[%c2, %c0_8, %c0_9] : memref<5x4x16xf32, #tpu.memory_space<vmem>>, vector<1x4x16xf32>
    %15 = vector.shape_cast %14 : vector<1x4x16xf32> to vector<4x16xf32>
    %cst_10 = arith.constant dense<0.000000e+00> : vector<160x16xf32>
    %16 = tpu.matmul %13, %15, %cst_10 {dimension_numbers = #tpu.dot_dimension_numbers<[1], [0], [0], [1], [0, 0, 1, 1], [], []>} : vector<160x4xf32>, vector<4x16xf32>, vector<160x16xf32> -> vector<160x16xf32>
    %17 = arith.addf %11, %16 : vector<160x16xf32>
    %18 = vector.extract_strided_slice %0 {offsets = [0, 3, 0], sizes = [2, 80, 4], strides = [1, 1, 1]} : vector<2x84x4xf32> to vector<2x80x4xf32>
    %19 = vector.shape_cast %18 : vector<2x80x4xf32> to vector<160x4xf32>
    %c3 = arith.constant 3 : index
    %c0_11 = arith.constant 0 : index
    %c0_12 = arith.constant 0 : index
    %20 = vector.load %arg2[%c3, %c0_11, %c0_12] : memref<5x4x16xf32, #tpu.memory_space<vmem>>, vector<1x4x16xf32>
    %21 = vector.shape_cast %20 : vector<1x4x16xf32> to vector<4x16xf32>
    %cst_13 = arith.constant dense<0.000000e+00> : vector<160x16xf32>
    %22 = tpu.matmul %19, %21, %cst_13 {dimension_numbers = #tpu.dot_dimension_numbers<[1], [0], [0], [1], [0, 0, 1, 1], [], []>} : vector<160x4xf32>, vector<4x16xf32>, vector<160x16xf32> -> vector<160x16xf32>
    %23 = arith.addf %17, %22 : vector<160x16xf32>
    %24 = vector.extract_strided_slice %0 {offsets = [0, 4, 0], sizes = [2, 80, 4], strides = [1, 1, 1]} : vector<2x84x4xf32> to vector<2x80x4xf32>
    %25 = vector.shape_cast %24 : vector<2x80x4xf32> to vector<160x4xf32>
    %c4 = arith.constant 4 : index
    %c0_14 = arith.constant 0 : index
    %c0_15 = arith.constant 0 : index
    %26 = vector.load %arg2[%c4, %c0_14, %c0_15] : memref<5x4x16xf32, #tpu.memory_space<vmem>>, vector<1x4x16xf32>
    %27 = vector.shape_cast %26 : vector<1x4x16xf32> to vector<4x16xf32>
    %cst_16 = arith.constant dense<0.000000e+00> : vector<160x16xf32>
    %28 = tpu.matmul %25, %27, %cst_16 {dimension_numbers = #tpu.dot_dimension_numbers<[1], [0], [0], [1], [0, 0, 1, 1], [], []>} : vector<160x4xf32>, vector<4x16xf32>, vector<160x16xf32> -> vector<160x16xf32>
    %29 = arith.addf %23, %28 : vector<160x16xf32>
    %c0_17 = arith.constant 0 : index
    %c0_18 = arith.constant 0 : index
    %30 = vector.load %arg3[%c0_17, %c0_18] : memref<1x16xf32, #tpu.memory_space<vmem>>, vector<1x16xf32>
    %31 = vector.broadcast %30 : vector<1x16xf32> to vector<160x16xf32>
    %32 = arith.addf %29, %31 : vector<160x16xf32>
    %cst_19 = arith.constant 0.000000e+00 : f32
    %33 = vector.broadcast %cst_19 : f32 to vector<160x16xf32>
    %34 = arith.maximumf %32, %33 : vector<160x16xf32>
    %35 = vector.shape_cast %34 : vector<160x16xf32> to vector<2x40x2x16xf32>
    %cst_20 = arith.constant dense<0xFF800000> : vector<2x40x16xf32>
    %36 = vector.multi_reduction <maximumf>, %35, %cst_20 [2] : vector<2x40x2x16xf32> to vector<2x40x16xf32>
    %cst_21 = arith.constant 0.000000e+00 : f32
    %37 = vector.broadcast %cst_21 : f32 to vector<2x2x16xf32>
    %c0_22 = arith.constant 0 : index
    %c0_23 = arith.constant 0 : index
    %c0_24 = arith.constant 0 : index
    %38 = vector.load %arg13[%c0_22, %c0_23, %c0_24] : memref<2x44x16xf32, #tpu.memory_space<vmem>>, vector<2x2x16xf32>
    tpu.vector_store %arg13[%c0_22, %c0_23, %c0_24], %37 {strides = array<i32>} : memref<2x44x16xf32, #tpu.memory_space<vmem>>, vector<2x2x16xf32>,
    %cst_25 = arith.constant 0.000000e+00 : f32
    %39 = vector.broadcast %cst_25 : f32 to vector<2x2x16xf32>
    %c0_26 = arith.constant 0 : index
    %c42 = arith.constant 42 : index
    %c0_27 = arith.constant 0 : index
    %40 = vector.load %arg13[%c0_26, %c42, %c0_27] : memref<2x44x16xf32, #tpu.memory_space<vmem>>, vector<2x2x16xf32>
    tpu.vector_store %arg13[%c0_26, %c42, %c0_27], %39 {strides = array<i32>} : memref<2x44x16xf32, #tpu.memory_space<vmem>>, vector<2x2x16xf32>,
    %c0_28 = arith.constant 0 : index
    %c2_29 = arith.constant 2 : index
    %c0_30 = arith.constant 0 : index
    %41 = vector.load %arg13[%c0_28, %c2_29, %c0_30] : memref<2x44x16xf32, #tpu.memory_space<vmem>>, vector<2x40x16xf32>
    tpu.vector_store %arg13[%c0_28, %c2_29, %c0_30], %36 {strides = array<i32>} : memref<2x44x16xf32, #tpu.memory_space<vmem>>, vector<2x40x16xf32>,
    %c0_31 = arith.constant 0 : index
    %c0_32 = arith.constant 0 : index
    %c0_33 = arith.constant 0 : index
    %42 = vector.load %arg13[%c0_31, %c0_32, %c0_33] : memref<2x44x16xf32, #tpu.memory_space<vmem>>, vector<2x44x16xf32>
    %43 = vector.extract_strided_slice %42 {offsets = [0, 0, 0], sizes = [2, 40, 16], strides = [1, 1, 1]} : vector<2x44x16xf32> to vector<2x40x16xf32>
    %44 = vector.shape_cast %43 : vector<2x40x16xf32> to vector<80x16xf32>
    %c0_34 = arith.constant 0 : index
    %c0_35 = arith.constant 0 : index
    %c0_36 = arith.constant 0 : index
    %45 = vector.load %arg4[%c0_34, %c0_35, %c0_36] : memref<5x16x32xf32, #tpu.memory_space<vmem>>, vector<1x16x32xf32>
    %46 = vector.shape_cast %45 : vector<1x16x32xf32> to vector<16x32xf32>
    %cst_37 = arith.constant dense<0.000000e+00> : vector<80x32xf32>
    %47 = tpu.matmul %44, %46, %cst_37 {dimension_numbers = #tpu.dot_dimension_numbers<[1], [0], [0], [1], [0, 0, 1, 1], [], []>} : vector<80x16xf32>, vector<16x32xf32>, vector<80x32xf32> -> vector<80x32xf32>
    %48 = vector.extract_strided_slice %42 {offsets = [0, 1, 0], sizes = [2, 40, 16], strides = [1, 1, 1]} : vector<2x44x16xf32> to vector<2x40x16xf32>
    %49 = vector.shape_cast %48 : vector<2x40x16xf32> to vector<80x16xf32>
    %c1_38 = arith.constant 1 : index
    %c0_39 = arith.constant 0 : index
    %c0_40 = arith.constant 0 : index
    %50 = vector.load %arg4[%c1_38, %c0_39, %c0_40] : memref<5x16x32xf32, #tpu.memory_space<vmem>>, vector<1x16x32xf32>
    %51 = vector.shape_cast %50 : vector<1x16x32xf32> to vector<16x32xf32>
    %cst_41 = arith.constant dense<0.000000e+00> : vector<80x32xf32>
    %52 = tpu.matmul %49, %51, %cst_41 {dimension_numbers = #tpu.dot_dimension_numbers<[1], [0], [0], [1], [0, 0, 1, 1], [], []>} : vector<80x16xf32>, vector<16x32xf32>, vector<80x32xf32> -> vector<80x32xf32>
    %53 = arith.addf %47, %52 : vector<80x32xf32>
    %54 = vector.extract_strided_slice %42 {offsets = [0, 2, 0], sizes = [2, 40, 16], strides = [1, 1, 1]} : vector<2x44x16xf32> to vector<2x40x16xf32>
    %55 = vector.shape_cast %54 : vector<2x40x16xf32> to vector<80x16xf32>
    %c2_42 = arith.constant 2 : index
    %c0_43 = arith.constant 0 : index
    %c0_44 = arith.constant 0 : index
    %56 = vector.load %arg4[%c2_42, %c0_43, %c0_44] : memref<5x16x32xf32, #tpu.memory_space<vmem>>, vector<1x16x32xf32>
    %57 = vector.shape_cast %56 : vector<1x16x32xf32> to vector<16x32xf32>
    %cst_45 = arith.constant dense<0.000000e+00> : vector<80x32xf32>
    %58 = tpu.matmul %55, %57, %cst_45 {dimension_numbers = #tpu.dot_dimension_numbers<[1], [0], [0], [1], [0, 0, 1, 1], [], []>} : vector<80x16xf32>, vector<16x32xf32>, vector<80x32xf32> -> vector<80x32xf32>
    %59 = arith.addf %53, %58 : vector<80x32xf32>
    %60 = vector.extract_strided_slice %42 {offsets = [0, 3, 0], sizes = [2, 40, 16], strides = [1, 1, 1]} : vector<2x44x16xf32> to vector<2x40x16xf32>
    %61 = vector.shape_cast %60 : vector<2x40x16xf32> to vector<80x16xf32>
    %c3_46 = arith.constant 3 : index
    %c0_47 = arith.constant 0 : index
    %c0_48 = arith.constant 0 : index
    %62 = vector.load %arg4[%c3_46, %c0_47, %c0_48] : memref<5x16x32xf32, #tpu.memory_space<vmem>>, vector<1x16x32xf32>
    %63 = vector.shape_cast %62 : vector<1x16x32xf32> to vector<16x32xf32>
    %cst_49 = arith.constant dense<0.000000e+00> : vector<80x32xf32>
    %64 = tpu.matmul %61, %63, %cst_49 {dimension_numbers = #tpu.dot_dimension_numbers<[1], [0], [0], [1], [0, 0, 1, 1], [], []>} : vector<80x16xf32>, vector<16x32xf32>, vector<80x32xf32> -> vector<80x32xf32>
    %65 = arith.addf %59, %64 : vector<80x32xf32>
    %66 = vector.extract_strided_slice %42 {offsets = [0, 4, 0], sizes = [2, 40, 16], strides = [1, 1, 1]} : vector<2x44x16xf32> to vector<2x40x16xf32>
    %67 = vector.shape_cast %66 : vector<2x40x16xf32> to vector<80x16xf32>
    %c4_50 = arith.constant 4 : index
    %c0_51 = arith.constant 0 : index
    %c0_52 = arith.constant 0 : index
    %68 = vector.load %arg4[%c4_50, %c0_51, %c0_52] : memref<5x16x32xf32, #tpu.memory_space<vmem>>, vector<1x16x32xf32>
    %69 = vector.shape_cast %68 : vector<1x16x32xf32> to vector<16x32xf32>
    %cst_53 = arith.constant dense<0.000000e+00> : vector<80x32xf32>
    %70 = tpu.matmul %67, %69, %cst_53 {dimension_numbers = #tpu.dot_dimension_numbers<[1], [0], [0], [1], [0, 0, 1, 1], [], []>} : vector<80x16xf32>, vector<16x32xf32>, vector<80x32xf32> -> vector<80x32xf32>
    %71 = arith.addf %65, %70 : vector<80x32xf32>
    %c0_54 = arith.constant 0 : index
    %c0_55 = arith.constant 0 : index
    %72 = vector.load %arg5[%c0_54, %c0_55] : memref<1x32xf32, #tpu.memory_space<vmem>>, vector<1x32xf32>
    %73 = vector.broadcast %72 : vector<1x32xf32> to vector<80x32xf32>
    %74 = arith.addf %71, %73 : vector<80x32xf32>
    %cst_56 = arith.constant 0.000000e+00 : f32
    %75 = vector.broadcast %cst_56 : f32 to vector<80x32xf32>
    %76 = arith.maximumf %74, %75 : vector<80x32xf32>
    %77 = vector.shape_cast %76 : vector<80x32xf32> to vector<2x20x2x32xf32>
    %cst_57 = arith.constant dense<0.000000e+00> : vector<2x20x32xf32>
    %78 = vector.multi_reduction <add>, %77, %cst_57 [2] : vector<2x20x2x32xf32> to vector<2x20x32xf32>
    %cst_58 = arith.constant 5.000000e-01 : f32
    %79 = vector.broadcast %cst_58 : f32 to vector<2x20x32xf32>
    %80 = arith.mulf %78, %79 : vector<2x20x32xf32>
    %81 = vector.extract_strided_slice %80 {offsets = [0, 0, 0], sizes = [2, 1, 32], strides = [1, 1, 1]} : vector<2x20x32xf32> to vector<2x1x32xf32>
    %82 = vector.shape_cast %81 : vector<2x1x32xf32> to vector<2x32xf32>
    %c0_59 = arith.constant 0 : index
    %c0_60 = arith.constant 0 : index
    %83 = vector.load %arg14[%c0_59, %c0_60] : memref<2x640xf32, #tpu.memory_space<vmem>>, vector<2x32xf32>
    tpu.vector_store %arg14[%c0_59, %c0_60], %82 {strides = array<i32>} : memref<2x640xf32, #tpu.memory_space<vmem>>, vector<2x32xf32>,
    %84 = vector.extract_strided_slice %80 {offsets = [0, 1, 0], sizes = [2, 1, 32], strides = [1, 1, 1]} : vector<2x20x32xf32> to vector<2x1x32xf32>
    %85 = vector.shape_cast %84 : vector<2x1x32xf32> to vector<2x32xf32>
    %c0_61 = arith.constant 0 : index
    %c32 = arith.constant 32 : index
    %86 = vector.load %arg14[%c0_61, %c32] : memref<2x640xf32, #tpu.memory_space<vmem>>, vector<2x32xf32>
    tpu.vector_store %arg14[%c0_61, %c32], %85 {strides = array<i32>} : memref<2x640xf32, #tpu.memory_space<vmem>>, vector<2x32xf32>,
    %87 = vector.extract_strided_slice %80 {offsets = [0, 2, 0], sizes = [2, 1, 32], strides = [1, 1, 1]} : vector<2x20x32xf32> to vector<2x1x32xf32>
    %88 = vector.shape_cast %87 : vector<2x1x32xf32> to vector<2x32xf32>
    %c0_62 = arith.constant 0 : index
    %c64 = arith.constant 64 : index
    %89 = vector.load %arg14[%c0_62, %c64] : memref<2x640xf32, #tpu.memory_space<vmem>>, vector<2x32xf32>
    tpu.vector_store %arg14[%c0_62, %c64], %88 {strides = array<i32>} : memref<2x640xf32, #tpu.memory_space<vmem>>, vector<2x32xf32>,
    %90 = vector.extract_strided_slice %80 {offsets = [0, 3, 0], sizes = [2, 1, 32], strides = [1, 1, 1]} : vector<2x20x32xf32> to vector<2x1x32xf32>
    %91 = vector.shape_cast %90 : vector<2x1x32xf32> to vector<2x32xf32>
    %c0_63 = arith.constant 0 : index
    %c96 = arith.constant 96 : index
    %92 = vector.load %arg14[%c0_63, %c96] : memref<2x640xf32, #tpu.memory_space<vmem>>, vector<2x32xf32>
    tpu.vector_store %arg14[%c0_63, %c96], %91 {strides = array<i32>} : memref<2x640xf32, #tpu.memory_space<vmem>>, vector<2x32xf32>,
    %93 = vector.extract_strided_slice %80 {offsets = [0, 4, 0], sizes = [2, 1, 32], strides = [1, 1, 1]} : vector<2x20x32xf32> to vector<2x1x32xf32>
    %94 = vector.shape_cast %93 : vector<2x1x32xf32> to vector<2x32xf32>
    %c0_64 = arith.constant 0 : index
    %c128 = arith.constant 128 : index
    %95 = vector.load %arg14[%c0_64, %c128] : memref<2x640xf32, #tpu.memory_space<vmem>>, vector<2x32xf32>
    tpu.vector_store %arg14[%c0_64, %c128], %94 {strides = array<i32>} : memref<2x640xf32, #tpu.memory_space<vmem>>, vector<2x32xf32>,
    %96 = vector.extract_strided_slice %80 {offsets = [0, 5, 0], sizes = [2, 1, 32], strides = [1, 1, 1]} : vector<2x20x32xf32> to vector<2x1x32xf32>
    %97 = vector.shape_cast %96 : vector<2x1x32xf32> to vector<2x32xf32>
    %c0_65 = arith.constant 0 : index
    %c160 = arith.constant 160 : index
    %98 = vector.load %arg14[%c0_65, %c160] : memref<2x640xf32, #tpu.memory_space<vmem>>, vector<2x32xf32>
    tpu.vector_store %arg14[%c0_65, %c160], %97 {strides = array<i32>} : memref<2x640xf32, #tpu.memory_space<vmem>>, vector<2x32xf32>,
    %99 = vector.extract_strided_slice %80 {offsets = [0, 6, 0], sizes = [2, 1, 32], strides = [1, 1, 1]} : vector<2x20x32xf32> to vector<2x1x32xf32>
    %100 = vector.shape_cast %99 : vector<2x1x32xf32> to vector<2x32xf32>
    %c0_66 = arith.constant 0 : index
    %c192 = arith.constant 192 : index
    %101 = vector.load %arg14[%c0_66, %c192] : memref<2x640xf32, #tpu.memory_space<vmem>>, vector<2x32xf32>
    tpu.vector_store %arg14[%c0_66, %c192], %100 {strides = array<i32>} : memref<2x640xf32, #tpu.memory_space<vmem>>, vector<2x32xf32>,
    %102 = vector.extract_strided_slice %80 {offsets = [0, 7, 0], sizes = [2, 1, 32], strides = [1, 1, 1]} : vector<2x20x32xf32> to vector<2x1x32xf32>
    %103 = vector.shape_cast %102 : vector<2x1x32xf32> to vector<2x32xf32>
    %c0_67 = arith.constant 0 : index
    %c224 = arith.constant 224 : index
    %104 = vector.load %arg14[%c0_67, %c224] : memref<2x640xf32, #tpu.memory_space<vmem>>, vector<2x32xf32>
    tpu.vector_store %arg14[%c0_67, %c224], %103 {strides = array<i32>} : memref<2x640xf32, #tpu.memory_space<vmem>>, vector<2x32xf32>,
    %105 = vector.extract_strided_slice %80 {offsets = [0, 8, 0], sizes = [2, 1, 32], strides = [1, 1, 1]} : vector<2x20x32xf32> to vector<2x1x32xf32>
    %106 = vector.shape_cast %105 : vector<2x1x32xf32> to vector<2x32xf32>
    %c0_68 = arith.constant 0 : index
    %c256 = arith.constant 256 : index
    %107 = vector.load %arg14[%c0_68, %c256] : memref<2x640xf32, #tpu.memory_space<vmem>>, vector<2x32xf32>
    tpu.vector_store %arg14[%c0_68, %c256], %106 {strides = array<i32>} : memref<2x640xf32, #tpu.memory_space<vmem>>, vector<2x32xf32>,
    %108 = vector.extract_strided_slice %80 {offsets = [0, 9, 0], sizes = [2, 1, 32], strides = [1, 1, 1]} : vector<2x20x32xf32> to vector<2x1x32xf32>
    %109 = vector.shape_cast %108 : vector<2x1x32xf32> to vector<2x32xf32>
    %c0_69 = arith.constant 0 : index
    %c288 = arith.constant 288 : index
    %110 = vector.load %arg14[%c0_69, %c288] : memref<2x640xf32, #tpu.memory_space<vmem>>, vector<2x32xf32>
    tpu.vector_store %arg14[%c0_69, %c288], %109 {strides = array<i32>} : memref<2x640xf32, #tpu.memory_space<vmem>>, vector<2x32xf32>,
    %111 = vector.extract_strided_slice %80 {offsets = [0, 10, 0], sizes = [2, 1, 32], strides = [1, 1, 1]} : vector<2x20x32xf32> to vector<2x1x32xf32>
    %112 = vector.shape_cast %111 : vector<2x1x32xf32> to vector<2x32xf32>
    %c0_70 = arith.constant 0 : index
    %c320 = arith.constant 320 : index
    %113 = vector.load %arg14[%c0_70, %c320] : memref<2x640xf32, #tpu.memory_space<vmem>>, vector<2x32xf32>
    tpu.vector_store %arg14[%c0_70, %c320], %112 {strides = array<i32>} : memref<2x640xf32, #tpu.memory_space<vmem>>, vector<2x32xf32>,
    %114 = vector.extract_strided_slice %80 {offsets = [0, 11, 0], sizes = [2, 1, 32], strides = [1, 1, 1]} : vector<2x20x32xf32> to vector<2x1x32xf32>
    %115 = vector.shape_cast %114 : vector<2x1x32xf32> to vector<2x32xf32>
    %c0_71 = arith.constant 0 : index
    %c352 = arith.constant 352 : index
    %116 = vector.load %arg14[%c0_71, %c352] : memref<2x640xf32, #tpu.memory_space<vmem>>, vector<2x32xf32>
    tpu.vector_store %arg14[%c0_71, %c352], %115 {strides = array<i32>} : memref<2x640xf32, #tpu.memory_space<vmem>>, vector<2x32xf32>,
    %117 = vector.extract_strided_slice %80 {offsets = [0, 12, 0], sizes = [2, 1, 32], strides = [1, 1, 1]} : vector<2x20x32xf32> to vector<2x1x32xf32>
    %118 = vector.shape_cast %117 : vector<2x1x32xf32> to vector<2x32xf32>
    %c0_72 = arith.constant 0 : index
    %c384 = arith.constant 384 : index
    %119 = vector.load %arg14[%c0_72, %c384] : memref<2x640xf32, #tpu.memory_space<vmem>>, vector<2x32xf32>
    tpu.vector_store %arg14[%c0_72, %c384], %118 {strides = array<i32>} : memref<2x640xf32, #tpu.memory_space<vmem>>, vector<2x32xf32>,
    %120 = vector.extract_strided_slice %80 {offsets = [0, 13, 0], sizes = [2, 1, 32], strides = [1, 1, 1]} : vector<2x20x32xf32> to vector<2x1x32xf32>
    %121 = vector.shape_cast %120 : vector<2x1x32xf32> to vector<2x32xf32>
    %c0_73 = arith.constant 0 : index
    %c416 = arith.constant 416 : index
    %122 = vector.load %arg14[%c0_73, %c416] : memref<2x640xf32, #tpu.memory_space<vmem>>, vector<2x32xf32>
    tpu.vector_store %arg14[%c0_73, %c416], %121 {strides = array<i32>} : memref<2x640xf32, #tpu.memory_space<vmem>>, vector<2x32xf32>,
    %123 = vector.extract_strided_slice %80 {offsets = [0, 14, 0], sizes = [2, 1, 32], strides = [1, 1, 1]} : vector<2x20x32xf32> to vector<2x1x32xf32>
    %124 = vector.shape_cast %123 : vector<2x1x32xf32> to vector<2x32xf32>
    %c0_74 = arith.constant 0 : index
    %c448 = arith.constant 448 : index
    %125 = vector.load %arg14[%c0_74, %c448] : memref<2x640xf32, #tpu.memory_space<vmem>>, vector<2x32xf32>
    tpu.vector_store %arg14[%c0_74, %c448], %124 {strides = array<i32>} : memref<2x640xf32, #tpu.memory_space<vmem>>, vector<2x32xf32>,
    %126 = vector.extract_strided_slice %80 {offsets = [0, 15, 0], sizes = [2, 1, 32], strides = [1, 1, 1]} : vector<2x20x32xf32> to vector<2x1x32xf32>
    %127 = vector.shape_cast %126 : vector<2x1x32xf32> to vector<2x32xf32>
    %c0_75 = arith.constant 0 : index
    %c480 = arith.constant 480 : index
    %128 = vector.load %arg14[%c0_75, %c480] : memref<2x640xf32, #tpu.memory_space<vmem>>, vector<2x32xf32>
    tpu.vector_store %arg14[%c0_75, %c480], %127 {strides = array<i32>} : memref<2x640xf32, #tpu.memory_space<vmem>>, vector<2x32xf32>,
    %129 = vector.extract_strided_slice %80 {offsets = [0, 16, 0], sizes = [2, 1, 32], strides = [1, 1, 1]} : vector<2x20x32xf32> to vector<2x1x32xf32>
    %130 = vector.shape_cast %129 : vector<2x1x32xf32> to vector<2x32xf32>
    %c0_76 = arith.constant 0 : index
    %c512 = arith.constant 512 : index
    %131 = vector.load %arg14[%c0_76, %c512] : memref<2x640xf32, #tpu.memory_space<vmem>>, vector<2x32xf32>
    tpu.vector_store %arg14[%c0_76, %c512], %130 {strides = array<i32>} : memref<2x640xf32, #tpu.memory_space<vmem>>, vector<2x32xf32>,
    %132 = vector.extract_strided_slice %80 {offsets = [0, 17, 0], sizes = [2, 1, 32], strides = [1, 1, 1]} : vector<2x20x32xf32> to vector<2x1x32xf32>
    %133 = vector.shape_cast %132 : vector<2x1x32xf32> to vector<2x32xf32>
    %c0_77 = arith.constant 0 : index
    %c544 = arith.constant 544 : index
    %134 = vector.load %arg14[%c0_77, %c544] : memref<2x640xf32, #tpu.memory_space<vmem>>, vector<2x32xf32>
    tpu.vector_store %arg14[%c0_77, %c544], %133 {strides = array<i32>} : memref<2x640xf32, #tpu.memory_space<vmem>>, vector<2x32xf32>,
    %135 = vector.extract_strided_slice %80 {offsets = [0, 18, 0], sizes = [2, 1, 32], strides = [1, 1, 1]} : vector<2x20x32xf32> to vector<2x1x32xf32>
    %136 = vector.shape_cast %135 : vector<2x1x32xf32> to vector<2x32xf32>
    %c0_78 = arith.constant 0 : index
    %c576 = arith.constant 576 : index
    %137 = vector.load %arg14[%c0_78, %c576] : memref<2x640xf32, #tpu.memory_space<vmem>>, vector<2x32xf32>
    tpu.vector_store %arg14[%c0_78, %c576], %136 {strides = array<i32>} : memref<2x640xf32, #tpu.memory_space<vmem>>, vector<2x32xf32>,
    %138 = vector.extract_strided_slice %80 {offsets = [0, 19, 0], sizes = [2, 1, 32], strides = [1, 1, 1]} : vector<2x20x32xf32> to vector<2x1x32xf32>
    %139 = vector.shape_cast %138 : vector<2x1x32xf32> to vector<2x32xf32>
    %c0_79 = arith.constant 0 : index
    %c608 = arith.constant 608 : index
    %140 = vector.load %arg14[%c0_79, %c608] : memref<2x640xf32, #tpu.memory_space<vmem>>, vector<2x32xf32>
    tpu.vector_store %arg14[%c0_79, %c608], %139 {strides = array<i32>} : memref<2x640xf32, #tpu.memory_space<vmem>>, vector<2x32xf32>,
    %c0_80 = arith.constant 0 : index
    %c0_81 = arith.constant 0 : index
    %141 = vector.load %arg14[%c0_80, %c0_81] : memref<2x640xf32, #tpu.memory_space<vmem>>, vector<2x640xf32>
    %142 = arith.truncf %141 : vector<2x640xf32> to vector<2x640xbf16>
    %c0_82 = arith.constant 0 : index
    %c0_83 = arith.constant 0 : index
    %143 = vector.load %arg6[%c0_82, %c0_83] : memref<640x256xbf16, #tpu.memory_space<vmem>>, vector<640x256xbf16>
    %cst_84 = arith.constant dense<0.000000e+00> : vector<2x256xf32>
    %144 = tpu.matmul %142, %143, %cst_84 {dimension_numbers = #tpu.dot_dimension_numbers<[1], [0], [0], [1], [0, 0, 1, 1], [], []>} : vector<2x640xbf16>, vector<640x256xbf16>, vector<2x256xf32> -> vector<2x256xf32>
    %c0_85 = arith.constant 0 : index
    %c0_86 = arith.constant 0 : index
    %145 = vector.load %arg7[%c0_85, %c0_86] : memref<1x256xf32, #tpu.memory_space<vmem>>, vector<1x256xf32>
    %146 = vector.broadcast %145 : vector<1x256xf32> to vector<2x256xf32>
    %147 = arith.addf %144, %146 : vector<2x256xf32>
    %cst_87 = arith.constant 0.000000e+00 : f32
    %148 = vector.broadcast %cst_87 : f32 to vector<2x256xf32>
    %149 = arith.maximumf %147, %148 : vector<2x256xf32>
    %150 = arith.truncf %149 : vector<2x256xf32> to vector<2x256xbf16>
    %c0_88 = arith.constant 0 : index
    %c0_89 = arith.constant 0 : index
    %151 = vector.load %arg8[%c0_88, %c0_89] : memref<256x96xbf16, #tpu.memory_space<vmem>>, vector<256x96xbf16>
    %cst_90 = arith.constant dense<0.000000e+00> : vector<2x96xf32>
    %152 = tpu.matmul %150, %151, %cst_90 {dimension_numbers = #tpu.dot_dimension_numbers<[1], [0], [0], [1], [0, 0, 1, 1], [], []>} : vector<2x256xbf16>, vector<256x96xbf16>, vector<2x96xf32> -> vector<2x96xf32>
    %c0_91 = arith.constant 0 : index
    %c0_92 = arith.constant 0 : index
    %153 = vector.load %arg9[%c0_91, %c0_92] : memref<1x96xf32, #tpu.memory_space<vmem>>, vector<1x96xf32>
    %154 = vector.broadcast %153 : vector<1x96xf32> to vector<2x96xf32>
    %155 = arith.addf %152, %154 : vector<2x96xf32>
    %cst_93 = arith.constant 0.000000e+00 : f32
    %156 = vector.broadcast %cst_93 : f32 to vector<2x96xf32>
    %157 = arith.maximumf %155, %156 : vector<2x96xf32>
    %c0_94 = arith.constant 0 : index
    %c0_95 = arith.constant 0 : index
    %158 = vector.load %arg10[%c0_94, %c0_95] : memref<1x96xf32, #tpu.memory_space<vmem>>, vector<1x96xf32>
    %159 = vector.broadcast %158 : vector<1x96xf32> to vector<2x96xf32>
    %160 = arith.mulf %157, %159 : vector<2x96xf32>
    %cst_96 = arith.constant dense<0.000000e+00> : vector<2xf32>
    %161 = vector.multi_reduction <add>, %160, %cst_96 [1] : vector<2x96xf32> to vector<2xf32>
    %162 = vector.shape_cast %161 : vector<2xf32> to vector<2x1xf32>
    %c0_97 = arith.constant 0 : index
    %c0_98 = arith.constant 0 : index
    %163 = vector.load %arg11[%c0_97, %c0_98] : memref<1x1xf32, #tpu.memory_space<vmem>>, vector<1x1xf32>
    %164 = vector.broadcast %163 : vector<1x1xf32> to vector<2x1xf32>
    %165 = arith.addf %162, %164 : vector<2x1xf32>
    %c0_99 = arith.constant 0 : index
    %c0_100 = arith.constant 0 : index
    %c0_101 = arith.constant 0 : index
    %166 = vector.load %arg12[%c0_99, %c0_100, %c0_101] : memref<1x2x1xf32, #tpu.memory_space<vmem>>, vector<1x2x1xf32>
    %167 = vector.shape_cast %166 : vector<1x2x1xf32> to vector<2x1xf32>
    %168 = vector.shape_cast %165 : vector<2x1xf32> to vector<1x2x1xf32>
    tpu.vector_store %arg12[%c0_99, %c0_100, %c0_101], %168 {strides = array<i32>} : memref<1x2x1xf32, #tpu.memory_space<vmem>>, vector<1x2x1xf32>,
    return
  }
  func.func @transform_0(%arg0: i32) -> (i32, i32, i32) {
    %c0_i32 = arith.constant 0 : i32
    %c0_i32_0 = arith.constant 0 : i32
    %c0_i32_1 = arith.constant 0 : i32
    return %arg0, %c0_i32, %c0_i32_0 : i32, i32, i32
  }
  func.func @transform_1(%arg0: i32) -> (i32, i32, i32) {
    %c0_i32 = arith.constant 0 : i32
    %c0_i32_0 = arith.constant 0 : i32
    %c0_i32_1 = arith.constant 0 : i32
    %c0_i32_2 = arith.constant 0 : i32
    return %c0_i32, %c0_i32_0, %c0_i32_1 : i32, i32, i32
  }
  func.func @transform_2(%arg0: i32) -> (i32, i32) {
    %c0_i32 = arith.constant 0 : i32
    %c0_i32_0 = arith.constant 0 : i32
    %c0_i32_1 = arith.constant 0 : i32
    return %c0_i32, %c0_i32_0 : i32, i32
  }
  func.func @transform_3(%arg0: i32) -> (i32, i32, i32) {
    %c0_i32 = arith.constant 0 : i32
    %c0_i32_0 = arith.constant 0 : i32
    %c0_i32_1 = arith.constant 0 : i32
    %c0_i32_2 = arith.constant 0 : i32
    return %c0_i32, %c0_i32_0, %c0_i32_1 : i32, i32, i32
  }
  func.func @transform_4(%arg0: i32) -> (i32, i32) {
    %c0_i32 = arith.constant 0 : i32
    %c0_i32_0 = arith.constant 0 : i32
    %c0_i32_1 = arith.constant 0 : i32
    return %c0_i32, %c0_i32_0 : i32, i32
  }
  func.func @transform_5(%arg0: i32) -> (i32, i32) {
    %c0_i32 = arith.constant 0 : i32
    %c0_i32_0 = arith.constant 0 : i32
    %c0_i32_1 = arith.constant 0 : i32
    return %c0_i32, %c0_i32_0 : i32, i32
  }
  func.func @transform_6(%arg0: i32) -> (i32, i32) {
    %c0_i32 = arith.constant 0 : i32
    %c0_i32_0 = arith.constant 0 : i32
    %c0_i32_1 = arith.constant 0 : i32
    return %c0_i32, %c0_i32_0 : i32, i32
  }
  func.func @transform_7(%arg0: i32) -> (i32, i32) {
    %c0_i32 = arith.constant 0 : i32
    %c0_i32_0 = arith.constant 0 : i32
    %c0_i32_1 = arith.constant 0 : i32
    return %c0_i32, %c0_i32_0 : i32, i32
  }
  func.func @transform_8(%arg0: i32) -> (i32, i32) {
    %c0_i32 = arith.constant 0 : i32
    %c0_i32_0 = arith.constant 0 : i32
    %c0_i32_1 = arith.constant 0 : i32
    return %c0_i32, %c0_i32_0 : i32, i32
  }
  func.func @transform_9(%arg0: i32) -> (i32, i32) {
    %c0_i32 = arith.constant 0 : i32
    %c0_i32_0 = arith.constant 0 : i32
    %c0_i32_1 = arith.constant 0 : i32
    return %c0_i32, %c0_i32_0 : i32, i32
  }
  func.func @transform_10(%arg0: i32) -> (i32, i32) {
    %c0_i32 = arith.constant 0 : i32
    %c0_i32_0 = arith.constant 0 : i32
    %c0_i32_1 = arith.constant 0 : i32
    return %c0_i32, %c0_i32_0 : i32, i32
  }
  func.func @transform_11(%arg0: i32) -> (i32, i32, i32) {
    %c0_i32 = arith.constant 0 : i32
    %c0_i32_0 = arith.constant 0 : i32
    %c0_i32_1 = arith.constant 0 : i32
    return %arg0, %c0_i32, %c0_i32_0 : i32, i32, i32
  }
}

</mosaic_0001>

<llo_original>
// kernel: simple_cnn_forward.1
$region0: #{simple_cnn_forward.1}
  #allocation0 [shape = 'u32[]', space=smem, size = 0x4, offset = 0x4, fixed_abs, tag = 'smem constant byte address 0x4 - core index']
  #allocation1 [shape = 'u32[144,128]{1,0:T(1,128)}', space=vmem, size = 0x12000, scoped, tag = 'internal scratch']
  #allocation2 [shape = 'f32[2,44,16]{2,1,0:T(8,128)}', space=vmem, size = 0xc000, scoped, tag = 'scratch operand']
  #allocation3 [shape = 'f32[2,640]{1,0:T(2,128)}', space=vmem, size = 0x1400, scoped, tag = 'scratch operand']
  #allocation4 [shape = 'f32[1,1]{1,0:T(1,128)S(1)}', space=vmem, size = 0x200, scoped, tag = 'scoped memory for simple_cnn_forward.1']
  %s0 = inlined_call_operand.vmem [shape: f32[2,84,4], index: 0, kind: input, shape index: {}]
  %s1 = inlined_call_operand.vmem [shape: f32[5,4,16], index: 1, kind: input, shape index: {}]
  %s2 = inlined_call_operand.vmem [shape: f32[1,16], index: 2, kind: input, shape index: {}]
  %s3 = inlined_call_operand.vmem [shape: f32[5,16,32], index: 3, kind: input, shape index: {}]
  %s4 = inlined_call_operand.vmem [shape: f32[1,32], index: 4, kind: input, shape index: {}]
  %s5 = inlined_call_operand.hbm [shape: bf16[640,256], index: 5, kind: input, shape index: {}]
  %s6 = inlined_call_operand.vmem [shape: f32[1,256], index: 6, kind: input, shape index: {}]
  %s7 = inlined_call_operand.vmem [shape: bf16[256,96], index: 7, kind: input, shape index: {}]
  %s8 = inlined_call_operand.vmem [shape: f32[1,96], index: 8, kind: input, shape index: {}]
  %s9 = inlined_call_operand.vmem [shape: f32[1,96], index: 9, kind: input, shape index: {}]
  %s10 = inlined_call_operand.<no memory space> [shape: f32[1,1], index: 10, kind: input, shape index: {}]
  %s11 = inlined_call_operand.vmem [shape: f32[1,2,1], index: 11, kind: output, shape index: {}]
  %s12 = sld [smem:[#allocation0]]
  $region58: #{simple_cnn_forward.1} parent=0
    _
  %s14 = ssub.s32 1, %s12
  %s15 = scalar_select 0, %s14, %s12
  %v16 = vstv %s10
  %17 = vst [vmem:[#allocation4] sm:$0x1] %v16
  $region1: #{simple_cnn_forward.1} parent=0
    #allocation5 [shape = 'u8[327680]{0}', space=vmem, size = 0x50000, scoped, tag = 'input window, operand 5, single buffered']
    #allocation6 [shape = 's32[1]{0}', space=sflag, size = 0x4, scoped, tag = 'scoped memory for simple_cnn_forward.1']
    %18 = vsyncpa [#allocation6], 0
    // Predicated region
    $region2: #{simple_cnn_forward.1} parent=1 // pred_check
      _
    $region3: #{simple_cnn_forward.1} parent=1 // pred_check_branch
      %20 = sbr.rel (0) target = $region5
    $region4: #{simple_cnn_forward.1} parent=1 // pred_region
      _
    $region5: #{simple_cnn_forward.1} parent=1 // pred_fallthru
      _
    // Predicated region
    $region6: #{simple_cnn_forward.1} parent=1 // pred_check
      _
    $region7: #{simple_cnn_forward.1} parent=1 // pred_check_branch
      %22 = sbr.rel (0) target = $region9
    $region8: #{simple_cnn_forward.1} parent=1 // pred_region
      _
    $region9: #{simple_cnn_forward.1} parent=1 // pred_fallthru
      _
    // Predicated region
    $region10: #{simple_cnn_forward.1} parent=1 // pred_check
      _
    $region11: #{simple_cnn_forward.1} parent=1 // pred_check_branch
      %24 = sbr.rel (0) target = $region13
    $region12: #{simple_cnn_forward.1} parent=1 // pred_region
      _
    $region13: #{simple_cnn_forward.1} parent=1 // pred_fallthru
      _
    // Predicated region
    $region14: #{simple_cnn_forward.1} parent=1 // pred_check
      _
    $region15: #{simple_cnn_forward.1} parent=1 // pred_check_branch
      %26 = sbr.rel (0) target = $region17
    $region16: #{simple_cnn_forward.1} parent=1 // pred_region
      _
    $region17: #{simple_cnn_forward.1} parent=1 // pred_fallthru
      _
    // Predicated region
    $region18: #{simple_cnn_forward.1} parent=1 // pred_check
      _
    $region19: #{simple_cnn_forward.1} parent=1 // pred_check_branch
      %28 = sbr.rel (0) target = $region21
    $region20: #{simple_cnn_forward.1} parent=1 // pred_region
      _
    $region21: #{simple_cnn_forward.1} parent=1 // pred_fallthru
      _
    // Predicated region
    $region22: #{simple_cnn_forward.1} parent=1 // pred_check
      _
    $region23: #{simple_cnn_forward.1} parent=1 // pred_check_branch
      %30 = sbr.rel (0) target = $region25
    $region24: #{simple_cnn_forward.1} parent=1 // pred_region
      %s32 = ssub.s32 10240, 10240
      %33 = vsyncadd [#allocation6], %s32
      %s34 = sshll.u32 [#allocation5], 4
      %s35 = int_to_ptr.vmem [resolvable:$true] %s34
      %40 = dma.hbm_to_vmem [thread:$0]  %s5, 10240, %s35, [#allocation6], 128, 128, 8
    $region25: #{simple_cnn_forward.1} parent=1 // pred_fallthru
      _
    // Predicated region
    $region26: #{simple_cnn_forward.1} parent=1 // pred_check
      _
    $region27: #{simple_cnn_forward.1} parent=1 // pred_check_branch
      %42 = sbr.rel (0) target = $region29
    $region28: #{simple_cnn_forward.1} parent=1 // pred_region
      _
    $region29: #{simple_cnn_forward.1} parent=1 // pred_fallthru
      _
    // Predicated region
    $region30: #{simple_cnn_forward.1} parent=1 // pred_check
      _
    $region31: #{simple_cnn_forward.1} parent=1 // pred_check_branch
      %44 = sbr.rel (0) target = $region33
    $region32: #{simple_cnn_forward.1} parent=1 // pred_region
      _
    $region33: #{simple_cnn_forward.1} parent=1 // pred_fallthru
      _
    // Predicated region
    $region34: #{simple_cnn_forward.1} parent=1 // pred_check
      _
    $region35: #{simple_cnn_forward.1} parent=1 // pred_check_branch
      %46 = sbr.rel (0) target = $region37
    $region36: #{simple_cnn_forward.1} parent=1 // pred_region
      _
    $region37: #{simple_cnn_forward.1} parent=1 // pred_fallthru
      _
    // Predicated region
    $region38: #{simple_cnn_forward.1} parent=1 // pred_check
      _
    $region39: #{simple_cnn_forward.1} parent=1 // pred_check_branch
      %48 = sbr.rel (0) target = $region41
    $region40: #{simple_cnn_forward.1} parent=1 // pred_region
      _
    $region41: #{simple_cnn_forward.1} parent=1 // pred_fallthru
      _
    // Predicated region
    $region42: #{simple_cnn_forward.1} parent=1 // pred_check
      _
    $region43: #{simple_cnn_forward.1} parent=1 // pred_check_branch
      %50 = sbr.rel (0) target = $region45
    $region44: #{simple_cnn_forward.1} parent=1 // pred_region
      _
    $region45: #{simple_cnn_forward.1} parent=1 // pred_fallthru
      _
    // Predicated region
    $region46: #{simple_cnn_forward.1} parent=1 // pred_check
      _
    $region47: #{simple_cnn_forward.1} parent=1 // pred_check_branch
      %52 = sbr.rel (0) target = $region49
    $region48: #{simple_cnn_forward.1} parent=1 // pred_region
      %53 = dma.done [#allocation6], 10240
    $region49: #{simple_cnn_forward.1} parent=1 // pred_fallthru
      _
    %v55 = vld [vmem:[%s0] sm:$0xff]
    %v56 = vld [vmem:[%s0 + $0x8] sm:$0xff]
    %v57 = vld [vmem:[%s0 + $0x10] sm:$0xff]
    %v58 = vld [vmem:[%s0 + $0x18] sm:$0xff]
    %v59 = vld [vmem:[%s0 + $0x20] sm:$0xff]
    %v60 = vld [vmem:[%s0 + $0x28] sm:$0xff]
    %v61 = vld [vmem:[%s0 + $0x30] sm:$0xff]
    %v62 = vld [vmem:[%s0 + $0x38] sm:$0xff]
    %v63 = vld [vmem:[%s0 + $0x40] sm:$0xff]
    %v64 = vld [vmem:[%s0 + $0x48] sm:$0xff]
    %v65 = vld [vmem:[%s0 + $0x50] sm:$0xf]
    %v66 = vld [vmem:[%s0 + $0x58] sm:$0xff]
    %v67 = vld [vmem:[%s0 + $0x60] sm:$0xff]
    %v68 = vld [vmem:[%s0 + $0x68] sm:$0xff]
    %v69 = vld [vmem:[%s0 + $0x70] sm:$0xff]
    %v70 = vld [vmem:[%s0 + $0x78] sm:$0xff]
    %v71 = vld [vmem:[%s0 + $0x80] sm:$0xff]
    %v72 = vld [vmem:[%s0 + $0x88] sm:$0xff]
    %v73 = vld [vmem:[%s0 + $0x90] sm:$0xff]
    %v74 = vld [vmem:[%s0 + $0x98] sm:$0xff]
    %v75 = vld [vmem:[%s0 + $0xa0] sm:$0xff]
    %v76 = vld [vmem:[%s0 + $0xa8] sm:$0xf]
    %v77 = vld [vmem:[%s1] sm:$0xf]
    %vm100 = vcmask 1046528
    %v101 = vrot.slane %v55, 1
    %v102 = vrot.slane %v56, 1
    %v103 = vsel %vm100, %v101, %v102
    %v104 = vrot.slane %v57, 1
    %v105 = vsel %vm100, %v102, %v104
    %v106 = vrot.slane %v58, 1
    %v107 = vsel %vm100, %v104, %v106
    %v108 = vrot.slane %v59, 1
    %v109 = vsel %vm100, %v106, %v108
    %v110 = vrot.slane %v60, 1
    %v111 = vsel %vm100, %v108, %v110
    %v112 = vrot.slane %v61, 1
    %v113 = vsel %vm100, %v110, %v112
    %v114 = vrot.slane %v62, 1
    %v115 = vsel %vm100, %v112, %v114
    %v116 = vrot.slane %v63, 1
    %v117 = vsel %vm100, %v114, %v116
    %v118 = vrot.slane %v64, 1
    %v119 = vsel %vm100, %v116, %v118
    %v120 = vrot.slane %v65, 1
    %v121 = vsel %vm100, %v118, %v120
    %v122 = vrot.slane %v66, 1
    %v123 = vrot.slane %v67, 1
    %v124 = vsel %vm100, %v122, %v123
    %v125 = vrot.slane %v68, 1
    %v126 = vsel %vm100, %v123, %v125
    %v127 = vrot.slane %v69, 1
    %v128 = vsel %vm100, %v125, %v127
    %v129 = vrot.slane %v70, 1
    %v130 = vsel %vm100, %v127, %v129
    %v131 = vrot.slane %v71, 1
    %v132 = vsel %vm100, %v129, %v131
    %v133 = vrot.slane %v72, 1
    %v134 = vsel %vm100, %v131, %v133
    %v135 = vrot.slane %v73, 1
    %v136 = vsel %vm100, %v133, %v135
    %v137 = vrot.slane %v74, 1
    %v138 = vsel %vm100, %v135, %v137
    %v139 = vrot.slane %v75, 1
    %v140 = vsel %vm100, %v137, %v139
    %v141 = vrot.slane %v76, 1
    %v142 = vsel %vm100, %v139, %v141
    %s143 = scalar_lea.vmem %s1, 4
    %v144 = vld [vmem:[%s143] sm:$0xf]
    %vm145 = vcmask 31744
    %v146 = vsel %vm145, %v103, 0
    %v148 = vsel %vm145, %v105, 0
    %v150 = vsel %vm145, %v107, 0
    %v152 = vsel %vm145, %v109, 0
    %v154 = vsel %vm145, %v111, 0
    %v156 = vsel %vm145, %v113, 0
    %v158 = vsel %vm145, %v115, 0
    %v160 = vsel %vm145, %v117, 0
    %v162 = vsel %vm145, %v119, 0
    %v164 = vsel %vm145, %v121, 0
    %v166 = vsel %vm145, %v124, 0
    %v168 = vsel %vm145, %v126, 0
    %v170 = vsel %vm145, %v128, 0
    %v172 = vsel %vm145, %v130, 0
    %v174 = vsel %vm145, %v132, 0
    %v176 = vsel %vm145, %v134, 0
    %v178 = vsel %vm145, %v136, 0
    %v180 = vsel %vm145, %v138, 0
    %v182 = vsel %vm145, %v140, 0
    %v184 = vsel %vm145, %v142, 0
    %vm186 = vcmask 1043456
    %v188 = vsel %vm186, %v144, 0
    %190 = vmatprep.subr.mxu0 0.0
    %191 = vmatpush1.msra.mxu0 %v188
    %192 = vmatprep.subr.mxu0 0.0
    %193 = vmatpush1.msra.mxu0 0.0
    %194 = vmatprep.subr.mxu0 0.0
    %195 = vmatpush1.msra.mxu0 0.0
    %196 = vmatprep.subr.mxu0 0.0
    %197 = vmatpush1.msra.mxu0 0.0
    %198 = vmatprep.subr.mxu0 0.0
    %199 = vmatpush1.msra.mxu0 0.0
    %200 = vmatprep.subr.mxu0 0.0
    %201 = vmatpush1.msra.mxu0 0.0
    %202 = vmatprep.subr.mxu0 0.0
    %203 = vmatpush1.msra.mxu0 0.0
    %204 = vmatprep.subr.mxu0 0.0
    %205 = vmatpush1.msra.mxu0 0.0
    %206 = vmatprep.subr.mxu0 0.0
    %207 = vmatpush1.msra.mxu0 0.0
    %208 = vmatprep.subr.mxu0 0.0
    %209 = vmatpush1.msra.mxu0 0.0
    %210 = vmatprep.subr.mxu0 0.0
    %211 = vmatpush1.msra.mxu0 0.0
    %212 = vmatprep.subr.mxu0 0.0
    %213 = vmatpush1.msra.mxu0 0.0
    %214 = vmatprep.subr.mxu0 0.0
    %215 = vmatpush1.msra.mxu0 0.0
    %216 = vmatprep.subr.mxu0 0.0
    %217 = vmatpush1.msra.mxu0 0.0
    %218 = vmatprep.subr.mxu0 0.0
    %219 = vmatpush1.msra.mxu0 0.0
    %220 = vmatprep.subr.mxu0 0.0
    %221 = vmatpush1.msra.mxu0 0.0
    %222 = vmatprep.subr.mxu0 0.0
    %223 = vmatpush1.msra.mxu0 0.0
    %224 = vmatprep.subr.mxu0 0.0
    %225 = vmatpush1.msra.mxu0 0.0
    %226 = vmatprep.subr.mxu0 0.0
    %227 = vmatpush1.msra.mxu0 0.0
    %228 = vmatprep.subr.mxu0 0.0
    %229 = vmatpush1.msra.mxu0 0.0
    %230 = vmatprep.subr.mxu0 0.0
    %231 = vmatpush1.msra.mxu0 0.0
    %232 = vmatprep.subr.mxu0 0.0
    %233 = vmatpush1.msra.mxu0 0.0
    %234 = vmatprep.subr.mxu0 0.0
    %235 = vmatpush1.msra.mxu0 0.0
    %236 = vmatprep.subr.mxu0 0.0
    %237 = vmatpush1.msra.mxu0 0.0
    %238 = vmatprep.subr.mxu0 0.0
    %239 = vmatpush1.msra.mxu0 0.0
    %240 = vmatprep.subr.mxu0 0.0
    %241 = vmatpush1.msra.mxu0 0.0
    %242 = vmatprep.subr.mxu0 0.0
    %243 = vmatpush1.msra.mxu0 0.0
    %244 = vmatprep.subr.mxu0 0.0
    %245 = vmatpush1.msra.mxu0 0.0
    %246 = vmatprep.subr.mxu0 0.0
    %247 = vmatpush1.msra.mxu0 0.0
    %248 = vmatprep.subr.mxu0 0.0
    %249 = vmatpush1.msra.mxu0 0.0
    %250 = vmatprep.subr.mxu0 0.0
    %251 = vmatpush1.msra.mxu0 0.0
    %252 = vmatprep.subr.mxu0 0.0
    %253 = vmatpush1.msra.mxu0 0.0
    %254 = vmatprep.mubr.f32.mxu0 0.0
    %255 = vmatmul.mubr.f32.gmra.mrb[0].mxu0 %v146
    %v256 = vpop.f32.mrb[0].mxu0
    %v257 = vadd.f32 0.0, %v256
    %v258 = vpop.f32.mrb[0].mxu0
    %259 = vmatprep.mubr.f32.mxu0 0.0
    %260 = vmatmul.mubr.f32.gmra.mrb[0].mxu0 %v148
    %v261 = vpop.f32.mrb[0].mxu0
    %v262 = vadd.f32 0.0, %v261
    %v263 = vpop.f32.mrb[0].mxu0
    %264 = vmatprep.mubr.f32.mxu0 0.0
    %265 = vmatmul.mubr.f32.gmra.mrb[0].mxu0 %v150
    %v266 = vpop.f32.mrb[0].mxu0
    %v267 = vadd.f32 0.0, %v266
    %v268 = vpop.f32.mrb[0].mxu0
    %269 = vmatprep.mubr.f32.mxu0 0.0
    %270 = vmatmul.mubr.f32.gmra.mrb[0].mxu0 %v152
    %v271 = vpop.f32.mrb[0].mxu0
    %v272 = vadd.f32 0.0, %v271
    %v273 = vpop.f32.mrb[0].mxu0
    %274 = vmatprep.mubr.f32.mxu0 0.0
    %275 = vmatmul.mubr.f32.gmra.mrb[0].mxu0 %v154
    %v276 = vpop.f32.mrb[0].mxu0
    %v277 = vadd.f32 0.0, %v276
    %v278 = vpop.f32.mrb[0].mxu0
    %279 = vmatprep.mubr.f32.mxu0 0.0
    %280 = vmatmul.mubr.f32.gmra.mrb[0].mxu0 %v156
    %v281 = vpop.f32.mrb[0].mxu0
    %v282 = vadd.f32 0.0, %v281
    %v283 = vpop.f32.mrb[0].mxu0
    %284 = vmatprep.mubr.f32.mxu0 0.0
    %285 = vmatmul.mubr.f32.gmra.mrb[0].mxu0 %v158
    %v286 = vpop.f32.mrb[0].mxu0
    %v287 = vadd.f32 0.0, %v286
    %v288 = vpop.f32.mrb[0].mxu0
    %289 = vmatprep.mubr.f32.mxu0 0.0
    %290 = vmatmul.mubr.f32.gmra.mrb[0].mxu0 %v160
    %v291 = vpop.f32.mrb[0].mxu0
    %v292 = vadd.f32 0.0, %v291
    %v293 = vpop.f32.mrb[0].mxu0
    %294 = vmatprep.mubr.f32.mxu0 0.0
    %295 = vmatmul.mubr.f32.gmra.mrb[0].mxu0 %v162
    %v296 = vpop.f32.mrb[0].mxu0
    %v297 = vadd.f32 0.0, %v296
    %v298 = vpop.f32.mrb[0].mxu0
    %299 = vmatprep.mubr.f32.mxu0 0.0
    %300 = vmatmul.mubr.f32.gmra.mrb[0].mxu0 %v164
    %v301 = vpop.f32.mrb[0].mxu0
    %v302 = vadd.f32 0.0, %v301
    %v303 = vpop.f32.mrb[0].mxu0
    %304 = vmatprep.mubr.f32.mxu0 0.0
    %305 = vmatmul.mubr.f32.gmra.mrb[0].mxu0 %v166
    %v306 = vpop.f32.mrb[0].mxu0
    %v307 = vadd.f32 0.0, %v306
    %v308 = vpop.f32.mrb[0].mxu0
    %309 = vmatprep.mubr.f32.mxu0 0.0
    %310 = vmatmul.mubr.f32.gmra.mrb[0].mxu0 %v168
    %v311 = vpop.f32.mrb[0].mxu0
    %v312 = vadd.f32 0.0, %v311
    %v313 = vpop.f32.mrb[0].mxu0
    %314 = vmatprep.mubr.f32.mxu0 0.0
    %315 = vmatmul.mubr.f32.gmra.mrb[0].mxu0 %v170
    %v316 = vpop.f32.mrb[0].mxu0
    %v317 = vadd.f32 0.0, %v316
    %v318 = vpop.f32.mrb[0].mxu0
    %319 = vmatprep.mubr.f32.mxu0 0.0
    %320 = vmatmul.mubr.f32.gmra.mrb[0].mxu0 %v172
    %v321 = vpop.f32.mrb[0].mxu0
    %v322 = vadd.f32 0.0, %v321
    %v323 = vpop.f32.mrb[0].mxu0
    %324 = vmatprep.mubr.f32.mxu0 0.0
    %325 = vmatmul.mubr.f32.gmra.mrb[0].mxu0 %v174
    %v326 = vpop.f32.mrb[0].mxu0
    %v327 = vadd.f32 0.0, %v326
    %v328 = vpop.f32.mrb[0].mxu0
    %329 = vmatprep.mubr.f32.mxu0 0.0
    %330 = vmatmul.mubr.f32.gmra.mrb[0].mxu0 %v176
    %v331 = vpop.f32.mrb[0].mxu0
    %v332 = vadd.f32 0.0, %v331
    %v333 = vpop.f32.mrb[0].mxu0
    %334 = vmatprep.mubr.f32.mxu0 0.0
    %335 = vmatmul.mubr.f32.gmra.mrb[0].mxu0 %v178
    %v336 = vpop.f32.mrb[0].mxu0
    %v337 = vadd.f32 0.0, %v336
    %v338 = vpop.f32.mrb[0].mxu0
    %339 = vmatprep.mubr.f32.mxu0 0.0
    %340 = vmatmul.mubr.f32.gmra.mrb[0].mxu0 %v180
    %v341 = vpop.f32.mrb[0].mxu0
    %v342 = vadd.f32 0.0, %v341
    %v343 = vpop.f32.mrb[0].mxu0
    %344 = vmatprep.mubr.f32.mxu0 0.0
    %345 = vmatmul.mubr.f32.gmra.mrb[0].mxu0 %v182
    %v346 = vpop.f32.mrb[0].mxu0
    %v347 = vadd.f32 0.0, %v346
    %v348 = vpop.f32.mrb[0].mxu0
    %349 = vmatprep.mubr.f32.mxu0 0.0
    %350 = vmatmul.mubr.f32.gmra.mrb[0].mxu0 %v184
    %v351 = vpop.f32.mrb[0].mxu0
    %v352 = vadd.f32 0.0, %v351
    %v353 = vpop.f32.mrb[0].mxu0
    %354 = vdwg.mxu0
    %v355 = vsel %vm145, %v55, 0
    %v357 = vsel %vm145, %v56, 0
    %v359 = vsel %vm145, %v57, 0
    %v361 = vsel %vm145, %v58, 0
    %v363 = vsel %vm145, %v59, 0
    %v365 = vsel %vm145, %v60, 0
    %v367 = vsel %vm145, %v61, 0
    %v369 = vsel %vm145, %v62, 0
    %v371 = vsel %vm145, %v63, 0
    %v373 = vsel %vm145, %v64, 0
    %v375 = vsel %vm145, %v66, 0
    %v377 = vsel %vm145, %v67, 0
    %v379 = vsel %vm145, %v68, 0
    %v381 = vsel %vm145, %v69, 0
    %v383 = vsel %vm145, %v70, 0
    %v385 = vsel %vm145, %v71, 0
    %v387 = vsel %vm145, %v72, 0
    %v389 = vsel %vm145, %v73, 0
    %v391 = vsel %vm145, %v74, 0
    %v393 = vsel %vm145, %v75, 0
    %v396 = vsel %vm186, %v77, 0
    %398 = vmatprep.subr.mxu0 0.0
    %399 = vmatpush1.msra.mxu0 %v396
    %400 = vmatprep.subr.mxu0 0.0
    %401 = vmatpush1.msra.mxu0 0.0
    %402 = vmatprep.subr.mxu0 0.0
    %403 = vmatpush1.msra.mxu0 0.0
    %404 = vmatprep.subr.mxu0 0.0
    %405 = vmatpush1.msra.mxu0 0.0
    %406 = vmatprep.subr.mxu0 0.0
    %407 = vmatpush1.msra.mxu0 0.0
    %408 = vmatprep.subr.mxu0 0.0
    %409 = vmatpush1.msra.mxu0 0.0
    %410 = vmatprep.subr.mxu0 0.0
    %411 = vmatpush1.msra.mxu0 0.0
    %412 = vmatprep.subr.mxu0 0.0
    %413 = vmatpush1.msra.mxu0 0.0
    %414 = vmatprep.subr.mxu0 0.0
    %415 = vmatpush1.msra.mxu0 0.0
    %416 = vmatprep.subr.mxu0 0.0
    %417 = vmatpush1.msra.mxu0 0.0
    %418 = vmatprep.subr.mxu0 0.0
    %419 = vmatpush1.msra.mxu0 0.0
    %420 = vmatprep.subr.mxu0 0.0
    %421 = vmatpush1.msra.mxu0 0.0
    %422 = vmatprep.subr.mxu0 0.0
    %423 = vmatpush1.msra.mxu0 0.0
    %424 = vmatprep.subr.mxu0 0.0
    %425 = vmatpush1.msra.mxu0 0.0
    %426 = vmatprep.subr.mxu0 0.0
    %427 = vmatpush1.msra.mxu0 0.0
    %428 = vmatprep.subr.mxu0 0.0
    %429 = vmatpush1.msra.mxu0 0.0
    %430 = vmatprep.subr.mxu0 0.0
    %431 = vmatpush1.msra.mxu0 0.0
    %432 = vmatprep.subr.mxu0 0.0
    %433 = vmatpush1.msra.mxu0 0.0
    %434 = vmatprep.subr.mxu0 0.0
    %435 = vmatpush1.msra.mxu0 0.0
    %436 = vmatprep.subr.mxu0 0.0
    %437 = vmatpush1.msra.mxu0 0.0
    %438 = vmatprep.subr.mxu0 0.0
    %439 = vmatpush1.msra.mxu0 0.0
    %440 = vmatprep.subr.mxu0 0.0
    %441 = vmatpush1.msra.mxu0 0.0
    %442 = vmatprep.subr.mxu0 0.0
    %443 = vmatpush1.msra.mxu0 0.0
    %444 = vmatprep.subr.mxu0 0.0
    %445 = vmatpush1.msra.mxu0 0.0
    %446 = vmatprep.subr.mxu0 0.0
    %447 = vmatpush1.msra.mxu0 0.0
    %448 = vmatprep.subr.mxu0 0.0
    %449 = vmatpush1.msra.mxu0 0.0
    %450 = vmatprep.subr.mxu0 0.0
    %451 = vmatpush1.msra.mxu0 0.0
    %452 = vmatprep.subr.mxu0 0.0
    %453 = vmatpush1.msra.mxu0 0.0
    %454 = vmatprep.subr.mxu0 0.0
    %455 = vmatpush1.msra.mxu0 0.0
    %456 = vmatprep.subr.mxu0 0.0
    %457 = vmatpush1.msra.mxu0 0.0
    %458 = vmatprep.subr.mxu0 0.0
    %459 = vmatpush1.msra.mxu0 0.0
    %460 = vmatprep.subr.mxu0 0.0
    %461 = vmatpush1.msra.mxu0 0.0
    %462 = vmatprep.mubr.f32.mxu0 0.0
    %463 = vmatmul.mubr.f32.gmra.mrb[0].mxu0 %v355
    %v464 = vpop.f32.mrb[0].mxu0
    %v465 = vadd.f32 %v257, %v464
    %v466 = vpop.f32.mrb[0].mxu0
    %467 = vmatprep.mubr.f32.mxu0 0.0
    %468 = vmatmul.mubr.f32.gmra.mrb[0].mxu0 %v357
    %v469 = vpop.f32.mrb[0].mxu0
    %v470 = vadd.f32 %v262, %v469
    %v471 = vpop.f32.mrb[0].mxu0
    %472 = vmatprep.mubr.f32.mxu0 0.0
    %473 = vmatmul.mubr.f32.gmra.mrb[0].mxu0 %v359
    %v474 = vpop.f32.mrb[0].mxu0
    %v475 = vadd.f32 %v267, %v474
    %v476 = vpop.f32.mrb[0].mxu0
    %477 = vmatprep.mubr.f32.mxu0 0.0
    %478 = vmatmul.mubr.f32.gmra.mrb[0].mxu0 %v361
    %v479 = vpop.f32.mrb[0].mxu0
    %v480 = vadd.f32 %v272, %v479
    %v481 = vpop.f32.mrb[0].mxu0
    %482 = vmatprep.mubr.f32.mxu0 0.0
    %483 = vmatmul.mubr.f32.gmra.mrb[0].mxu0 %v363
    %v484 = vpop.f32.mrb[0].mxu0
    %v485 = vadd.f32 %v277, %v484
    %v486 = vpop.f32.mrb[0].mxu0
    %487 = vmatprep.mubr.f32.mxu0 0.0
    %488 = vmatmul.mubr.f32.gmra.mrb[0].mxu0 %v365
    %v489 = vpop.f32.mrb[0].mxu0
    %v490 = vadd.f32 %v282, %v489
    %v491 = vpop.f32.mrb[0].mxu0
    %492 = vmatprep.mubr.f32.mxu0 0.0
    %493 = vmatmul.mubr.f32.gmra.mrb[0].mxu0 %v367
    %v494 = vpop.f32.mrb[0].mxu0
    %v495 = vadd.f32 %v287, %v494
    %v496 = vpop.f32.mrb[0].mxu0
    %497 = vmatprep.mubr.f32.mxu0 0.0
    %498 = vmatmul.mubr.f32.gmra.mrb[0].mxu0 %v369
    %v499 = vpop.f32.mrb[0].mxu0
    %v500 = vadd.f32 %v292, %v499
    %v501 = vpop.f32.mrb[0].mxu0
    %502 = vmatprep.mubr.f32.mxu0 0.0
    %503 = vmatmul.mubr.f32.gmra.mrb[0].mxu0 %v371
    %v504 = vpop.f32.mrb[0].mxu0
    %v505 = vadd.f32 %v297, %v504
    %v506 = vpop.f32.mrb[0].mxu0
    %507 = vmatprep.mubr.f32.mxu0 0.0
    %508 = vmatmul.mubr.f32.gmra.mrb[0].mxu0 %v373
    %v509 = vpop.f32.mrb[0].mxu0
    %v510 = vadd.f32 %v302, %v509
    %v511 = vpop.f32.mrb[0].mxu0
    %512 = vmatprep.mubr.f32.mxu0 0.0
    %513 = vmatmul.mubr.f32.gmra.mrb[0].mxu0 %v375
    %v514 = vpop.f32.mrb[0].mxu0
    %v515 = vadd.f32 %v307, %v514
    %v516 = vpop.f32.mrb[0].mxu0
    %517 = vmatprep.mubr.f32.mxu0 0.0
    %518 = vmatmul.mubr.f32.gmra.mrb[0].mxu0 %v377
    %v519 = vpop.f32.mrb[0].mxu0
    %v520 = vadd.f32 %v312, %v519
    %v521 = vpop.f32.mrb[0].mxu0
    %522 = vmatprep.mubr.f32.mxu0 0.0
    %523 = vmatmul.mubr.f32.gmra.mrb[0].mxu0 %v379
    %v524 = vpop.f32.mrb[0].mxu0
    %v525 = vadd.f32 %v317, %v524
    %v526 = vpop.f32.mrb[0].mxu0
    %527 = vmatprep.mubr.f32.mxu0 0.0
    %528 = vmatmul.mubr.f32.gmra.mrb[0].mxu0 %v381
    %v529 = vpop.f32.mrb[0].mxu0
    %v530 = vadd.f32 %v322, %v529
    %v531 = vpop.f32.mrb[0].mxu0
    %532 = vmatprep.mubr.f32.mxu0 0.0
    %533 = vmatmul.mubr.f32.gmra.mrb[0].mxu0 %v383
    %v534 = vpop.f32.mrb[0].mxu0
    %v535 = vadd.f32 %v327, %v534
    %v536 = vpop.f32.mrb[0].mxu0
    %537 = vmatprep.mubr.f32.mxu0 0.0
    %538 = vmatmul.mubr.f32.gmra.mrb[0].mxu0 %v385
    %v539 = vpop.f32.mrb[0].mxu0
    %v540 = vadd.f32 %v332, %v539
    %v541 = vpop.f32.mrb[0].mxu0
    %542 = vmatprep.mubr.f32.mxu0 0.0
    %543 = vmatmul.mubr.f32.gmra.mrb[0].mxu0 %v387
    %v544 = vpop.f32.mrb[0].mxu0
    %v545 = vadd.f32 %v337, %v544
    %v546 = vpop.f32.mrb[0].mxu0
    %547 = vmatprep.mubr.f32.mxu0 0.0
    %548 = vmatmul.mubr.f32.gmra.mrb[0].mxu0 %v389
    %v549 = vpop.f32.mrb[0].mxu0
    %v550 = vadd.f32 %v342, %v549
    %v551 = vpop.f32.mrb[0].mxu0
    %552 = vmatprep.mubr.f32.mxu0 0.0
    %553 = vmatmul.mubr.f32.gmra.mrb[0].mxu0 %v391
    %v554 = vpop.f32.mrb[0].mxu0
    %v555 = vadd.f32 %v347, %v554
    %v556 = vpop.f32.mrb[0].mxu0
    %557 = vmatprep.mubr.f32.mxu0 0.0
    %558 = vmatmul.mubr.f32.gmra.mrb[0].mxu0 %v393
    %v559 = vpop.f32.mrb[0].mxu0
    %v560 = vadd.f32 %v352, %v559
    %v561 = vpop.f32.mrb[0].mxu0
    %562 = vdwg.mxu0
    %vm563 = vcmask 1045504
    %v564 = vrot.slane %v55, 2
    %v565 = vrot.slane %v56, 2
    %v566 = vsel %vm563, %v564, %v565
    %v567 = vrot.slane %v57, 2
    %v568 = vsel %vm563, %v565, %v567
    %v569 = vrot.slane %v58, 2
    %v570 = vsel %vm563, %v567, %v569
    %v571 = vrot.slane %v59, 2
    %v572 = vsel %vm563, %v569, %v571
    %v573 = vrot.slane %v60, 2
    %v574 = vsel %vm563, %v571, %v573
    %v575 = vrot.slane %v61, 2
    %v576 = vsel %vm563, %v573, %v575
    %v577 = vrot.slane %v62, 2
    %v578 = vsel %vm563, %v575, %v577
    %v579 = vrot.slane %v63, 2
    %v580 = vsel %vm563, %v577, %v579
    %v581 = vrot.slane %v64, 2
    %v582 = vsel %vm563, %v579, %v581
    %v583 = vrot.slane %v65, 2
    %v584 = vsel %vm563, %v581, %v583
    %v585 = vrot.slane %v66, 2
    %v586 = vrot.slane %v67, 2
    %v587 = vsel %vm563, %v585, %v586
    %v588 = vrot.slane %v68, 2
    %v589 = vsel %vm563, %v586, %v588
    %v590 = vrot.slane %v69, 2
    %v591 = vsel %vm563, %v588, %v590
    %v592 = vrot.slane %v70, 2
    %v593 = vsel %vm563, %v590, %v592
    %v594 = vrot.slane %v71, 2
    %v595 = vsel %vm563, %v592, %v594
    %v596 = vrot.slane %v72, 2
    %v597 = vsel %vm563, %v594, %v596
    %v598 = vrot.slane %v73, 2
    %v599 = vsel %vm563, %v596, %v598
    %v600 = vrot.slane %v74, 2
    %v601 = vsel %vm563, %v598, %v600
    %v602 = vrot.slane %v75, 2
    %v603 = vsel %vm563, %v600, %v602
    %v604 = vrot.slane %v76, 2
    %v605 = vsel %vm563, %v602, %v604
    %s606 = scalar_lea.vmem %s1, 8
    %v607 = vld [vmem:[%s606] sm:$0xf]
    %v608 = vsel %vm145, %v566, 0
    %v610 = vsel %vm145, %v568, 0
    %v612 = vsel %vm145, %v570, 0
    %v614 = vsel %vm145, %v572, 0
    %v616 = vsel %vm145, %v574, 0
    %v618 = vsel %vm145, %v576, 0
    %v620 = vsel %vm145, %v578, 0
    %v622 = vsel %vm145, %v580, 0
    %v624 = vsel %vm145, %v582, 0
    %v626 = vsel %vm145, %v584, 0
    %v628 = vsel %vm145, %v587, 0
    %v630 = vsel %vm145, %v589, 0
    %v632 = vsel %vm145, %v591, 0
    %v634 = vsel %vm145, %v593, 0
    %v636 = vsel %vm145, %v595, 0
    %v638 = vsel %vm145, %v597, 0
    %v640 = vsel %vm145, %v599, 0
    %v642 = vsel %vm145, %v601, 0
    %v644 = vsel %vm145, %v603, 0
    %v646 = vsel %vm145, %v605, 0
    %v649 = vsel %vm186, %v607, 0
    %651 = vmatprep.subr.mxu0 0.0
    %652 = vmatpush1.msra.mxu0 %v649
    %653 = vmatprep.subr.mxu0 0.0
    %654 = vmatpush1.msra.mxu0 0.0
    %655 = vmatprep.subr.mxu0 0.0
    %656 = vmatpush1.msra.mxu0 0.0
    %657 = vmatprep.subr.mxu0 0.0
    %658 = vmatpush1.msra.mxu0 0.0
    %659 = vmatprep.subr.mxu0 0.0
    %660 = vmatpush1.msra.mxu0 0.0
    %661 = vmatprep.subr.mxu0 0.0
    %662 = vmatpush1.msra.mxu0 0.0
    %663 = vmatprep.subr.mxu0 0.0
    %664 = vmatpush1.msra.mxu0 0.0
    %665 = vmatprep.subr.mxu0 0.0
    %666 = vmatpush1.msra.mxu0 0.0
    %667 = vmatprep.subr.mxu0 0.0
    %668 = vmatpush1.msra.mxu0 0.0
    %669 = vmatprep.subr.mxu0 0.0
    %670 = vmatpush1.msra.mxu0 0.0
    %671 = vmatprep.subr.mxu0 0.0
    %672 = vmatpush1.msra.mxu0 0.0
    %673 = vmatprep.subr.mxu0 0.0
    %674 = vmatpush1.msra.mxu0 0.0
    %675 = vmatprep.subr.mxu0 0.0
    %676 = vmatpush1.msra.mxu0 0.0
    %677 = vmatprep.subr.mxu0 0.0
    %678 = vmatpush1.msra.mxu0 0.0
    %679 = vmatprep.subr.mxu0 0.0
    %680 = vmatpush1.msra.mxu0 0.0
    %681 = vmatprep.subr.mxu0 0.0
    %682 = vmatpush1.msra.mxu0 0.0
    %683 = vmatprep.subr.mxu0 0.0
    %684 = vmatpush1.msra.mxu0 0.0
    %685 = vmatprep.subr.mxu0 0.0
    %686 = vmatpush1.msra.mxu0 0.0
    %687 = vmatprep.subr.mxu0 0.0
    %688 = vmatpush1.msra.mxu0 0.0
    %689 = vmatprep.subr.mxu0 0.0
    %690 = vmatpush1.msra.mxu0 0.0
    %691 = vmatprep.subr.mxu0 0.0
    %692 = vmatpush1.msra.mxu0 0.0
    %693 = vmatprep.subr.mxu0 0.0
    %694 = vmatpush1.msra.mxu0 0.0
    %695 = vmatprep.subr.mxu0 0.0
    %696 = vmatpush1.msra.mxu0 0.0
    %697 = vmatprep.subr.mxu0 0.0
    %698 = vmatpush1.msra.mxu0 0.0
    %699 = vmatprep.subr.mxu0 0.0
    %700 = vmatpush1.msra.mxu0 0.0
    %701 = vmatprep.subr.mxu0 0.0
    %702 = vmatpush1.msra.mxu0 0.0
    %703 = vmatprep.subr.mxu0 0.0
    %704 = vmatpush1.msra.mxu0 0.0
    %705 = vmatprep.subr.mxu0 0.0
    %706 = vmatpush1.msra.mxu0 0.0
    %707 = vmatprep.subr.mxu0 0.0
    %708 = vmatpush1.msra.mxu0 0.0
    %709 = vmatprep.subr.mxu0 0.0
    %710 = vmatpush1.msra.mxu0 0.0
    %711 = vmatprep.subr.mxu0 0.0
    %712 = vmatpush1.msra.mxu0 0.0
    %713 = vmatprep.subr.mxu0 0.0
    %714 = vmatpush1.msra.mxu0 0.0
    %715 = vmatprep.mubr.f32.mxu0 0.0
    %716 = vmatmul.mubr.f32.gmra.mrb[0].mxu0 %v608
    %v717 = vpop.f32.mrb[0].mxu0
    %v718 = vadd.f32 0.0, %v717
    %v719 = vpop.f32.mrb[0].mxu0
    %720 = vmatprep.mubr.f32.mxu0 0.0
    %721 = vmatmul.mubr.f32.gmra.mrb[0].mxu0 %v610
    %v722 = vpop.f32.mrb[0].mxu0
    %v723 = vadd.f32 0.0, %v722
    %v724 = vpop.f32.mrb[0].mxu0
    %725 = vmatprep.mubr.f32.mxu0 0.0
    %726 = vmatmul.mubr.f32.gmra.mrb[0].mxu0 %v612
    %v727 = vpop.f32.mrb[0].mxu0
    %v728 = vadd.f32 0.0, %v727
    %v729 = vpop.f32.mrb[0].mxu0
    %730 = vmatprep.mubr.f32.mxu0 0.0
    %731 = vmatmul.mubr.f32.gmra.mrb[0].mxu0 %v614
    %v732 = vpop.f32.mrb[0].mxu0
    %v733 = vadd.f32 0.0, %v732
    %v734 = vpop.f32.mrb[0].mxu0
    %735 = vmatprep.mubr.f32.mxu0 0.0
    %736 = vmatmul.mubr.f32.gmra.mrb[0].mxu0 %v616
    %v737 = vpop.f32.mrb[0].mxu0
    %v738 = vadd.f32 0.0, %v737
    %v739 = vpop.f32.mrb[0].mxu0
    %740 = vmatprep.mubr.f32.mxu0 0.0
    %741 = vmatmul.mubr.f32.gmra.mrb[0].mxu0 %v618
    %v742 = vpop.f32.mrb[0].mxu0
    %v743 = vadd.f32 0.0, %v742
    %v744 = vpop.f32.mrb[0].mxu0
    %745 = vmatprep.mubr.f32.mxu0 0.0
    %746 = vmatmul.mubr.f32.gmra.mrb[0].mxu0 %v620
    %v747 = vpop.f32.mrb[0].mxu0
    %v748 = vadd.f32 0.0, %v747
    %v749 = vpop.f32.mrb[0].mxu0
    %750 = vmatprep.mubr.f32.mxu0 0.0
    %751 = vmatmul.mubr.f32.gmra.mrb[0].mxu0 %v622
    %v752 = vpop.f32.mrb[0].mxu0
    %v753 = vadd.f32 0.0, %v752
    %v754 = vpop.f32.mrb[0].mxu0
    %755 = vmatprep.mubr.f32.mxu0 0.0
    %756 = vmatmul.mubr.f32.gmra.mrb[0].mxu0 %v624
    %v757 = vpop.f32.mrb[0].mxu0
    %v758 = vadd.f32 0.0, %v757
    %v759 = vpop.f32.mrb[0].mxu0
    %760 = vmatprep.mubr.f32.mxu0 0.0
    %761 = vmatmul.mubr.f32.gmra.mrb[0].mxu0 %v626
    %v762 = vpop.f32.mrb[0].mxu0
    %v763 = vadd.f32 0.0, %v762
    %v764 = vpop.f32.mrb[0].mxu0
    %765 = vmatprep.mubr.f32.mxu0 0.0
    %766 = vmatmul.mubr.f32.gmra.mrb[0].mxu0 %v628
    %v767 = vpop.f32.mrb[0].mxu0
    %v768 = vadd.f32 0.0, %v767
    %v769 = vpop.f32.mrb[0].mxu0
    %770 = vmatprep.mubr.f32.mxu0 0.0
    %771 = vmatmul.mubr.f32.gmra.mrb[0].mxu0 %v630
    %v772 = vpop.f32.mrb[0].mxu0
    %v773 = vadd.f32 0.0, %v772
    %v774 = vpop.f32.mrb[0].mxu0
    %775 = vmatprep.mubr.f32.mxu0 0.0
    %776 = vmatmul.mubr.f32.gmra.mrb[0].mxu0 %v632
    %v777 = vpop.f32.mrb[0].mxu0
    %v778 = vadd.f32 0.0, %v777
    %v779 = vpop.f32.mrb[0].mxu0
    %780 = vmatprep.mubr.f32.mxu0 0.0
    %781 = vmatmul.mubr.f32.gmra.mrb[0].mxu0 %v634
    %v782 = vpop.f32.mrb[0].mxu0
    %v783 = vadd.f32 0.0, %v782
    %v784 = vpop.f32.mrb[0].mxu0
    %785 = vmatprep.mubr.f32.mxu0 0.0
    %786 = vmatmul.mubr.f32.gmra.mrb[0].mxu0 %v636
    %v787 = vpop.f32.mrb[0].mxu0
    %v788 = vadd.f32 0.0, %v787
    %v789 = vpop.f32.mrb[0].mxu0
    %790 = vmatprep.mubr.f32.mxu0 0.0
    %791 = vmatmul.mubr.f32.gmra.mrb[0].mxu0 %v638
    %v792 = vpop.f32.mrb[0].mxu0
    %v793 = vadd.f32 0.0, %v792
    %v794 = vpop.f32.mrb[0].mxu0
    %795 = vmatprep.mubr.f32.mxu0 0.0
    %796 = vmatmul.mubr.f32.gmra.mrb[0].mxu0 %v640
    %v797 = vpop.f32.mrb[0].mxu0
    %v798 = vadd.f32 0.0, %v797
    %v799 = vpop.f32.mrb[0].mxu0
    %800 = vmatprep.mubr.f32.mxu0 0.0
    %801 = vmatmul.mubr.f32.gmra.mrb[0].mxu0 %v642
    %v802 = vpop.f32.mrb[0].mxu0
    %v803 = vadd.f32 0.0, %v802
    %v804 = vpop.f32.mrb[0].mxu0
    %805 = vmatprep.mubr.f32.mxu0 0.0
    %806 = vmatmul.mubr.f32.gmra.mrb[0].mxu0 %v644
    %v807 = vpop.f32.mrb[0].mxu0
    %v808 = vadd.f32 0.0, %v807
    %v809 = vpop.f32.mrb[0].mxu0
    %810 = vmatprep.mubr.f32.mxu0 0.0
    %811 = vmatmul.mubr.f32.gmra.mrb[0].mxu0 %v646
    %v812 = vpop.f32.mrb[0].mxu0
    %v813 = vadd.f32 0.0, %v812
    %v814 = vpop.f32.mrb[0].mxu0
    %815 = vdwg.mxu0
    %v816 = vadd.f32 %v465, %v718
    %v817 = vadd.f32 %v470, %v723
    %v818 = vadd.f32 %v475, %v728
    %v819 = vadd.f32 %v480, %v733
    %v820 = vadd.f32 %v485, %v738
    %v821 = vadd.f32 %v490, %v743
    %v822 = vadd.f32 %v495, %v748
    %v823 = vadd.f32 %v500, %v753
    %v824 = vadd.f32 %v505, %v758
    %v825 = vadd.f32 %v510, %v763
    %v826 = vadd.f32 %v515, %v768
    %v827 = vadd.f32 %v520, %v773
    %v828 = vadd.f32 %v525, %v778
    %v829 = vadd.f32 %v530, %v783
    %v830 = vadd.f32 %v535, %v788
    %v831 = vadd.f32 %v540, %v793
    %v832 = vadd.f32 %v545, %v798
    %v833 = vadd.f32 %v550, %v803
    %v834 = vadd.f32 %v555, %v808
    %v835 = vadd.f32 %v560, %v813
    %vm836 = vcmask 1044480
    %v837 = vrot.slane %v55, 3
    %v838 = vrot.slane %v56, 3
    %v839 = vsel %vm836, %v837, %v838
    %v840 = vrot.slane %v57, 3
    %v841 = vsel %vm836, %v838, %v840
    %v842 = vrot.slane %v58, 3
    %v843 = vsel %vm836, %v840, %v842
    %v844 = vrot.slane %v59, 3
    %v845 = vsel %vm836, %v842, %v844
    %v846 = vrot.slane %v60, 3
    %v847 = vsel %vm836, %v844, %v846
    %v848 = vrot.slane %v61, 3
    %v849 = vsel %vm836, %v846, %v848
    %v850 = vrot.slane %v62, 3
    %v851 = vsel %vm836, %v848, %v850
    %v852 = vrot.slane %v63, 3
    %v853 = vsel %vm836, %v850, %v852
    %v854 = vrot.slane %v64, 3
    %v855 = vsel %vm836, %v852, %v854
    %v856 = vrot.slane %v65, 3
    %v857 = vsel %vm836, %v854, %v856
    %v858 = vrot.slane %v66, 3
    %v859 = vrot.slane %v67, 3
    %v860 = vsel %vm836, %v858, %v859
    %v861 = vrot.slane %v68, 3
    %v862 = vsel %vm836, %v859, %v861
    %v863 = vrot.slane %v69, 3
    %v864 = vsel %vm836, %v861, %v863
    %v865 = vrot.slane %v70, 3
    %v866 = vsel %vm836, %v863, %v865
    %v867 = vrot.slane %v71, 3
    %v868 = vsel %vm836, %v865, %v867
    %v869 = vrot.slane %v72, 3
    %v870 = vsel %vm836, %v867, %v869
    %v871 = vrot.slane %v73, 3
    %v872 = vsel %vm836, %v869, %v871
    %v873 = vrot.slane %v74, 3
    %v874 = vsel %vm836, %v871, %v873
    %v875 = vrot.slane %v75, 3
    %v876 = vsel %vm836, %v873, %v875
    %v877 = vrot.slane %v76, 3
    %v878 = vsel %vm836, %v875, %v877
    %s879 = scalar_lea.vmem %s1, 12
    %v880 = vld [vmem:[%s879] sm:$0xf]
    %v881 = vsel %vm145, %v839, 0
    %v883 = vsel %vm145, %v841, 0
    %v885 = vsel %vm145, %v843, 0
    %v887 = vsel %vm145, %v845, 0
    %v889 = vsel %vm145, %v847, 0
    %v891 = vsel %vm145, %v849, 0
    %v893 = vsel %vm145, %v851, 0
    %v895 = vsel %vm145, %v853, 0
    %v897 = vsel %vm145, %v855, 0
    %v899 = vsel %vm145, %v857, 0
    %v901 = vsel %vm145, %v860, 0
    %v903 = vsel %vm145, %v862, 0
    %v905 = vsel %vm145, %v864, 0
    %v907 = vsel %vm145, %v866, 0
    %v909 = vsel %vm145, %v868, 0
    %v911 = vsel %vm145, %v870, 0
    %v913 = vsel %vm145, %v872, 0
    %v915 = vsel %vm145, %v874, 0
    %v917 = vsel %vm145, %v876, 0
    %v919 = vsel %vm145, %v878, 0
    %v922 = vsel %vm186, %v880, 0
    %924 = vmatprep.subr.mxu0 0.0
    %925 = vmatpush1.msra.mxu0 %v922
    %926 = vmatprep.subr.mxu0 0.0
    %927 = vmatpush1.msra.mxu0 0.0
    %928 = vmatprep.subr.mxu0 0.0
    %929 = vmatpush1.msra.mxu0 0.0
    %930 = vmatprep.subr.mxu0 0.0
    %931 = vmatpush1.msra.mxu0 0.0
    %932 = vmatprep.subr.mxu0 0.0
    %933 = vmatpush1.msra.mxu0 0.0
    %934 = vmatprep.subr.mxu0 0.0
    %935 = vmatpush1.msra.mxu0 0.0
    %936 = vmatprep.subr.mxu0 0.0
    %937 = vmatpush1.msra.mxu0 0.0
    %938 = vmatprep.subr.mxu0 0.0
    %939 = vmatpush1.msra.mxu0 0.0
    %940 = vmatprep.subr.mxu0 0.0
    %941 = vmatpush1.msra.mxu0 0.0
    %942 = vmatprep.subr.mxu0 0.0
    %943 = vmatpush1.msra.mxu0 0.0
    %944 = vmatprep.subr.mxu0 0.0
    %945 = vmatpush1.msra.mxu0 0.0
    %946 = vmatprep.subr.mxu0 0.0
    %947 = vmatpush1.msra.mxu0 0.0
    %948 = vmatprep.subr.mxu0 0.0
    %949 = vmatpush1.msra.mxu0 0.0
    %950 = vmatprep.subr.mxu0 0.0
    %951 = vmatpush1.msra.mxu0 0.0
    %952 = vmatprep.subr.mxu0 0.0
    %953 = vmatpush1.msra.mxu0 0.0
    %954 = vmatprep.subr.mxu0 0.0
    %955 = vmatpush1.msra.mxu0 0.0
    %956 = vmatprep.subr.mxu0 0.0
    %957 = vmatpush1.msra.mxu0 0.0
    %958 = vmatprep.subr.mxu0 0.0
    %959 = vmatpush1.msra.mxu0 0.0
    %960 = vmatprep.subr.mxu0 0.0
    %961 = vmatpush1.msra.mxu0 0.0
    %962 = vmatprep.subr.mxu0 0.0
    %963 = vmatpush1.msra.mxu0 0.0
    %964 = vmatprep.subr.mxu0 0.0
    %965 = vmatpush1.msra.mxu0 0.0
    %966 = vmatprep.subr.mxu0 0.0
    %967 = vmatpush1.msra.mxu0 0.0
    %968 = vmatprep.subr.mxu0 0.0
    %969 = vmatpush1.msra.mxu0 0.0
    %970 = vmatprep.subr.mxu0 0.0
    %971 = vmatpush1.msra.mxu0 0.0
    %972 = vmatprep.subr.mxu0 0.0
    %973 = vmatpush1.msra.mxu0 0.0
    %974 = vmatprep.subr.mxu0 0.0
    %975 = vmatpush1.msra.mxu0 0.0
    %976 = vmatprep.subr.mxu0 0.0
    %977 = vmatpush1.msra.mxu0 0.0
    %978 = vmatprep.subr.mxu0 0.0
    %979 = vmatpush1.msra.mxu0 0.0
    %980 = vmatprep.subr.mxu0 0.0
    %981 = vmatpush1.msra.mxu0 0.0
    %982 = vmatprep.subr.mxu0 0.0
    %983 = vmatpush1.msra.mxu0 0.0
    %984 = vmatprep.subr.mxu0 0.0
    %985 = vmatpush1.msra.mxu0 0.0
    %986 = vmatprep.subr.mxu0 0.0
    %987 = vmatpush1.msra.mxu0 0.0
    %988 = vmatprep.mubr.f32.mxu0 0.0
    %989 = vmatmul.mubr.f32.gmra.mrb[0].mxu0 %v881
    %v990 = vpop.f32.mrb[0].mxu0
    %v991 = vadd.f32 0.0, %v990
    %v992 = vpop.f32.mrb[0].mxu0
    %993 = vmatprep.mubr.f32.mxu0 0.0
    %994 = vmatmul.mubr.f32.gmra.mrb[0].mxu0 %v883
    %v995 = vpop.f32.mrb[0].mxu0
    %v996 = vadd.f32 0.0, %v995
    %v997 = vpop.f32.mrb[0].mxu0
    %998 = vmatprep.mubr.f32.mxu0 0.0
    %999 = vmatmul.mubr.f32.gmra.mrb[0].mxu0 %v885
    %v1000 = vpop.f32.mrb[0].mxu0
    %v1001 = vadd.f32 0.0, %v1000
    %v1002 = vpop.f32.mrb[0].mxu0
    %1003 = vmatprep.mubr.f32.mxu0 0.0
    %1004 = vmatmul.mubr.f32.gmra.mrb[0].mxu0 %v887
    %v1005 = vpop.f32.mrb[0].mxu0
    %v1006 = vadd.f32 0.0, %v1005
    %v1007 = vpop.f32.mrb[0].mxu0
    %1008 = vmatprep.mubr.f32.mxu0 0.0
    %1009 = vmatmul.mubr.f32.gmra.mrb[0].mxu0 %v889
    %v1010 = vpop.f32.mrb[0].mxu0
    %v1011 = vadd.f32 0.0, %v1010
    %v1012 = vpop.f32.mrb[0].mxu0
    %1013 = vmatprep.mubr.f32.mxu0 0.0
    %1014 = vmatmul.mubr.f32.gmra.mrb[0].mxu0 %v891
    %v1015 = vpop.f32.mrb[0].mxu0
    %v1016 = vadd.f32 0.0, %v1015
    %v1017 = vpop.f32.mrb[0].mxu0
    %1018 = vmatprep.mubr.f32.mxu0 0.0
    %1019 = vmatmul.mubr.f32.gmra.mrb[0].mxu0 %v893
    %v1020 = vpop.f32.mrb[0].mxu0
    %v1021 = vadd.f32 0.0, %v1020
    %v1022 = vpop.f32.mrb[0].mxu0
    %1023 = vmatprep.mubr.f32.mxu0 0.0
    %1024 = vmatmul.mubr.f32.gmra.mrb[0].mxu0 %v895
    %v1025 = vpop.f32.mrb[0].mxu0
    %v1026 = vadd.f32 0.0, %v1025
    %v1027 = vpop.f32.mrb[0].mxu0
    %1028 = vmatprep.mubr.f32.mxu0 0.0
    %1029 = vmatmul.mubr.f32.gmra.mrb[0].mxu0 %v897
    %v1030 = vpop.f32.mrb[0].mxu0
    %v1031 = vadd.f32 0.0, %v1030
    %v1032 = vpop.f32.mrb[0].mxu0
    %1033 = vmatprep.mubr.f32.mxu0 0.0
    %1034 = vmatmul.mubr.f32.gmra.mrb[0].mxu0 %v899
    %v1035 = vpop.f32.mrb[0].mxu0
    %v1036 = vadd.f32 0.0, %v1035
    %v1037 = vpop.f32.mrb[0].mxu0
    %1038 = vmatprep.mubr.f32.mxu0 0.0
    %1039 = vmatmul.mubr.f32.gmra.mrb[0].mxu0 %v901
    %v1040 = vpop.f32.mrb[0].mxu0
    %v1041 = vadd.f32 0.0, %v1040
    %v1042 = vpop.f32.mrb[0].mxu0
    %1043 = vmatprep.mubr.f32.mxu0 0.0
    %1044 = vmatmul.mubr.f32.gmra.mrb[0].mxu0 %v903
    %v1045 = vpop.f32.mrb[0].mxu0
    %v1046 = vadd.f32 0.0, %v1045
    %v1047 = vpop.f32.mrb[0].mxu0
    %1048 = vmatprep.mubr.f32.mxu0 0.0
    %1049 = vmatmul.mubr.f32.gmra.mrb[0].mxu0 %v905
    %v1050 = vpop.f32.mrb[0].mxu0
    %v1051 = vadd.f32 0.0, %v1050
    %v1052 = vpop.f32.mrb[0].mxu0
    %1053 = vmatprep.mubr.f32.mxu0 0.0
    %1054 = vmatmul.mubr.f32.gmra.mrb[0].mxu0 %v907
    %v1055 = vpop.f32.mrb[0].mxu0
    %v1056 = vadd.f32 0.0, %v1055
    %v1057 = vpop.f32.mrb[0].mxu0
    %1058 = vmatprep.mubr.f32.mxu0 0.0
    %1059 = vmatmul.mubr.f32.gmra.mrb[0].mxu0 %v909
    %v1060 = vpop.f32.mrb[0].mxu0
    %v1061 = vadd.f32 0.0, %v1060
    %v1062 = vpop.f32.mrb[0].mxu0
    %1063 = vmatprep.mubr.f32.mxu0 0.0
    %1064 = vmatmul.mubr.f32.gmra.mrb[0].mxu0 %v911
    %v1065 = vpop.f32.mrb[0].mxu0
    %v1066 = vadd.f32 0.0, %v1065
    %v1067 = vpop.f32.mrb[0].mxu0
    %1068 = vmatprep.mubr.f32.mxu0 0.0
    %1069 = vmatmul.mubr.f32.gmra.mrb[0].mxu0 %v913
    %v1070 = vpop.f32.mrb[0].mxu0
    %v1071 = vadd.f32 0.0, %v1070
    %v1072 = vpop.f32.mrb[0].mxu0
    %1073 = vmatprep.mubr.f32.mxu0 0.0
    %1074 = vmatmul.mubr.f32.gmra.mrb[0].mxu0 %v915
    %v1075 = vpop.f32.mrb[0].mxu0
    %v1076 = vadd.f32 0.0, %v1075
    %v1077 = vpop.f32.mrb[0].mxu0
    %1078 = vmatprep.mubr.f32.mxu0 0.0
    %1079 = vmatmul.mubr.f32.gmra.mrb[0].mxu0 %v917
    %v1080 = vpop.f32.mrb[0].mxu0
    %v1081 = vadd.f32 0.0, %v1080
    %v1082 = vpop.f32.mrb[0].mxu0
    %1083 = vmatprep.mubr.f32.mxu0 0.0
    %1084 = vmatmul.mubr.f32.gmra.mrb[0].mxu0 %v919
    %v1085 = vpop.f32.mrb[0].mxu0
    %v1086 = vadd.f32 0.0, %v1085
    %v1087 = vpop.f32.mrb[0].mxu0
    %1088 = vdwg.mxu0
    %v1089 = vadd.f32 %v816, %v991
    %v1090 = vadd.f32 %v817, %v996
    %v1091 = vadd.f32 %v818, %v1001
    %v1092 = vadd.f32 %v819, %v1006
    %v1093 = vadd.f32 %v820, %v1011
    %v1094 = vadd.f32 %v821, %v1016
    %v1095 = vadd.f32 %v822, %v1021
    %v1096 = vadd.f32 %v823, %v1026
    %v1097 = vadd.f32 %v824, %v1031
    %v1098 = vadd.f32 %v825, %v1036
    %v1099 = vadd.f32 %v826, %v1041
    %v1100 = vadd.f32 %v827, %v1046
    %v1101 = vadd.f32 %v828, %v1051
    %v1102 = vadd.f32 %v829, %v1056
    %v1103 = vadd.f32 %v830, %v1061
    %v1104 = vadd.f32 %v831, %v1066
    %v1105 = vadd.f32 %v832, %v1071
    %v1106 = vadd.f32 %v833, %v1076
    %v1107 = vadd.f32 %v834, %v1081
    %v1108 = vadd.f32 %v835, %v1086
    %v1109 = vrot.slane %v55, 4
    %v1110 = vrot.slane %v56, 4
    %v1111 = vsel %vm186, %v1109, %v1110
    %v1112 = vrot.slane %v57, 4
    %v1113 = vsel %vm186, %v1110, %v1112
    %v1114 = vrot.slane %v58, 4
    %v1115 = vsel %vm186, %v1112, %v1114
    %v1116 = vrot.slane %v59, 4
    %v1117 = vsel %vm186, %v1114, %v1116
    %v1118 = vrot.slane %v60, 4
    %v1119 = vsel %vm186, %v1116, %v1118
    %v1120 = vrot.slane %v61, 4
    %v1121 = vsel %vm186, %v1118, %v1120
    %v1122 = vrot.slane %v62, 4
    %v1123 = vsel %vm186, %v1120, %v1122
    %v1124 = vrot.slane %v63, 4
    %v1125 = vsel %vm186, %v1122, %v1124
    %v1126 = vrot.slane %v64, 4
    %v1127 = vsel %vm186, %v1124, %v1126
    %v1128 = vrot.slane %v65, 4
    %v1129 = vsel %vm186, %v1126, %v1128
    %v1130 = vrot.slane %v66, 4
    %v1131 = vrot.slane %v67, 4
    %v1132 = vsel %vm186, %v1130, %v1131
    %v1133 = vrot.slane %v68, 4
    %v1134 = vsel %vm186, %v1131, %v1133
    %v1135 = vrot.slane %v69, 4
    %v1136 = vsel %vm186, %v1133, %v1135
    %v1137 = vrot.slane %v70, 4
    %v1138 = vsel %vm186, %v1135, %v1137
    %v1139 = vrot.slane %v71, 4
    %v1140 = vsel %vm186, %v1137, %v1139
    %v1141 = vrot.slane %v72, 4
    %v1142 = vsel %vm186, %v1139, %v1141
    %v1143 = vrot.slane %v73, 4
    %v1144 = vsel %vm186, %v1141, %v1143
    %v1145 = vrot.slane %v74, 4
    %v1146 = vsel %vm186, %v1143, %v1145
    %v1147 = vrot.slane %v75, 4
    %v1148 = vsel %vm186, %v1145, %v1147
    %v1149 = vrot.slane %v76, 4
    %v1150 = vsel %vm186, %v1147, %v1149
    %s1151 = scalar_lea.vmem %s1, 16
    %v1152 = vld [vmem:[%s1151] sm:$0xf]
    %v1153 = vsel %vm145, %v1111, 0
    %v1155 = vsel %vm145, %v1113, 0
    %v1157 = vsel %vm145, %v1115, 0
    %v1159 = vsel %vm145, %v1117, 0
    %v1161 = vsel %vm145, %v1119, 0
    %v1163 = vsel %vm145, %v1121, 0
    %v1165 = vsel %vm145, %v1123, 0
    %v1167 = vsel %vm145, %v1125, 0
    %v1169 = vsel %vm145, %v1127, 0
    %v1171 = vsel %vm145, %v1129, 0
    %v1173 = vsel %vm145, %v1132, 0
    %v1175 = vsel %vm145, %v1134, 0
    %v1177 = vsel %vm145, %v1136, 0
    %v1179 = vsel %vm145, %v1138, 0
    %v1181 = vsel %vm145, %v1140, 0
    %v1183 = vsel %vm145, %v1142, 0
    %v1185 = vsel %vm145, %v1144, 0
    %v1187 = vsel %vm145, %v1146, 0
    %v1189 = vsel %vm145, %v1148, 0
    %v1191 = vsel %vm145, %v1150, 0
    %v1194 = vsel %vm186, %v1152, 0
    %1196 = vmatprep.subr.mxu0 0.0
    %1197 = vmatpush1.msra.mxu0 %v1194
    %1198 = vmatprep.subr.mxu0 0.0
    %1199 = vmatpush1.msra.mxu0 0.0
    %1200 = vmatprep.subr.mxu0 0.0
    %1201 = vmatpush1.msra.mxu0 0.0
    %1202 = vmatprep.subr.mxu0 0.0
    %1203 = vmatpush1.msra.mxu0 0.0
    %1204 = vmatprep.subr.mxu0 0.0
    %1205 = vmatpush1.msra.mxu0 0.0
    %1206 = vmatprep.subr.mxu0 0.0
    %1207 = vmatpush1.msra.mxu0 0.0
    %1208 = vmatprep.subr.mxu0 0.0
    %1209 = vmatpush1.msra.mxu0 0.0
    %1210 = vmatprep.subr.mxu0 0.0
    %1211 = vmatpush1.msra.mxu0 0.0
    %1212 = vmatprep.subr.mxu0 0.0
    %1213 = vmatpush1.msra.mxu0 0.0
    %1214 = vmatprep.subr.mxu0 0.0
    %1215 = vmatpush1.msra.mxu0 0.0
    %1216 = vmatprep.subr.mxu0 0.0
    %1217 = vmatpush1.msra.mxu0 0.0
    %1218 = vmatprep.subr.mxu0 0.0
    %1219 = vmatpush1.msra.mxu0 0.0
    %1220 = vmatprep.subr.mxu0 0.0
    %1221 = vmatpush1.msra.mxu0 0.0
    %1222 = vmatprep.subr.mxu0 0.0
    %1223 = vmatpush1.msra.mxu0 0.0
    %1224 = vmatprep.subr.mxu0 0.0
    %1225 = vmatpush1.msra.mxu0 0.0
    %1226 = vmatprep.subr.mxu0 0.0
    %1227 = vmatpush1.msra.mxu0 0.0
    %1228 = vmatprep.subr.mxu0 0.0
    %1229 = vmatpush1.msra.mxu0 0.0
    %1230 = vmatprep.subr.mxu0 0.0
    %1231 = vmatpush1.msra.mxu0 0.0
    %1232 = vmatprep.subr.mxu0 0.0
    %1233 = vmatpush1.msra.mxu0 0.0
    %1234 = vmatprep.subr.mxu0 0.0
    %1235 = vmatpush1.msra.mxu0 0.0
    %1236 = vmatprep.subr.mxu0 0.0
    %1237 = vmatpush1.msra.mxu0 0.0
    %1238 = vmatprep.subr.mxu0 0.0
    %1239 = vmatpush1.msra.mxu0 0.0
    %1240 = vmatprep.subr.mxu0 0.0
    %1241 = vmatpush1.msra.mxu0 0.0
    %1242 = vmatprep.subr.mxu0 0.0
    %1243 = vmatpush1.msra.mxu0 0.0
    %1244 = vmatprep.subr.mxu0 0.0
    %1245 = vmatpush1.msra.mxu0 0.0
    %1246 = vmatprep.subr.mxu0 0.0
    %1247 = vmatpush1.msra.mxu0 0.0
    %1248 = vmatprep.subr.mxu0 0.0
    %1249 = vmatpush1.msra.mxu0 0.0
    %1250 = vmatprep.subr.mxu0 0.0
    %1251 = vmatpush1.msra.mxu0 0.0
    %1252 = vmatprep.subr.mxu0 0.0
    %1253 = vmatpush1.msra.mxu0 0.0
    %1254 = vmatprep.subr.mxu0 0.0
    %1255 = vmatpush1.msra.mxu0 0.0
    %1256 = vmatprep.subr.mxu0 0.0
    %1257 = vmatpush1.msra.mxu0 0.0
    %1258 = vmatprep.subr.mxu0 0.0
    %1259 = vmatpush1.msra.mxu0 0.0
    %1260 = vmatprep.mubr.f32.mxu0 0.0
    %1261 = vmatmul.mubr.f32.gmra.mrb[0].mxu0 %v1153
    %v1262 = vpop.f32.mrb[0].mxu0
    %v1263 = vadd.f32 0.0, %v1262
    %v1264 = vpop.f32.mrb[0].mxu0
    %1265 = vmatprep.mubr.f32.mxu0 0.0
    %1266 = vmatmul.mubr.f32.gmra.mrb[0].mxu0 %v1155
    %v1267 = vpop.f32.mrb[0].mxu0
    %v1268 = vadd.f32 0.0, %v1267
    %v1269 = vpop.f32.mrb[0].mxu0
    %1270 = vmatprep.mubr.f32.mxu0 0.0
    %1271 = vmatmul.mubr.f32.gmra.mrb[0].mxu0 %v1157
    %v1272 = vpop.f32.mrb[0].mxu0
    %v1273 = vadd.f32 0.0, %v1272
    %v1274 = vpop.f32.mrb[0].mxu0
    %1275 = vmatprep.mubr.f32.mxu0 0.0
    %1276 = vmatmul.mubr.f32.gmra.mrb[0].mxu0 %v1159
    %v1277 = vpop.f32.mrb[0].mxu0
    %v1278 = vadd.f32 0.0, %v1277
    %v1279 = vpop.f32.mrb[0].mxu0
    %1280 = vmatprep.mubr.f32.mxu0 0.0
    %1281 = vmatmul.mubr.f32.gmra.mrb[0].mxu0 %v1161
    %v1282 = vpop.f32.mrb[0].mxu0
    %v1283 = vadd.f32 0.0, %v1282
    %v1284 = vpop.f32.mrb[0].mxu0
    %1285 = vmatprep.mubr.f32.mxu0 0.0
    %1286 = vmatmul.mubr.f32.gmra.mrb[0].mxu0 %v1163
    %v1287 = vpop.f32.mrb[0].mxu0
    %v1288 = vadd.f32 0.0, %v1287
    %v1289 = vpop.f32.mrb[0].mxu0
    %1290 = vmatprep.mubr.f32.mxu0 0.0
    %1291 = vmatmul.mubr.f32.gmra.mrb[0].mxu0 %v1165
    %v1292 = vpop.f32.mrb[0].mxu0
    %v1293 = vadd.f32 0.0, %v1292
    %v1294 = vpop.f32.mrb[0].mxu0
    %1295 = vmatprep.mubr.f32.mxu0 0.0
    %1296 = vmatmul.mubr.f32.gmra.mrb[0].mxu0 %v1167
    %v1297 = vpop.f32.mrb[0].mxu0
    %v1298 = vadd.f32 0.0, %v1297
    %v1299 = vpop.f32.mrb[0].mxu0
    %1300 = vmatprep.mubr.f32.mxu0 0.0
    %1301 = vmatmul.mubr.f32.gmra.mrb[0].mxu0 %v1169
    %v1302 = vpop.f32.mrb[0].mxu0
    %v1303 = vadd.f32 0.0, %v1302
    %v1304 = vpop.f32.mrb[0].mxu0
    %1305 = vmatprep.mubr.f32.mxu0 0.0
    %1306 = vmatmul.mubr.f32.gmra.mrb[0].mxu0 %v1171
    %v1307 = vpop.f32.mrb[0].mxu0
    %v1308 = vadd.f32 0.0, %v1307
    %v1309 = vpop.f32.mrb[0].mxu0
    %1310 = vmatprep.mubr.f32.mxu0 0.0
    %1311 = vmatmul.mubr.f32.gmra.mrb[0].mxu0 %v1173
    %v1312 = vpop.f32.mrb[0].mxu0
    %v1313 = vadd.f32 0.0, %v1312
    %v1314 = vpop.f32.mrb[0].mxu0
    %1315 = vmatprep.mubr.f32.mxu0 0.0
    %1316 = vmatmul.mubr.f32.gmra.mrb[0].mxu0 %v1175
    %v1317 = vpop.f32.mrb[0].mxu0
    %v1318 = vadd.f32 0.0, %v1317
    %v1319 = vpop.f32.mrb[0].mxu0
    %1320 = vmatprep.mubr.f32.mxu0 0.0
    %1321 = vmatmul.mubr.f32.gmra.mrb[0].mxu0 %v1177
    %v1322 = vpop.f32.mrb[0].mxu0
    %v1323 = vadd.f32 0.0, %v1322
    %v1324 = vpop.f32.mrb[0].mxu0
    %1325 = vmatprep.mubr.f32.mxu0 0.0
    %1326 = vmatmul.mubr.f32.gmra.mrb[0].mxu0 %v1179
    %v1327 = vpop.f32.mrb[0].mxu0
    %v1328 = vadd.f32 0.0, %v1327
    %v1329 = vpop.f32.mrb[0].mxu0
    %1330 = vmatprep.mubr.f32.mxu0 0.0
    %1331 = vmatmul.mubr.f32.gmra.mrb[0].mxu0 %v1181
    %v1332 = vpop.f32.mrb[0].mxu0
    %v1333 = vadd.f32 0.0, %v1332
    %v1334 = vpop.f32.mrb[0].mxu0
    %1335 = vmatprep.mubr.f32.mxu0 0.0
    %1336 = vmatmul.mubr.f32.gmra.mrb[0].mxu0 %v1183
    %v1337 = vpop.f32.mrb[0].mxu0
    %v1338 = vadd.f32 0.0, %v1337
    %v1339 = vpop.f32.mrb[0].mxu0
    %1340 = vmatprep.mubr.f32.mxu0 0.0
    %1341 = vmatmul.mubr.f32.gmra.mrb[0].mxu0 %v1185
    %v1342 = vpop.f32.mrb[0].mxu0
    %v1343 = vadd.f32 0.0, %v1342
    %v1344 = vpop.f32.mrb[0].mxu0
    %1345 = vmatprep.mubr.f32.mxu0 0.0
    %1346 = vmatmul.mubr.f32.gmra.mrb[0].mxu0 %v1187
    %v1347 = vpop.f32.mrb[0].mxu0
    %v1348 = vadd.f32 0.0, %v1347
    %v1349 = vpop.f32.mrb[0].mxu0
    %1350 = vmatprep.mubr.f32.mxu0 0.0
    %1351 = vmatmul.mubr.f32.gmra.mrb[0].mxu0 %v1189
    %v1352 = vpop.f32.mrb[0].mxu0
    %v1353 = vadd.f32 0.0, %v1352
    %v1354 = vpop.f32.mrb[0].mxu0
    %1355 = vmatprep.mubr.f32.mxu0 0.0
    %1356 = vmatmul.mubr.f32.gmra.mrb[0].mxu0 %v1191
    %v1357 = vpop.f32.mrb[0].mxu0
    %v1358 = vadd.f32 0.0, %v1357
    %v1359 = vpop.f32.mrb[0].mxu0
    %1360 = vdwg.mxu0
    %v1361 = vadd.f32 %v1089, %v1263
    %v1362 = vadd.f32 %v1090, %v1268
    %v1363 = vadd.f32 %v1091, %v1273
    %v1364 = vadd.f32 %v1092, %v1278
    %v1365 = vadd.f32 %v1093, %v1283
    %v1366 = vadd.f32 %v1094, %v1288
    %v1367 = vadd.f32 %v1095, %v1293
    %v1368 = vadd.f32 %v1096, %v1298
    %v1369 = vadd.f32 %v1097, %v1303
    %v1370 = vadd.f32 %v1098, %v1308
    %v1371 = vadd.f32 %v1099, %v1313
    %v1372 = vadd.f32 %v1100, %v1318
    %v1373 = vadd.f32 %v1101, %v1323
    %v1374 = vadd.f32 %v1102, %v1328
    %v1375 = vadd.f32 %v1103, %v1333
    %v1376 = vadd.f32 %v1104, %v1338
    %v1377 = vadd.f32 %v1105, %v1343
    %v1378 = vadd.f32 %v1106, %v1348
    %v1379 = vadd.f32 %v1107, %v1353
    %v1380 = vadd.f32 %v1108, %v1358
    %v1381 = vld [vmem:[%s2] sm:$0x1]
    %v1383 = vlaneseq
    %v1384 = vshrl.u32 %v1383, 7
    %v1385 = vsub.s32 0, %v1384
    %v1386 = vrot.slane %v1381, %v1385
    %v1388 = vadd.f32 %v1361, %v1386
    %v1389 = vadd.f32 %v1362, %v1386
    %v1390 = vadd.f32 %v1363, %v1386
    %v1391 = vadd.f32 %v1364, %v1386
    %v1392 = vadd.f32 %v1365, %v1386
    %v1393 = vadd.f32 %v1366, %v1386
    %v1394 = vadd.f32 %v1367, %v1386
    %v1395 = vadd.f32 %v1368, %v1386
    %v1396 = vadd.f32 %v1369, %v1386
    %v1397 = vadd.f32 %v1370, %v1386
    %v1398 = vadd.f32 %v1371, %v1386
    %v1399 = vadd.f32 %v1372, %v1386
    %v1400 = vadd.f32 %v1373, %v1386
    %v1401 = vadd.f32 %v1374, %v1386
    %v1402 = vadd.f32 %v1375, %v1386
    %v1403 = vadd.f32 %v1376, %v1386
    %v1404 = vadd.f32 %v1377, %v1386
    %v1405 = vadd.f32 %v1378, %v1386
    %v1406 = vadd.f32 %v1379, %v1386
    %v1407 = vadd.f32 %v1380, %v1386
    %v1408 = vmax.f32 %v1388, 0.0
    %v1409 = vmax.f32 %v1389, 0.0
    %v1410 = vmax.f32 %v1390, 0.0
    %v1411 = vmax.f32 %v1391, 0.0
    %v1412 = vmax.f32 %v1392, 0.0
    %v1413 = vmax.f32 %v1393, 0.0
    %v1414 = vmax.f32 %v1394, 0.0
    %v1415 = vmax.f32 %v1395, 0.0
    %v1416 = vmax.f32 %v1396, 0.0
    %v1417 = vmax.f32 %v1397, 0.0
    %v1418 = vmax.f32 %v1398, 0.0
    %v1419 = vmax.f32 %v1399, 0.0
    %v1420 = vmax.f32 %v1400, 0.0
    %v1421 = vmax.f32 %v1401, 0.0
    %v1422 = vmax.f32 %v1402, 0.0
    %v1423 = vmax.f32 %v1403, 0.0
    %v1424 = vmax.f32 %v1404, 0.0
    %v1425 = vmax.f32 %v1405, 0.0
    %v1426 = vmax.f32 %v1406, 0.0
    %v1427 = vmax.f32 %v1407, 0.0
    %v1448 = vcombine.high %v1408, %v1408
    %v1450 = vunpack.c.l.s4 1983009808
    %v1451 = vunpack.c.0.s8 %v1450
    %v1452 = vlaneseq
    %v1453 = vshrl.u32 %v1452, 7
    %v1454 = vsub.s32 %v1451, %v1453
    %v1455 = vrot.slane %v1408, %v1454
    %v1457 = vunpack.c.l.s4 1983009808
    %v1458 = vunpack.c.0.s8 %v1457
    %v1459 = vlaneseq
    %v1460 = vshrl.u32 %v1459, 7
    %v1461 = vsub.s32 %v1458, %v1460
    %v1462 = vrot.slane %v1448, %v1461
    %v1463 = vcombine.high %v1455, %v1455
    %v1464 = vcombine.high %v1462, %v1462
    %v1465 = vcombine.high %v1409, %v1409
    %v1467 = vunpack.c.l.s4 1983009808
    %v1468 = vunpack.c.0.s8 %v1467
    %v1469 = vlaneseq
    %v1470 = vshrl.u32 %v1469, 7
    %v1471 = vsub.s32 %v1468, %v1470
    %v1472 = vrot.slane %v1409, %v1471
    %v1474 = vunpack.c.l.s4 1983009808
    %v1475 = vunpack.c.0.s8 %v1474
    %v1476 = vlaneseq
    %v1477 = vshrl.u32 %v1476, 7
    %v1478 = vsub.s32 %v1475, %v1477
    %v1479 = vrot.slane %v1465, %v1478
    %v1480 = vcombine.high %v1472, %v1472
    %v1481 = vcombine.high %v1479, %v1479
    %v1482 = vcombine.high %v1410, %v1410
    %v1484 = vunpack.c.l.s4 1983009808
    %v1485 = vunpack.c.0.s8 %v1484
    %v1486 = vlaneseq
    %v1487 = vshrl.u32 %v1486, 7
    %v1488 = vsub.s32 %v1485, %v1487
    %v1489 = vrot.slane %v1410, %v1488
    %v1491 = vunpack.c.l.s4 1983009808
    %v1492 = vunpack.c.0.s8 %v1491
    %v1493 = vlaneseq
    %v1494 = vshrl.u32 %v1493, 7
    %v1495 = vsub.s32 %v1492, %v1494
    %v1496 = vrot.slane %v1482, %v1495
    %v1497 = vcombine.high %v1489, %v1489
    %v1498 = vcombine.high %v1496, %v1496
    %v1499 = vcombine.high %v1411, %v1411
    %v1501 = vunpack.c.l.s4 1983009808
    %v1502 = vunpack.c.0.s8 %v1501
    %v1503 = vlaneseq
    %v1504 = vshrl.u32 %v1503, 7
    %v1505 = vsub.s32 %v1502, %v1504
    %v1506 = vrot.slane %v1411, %v1505
    %v1508 = vunpack.c.l.s4 1983009808
    %v1509 = vunpack.c.0.s8 %v1508
    %v1510 = vlaneseq
    %v1511 = vshrl.u32 %v1510, 7
    %v1512 = vsub.s32 %v1509, %v1511
    %v1513 = vrot.slane %v1499, %v1512
    %v1514 = vcombine.high %v1506, %v1506
    %v1515 = vcombine.high %v1513, %v1513
    %v1516 = vcombine.high %v1412, %v1412
    %v1518 = vunpack.c.l.s4 1983009808
    %v1519 = vunpack.c.0.s8 %v1518
    %v1520 = vlaneseq
    %v1521 = vshrl.u32 %v1520, 7
    %v1522 = vsub.s32 %v1519, %v1521
    %v1523 = vrot.slane %v1412, %v1522
    %v1525 = vunpack.c.l.s4 1983009808
    %v1526 = vunpack.c.0.s8 %v1525
    %v1527 = vlaneseq
    %v1528 = vshrl.u32 %v1527, 7
    %v1529 = vsub.s32 %v1526, %v1528
    %v1530 = vrot.slane %v1516, %v1529
    %v1531 = vcombine.high %v1523, %v1523
    %v1532 = vcombine.high %v1530, %v1530
    %v1533 = vcombine.high %v1413, %v1413
    %v1535 = vunpack.c.l.s4 1983009808
    %v1536 = vunpack.c.0.s8 %v1535
    %v1537 = vlaneseq
    %v1538 = vshrl.u32 %v1537, 7
    %v1539 = vsub.s32 %v1536, %v1538
    %v1540 = vrot.slane %v1413, %v1539
    %v1542 = vunpack.c.l.s4 1983009808
    %v1543 = vunpack.c.0.s8 %v1542
    %v1544 = vlaneseq
    %v1545 = vshrl.u32 %v1544, 7
    %v1546 = vsub.s32 %v1543, %v1545
    %v1547 = vrot.slane %v1533, %v1546
    %v1548 = vcombine.high %v1540, %v1540
    %v1549 = vcombine.high %v1547, %v1547
    %v1550 = vcombine.high %v1414, %v1414
    %v1552 = vunpack.c.l.s4 1983009808
    %v1553 = vunpack.c.0.s8 %v1552
    %v1554 = vlaneseq
    %v1555 = vshrl.u32 %v1554, 7
    %v1556 = vsub.s32 %v1553, %v1555
    %v1557 = vrot.slane %v1414, %v1556
    %v1559 = vunpack.c.l.s4 1983009808
    %v1560 = vunpack.c.0.s8 %v1559
    %v1561 = vlaneseq
    %v1562 = vshrl.u32 %v1561, 7
    %v1563 = vsub.s32 %v1560, %v1562
    %v1564 = vrot.slane %v1550, %v1563
    %v1565 = vcombine.high %v1557, %v1557
    %v1566 = vcombine.high %v1564, %v1564
    %v1567 = vcombine.high %v1415, %v1415
    %v1569 = vunpack.c.l.s4 1983009808
    %v1570 = vunpack.c.0.s8 %v1569
    %v1571 = vlaneseq
    %v1572 = vshrl.u32 %v1571, 7
    %v1573 = vsub.s32 %v1570, %v1572
    %v1574 = vrot.slane %v1415, %v1573
    %v1576 = vunpack.c.l.s4 1983009808
    %v1577 = vunpack.c.0.s8 %v1576
    %v1578 = vlaneseq
    %v1579 = vshrl.u32 %v1578, 7
    %v1580 = vsub.s32 %v1577, %v1579
    %v1581 = vrot.slane %v1567, %v1580
    %v1582 = vcombine.high %v1574, %v1574
    %v1583 = vcombine.high %v1581, %v1581
    %v1584 = vcombine.high %v1416, %v1416
    %v1586 = vunpack.c.l.s4 1983009808
    %v1587 = vunpack.c.0.s8 %v1586
    %v1588 = vlaneseq
    %v1589 = vshrl.u32 %v1588, 7
    %v1590 = vsub.s32 %v1587, %v1589
    %v1591 = vrot.slane %v1416, %v1590
    %v1593 = vunpack.c.l.s4 1983009808
    %v1594 = vunpack.c.0.s8 %v1593
    %v1595 = vlaneseq
    %v1596 = vshrl.u32 %v1595, 7
    %v1597 = vsub.s32 %v1594, %v1596
    %v1598 = vrot.slane %v1584, %v1597
    %v1599 = vcombine.high %v1591, %v1591
    %v1600 = vcombine.high %v1598, %v1598
    %v1601 = vcombine.high %v1417, %v1417
    %v1603 = vunpack.c.l.s4 1983009808
    %v1604 = vunpack.c.0.s8 %v1603
    %v1605 = vlaneseq
    %v1606 = vshrl.u32 %v1605, 7
    %v1607 = vsub.s32 %v1604, %v1606
    %v1608 = vrot.slane %v1417, %v1607
    %v1610 = vunpack.c.l.s4 1983009808
    %v1611 = vunpack.c.0.s8 %v1610
    %v1612 = vlaneseq
    %v1613 = vshrl.u32 %v1612, 7
    %v1614 = vsub.s32 %v1611, %v1613
    %v1615 = vrot.slane %v1601, %v1614
    %v1616 = vcombine.high %v1608, %v1608
    %v1617 = vcombine.high %v1615, %v1615
    %v1618 = vcombine.high %v1418, %v1418
    %v1620 = vunpack.c.l.s4 1983009808
    %v1621 = vunpack.c.0.s8 %v1620
    %v1622 = vlaneseq
    %v1623 = vshrl.u32 %v1622, 7
    %v1624 = vsub.s32 %v1621, %v1623
    %v1625 = vrot.slane %v1418, %v1624
    %v1627 = vunpack.c.l.s4 1983009808
    %v1628 = vunpack.c.0.s8 %v1627
    %v1629 = vlaneseq
    %v1630 = vshrl.u32 %v1629, 7
    %v1631 = vsub.s32 %v1628, %v1630
    %v1632 = vrot.slane %v1618, %v1631
    %v1633 = vcombine.high %v1625, %v1625
    %v1634 = vcombine.high %v1632, %v1632
    %v1635 = vcombine.high %v1419, %v1419
    %v1637 = vunpack.c.l.s4 1983009808
    %v1638 = vunpack.c.0.s8 %v1637
    %v1639 = vlaneseq
    %v1640 = vshrl.u32 %v1639, 7
    %v1641 = vsub.s32 %v1638, %v1640
    %v1642 = vrot.slane %v1419, %v1641
    %v1644 = vunpack.c.l.s4 1983009808
    %v1645 = vunpack.c.0.s8 %v1644
    %v1646 = vlaneseq
    %v1647 = vshrl.u32 %v1646, 7
    %v1648 = vsub.s32 %v1645, %v1647
    %v1649 = vrot.slane %v1635, %v1648
    %v1650 = vcombine.high %v1642, %v1642
    %v1651 = vcombine.high %v1649, %v1649
    %v1652 = vcombine.high %v1420, %v1420
    %v1654 = vunpack.c.l.s4 1983009808
    %v1655 = vunpack.c.0.s8 %v1654
    %v1656 = vlaneseq
    %v1657 = vshrl.u32 %v1656, 7
    %v1658 = vsub.s32 %v1655, %v1657
    %v1659 = vrot.slane %v1420, %v1658
    %v1661 = vunpack.c.l.s4 1983009808
    %v1662 = vunpack.c.0.s8 %v1661
    %v1663 = vlaneseq
    %v1664 = vshrl.u32 %v1663, 7
    %v1665 = vsub.s32 %v1662, %v1664
    %v1666 = vrot.slane %v1652, %v1665
    %v1667 = vcombine.high %v1659, %v1659
    %v1668 = vcombine.high %v1666, %v1666
    %v1669 = vcombine.high %v1421, %v1421
    %v1671 = vunpack.c.l.s4 1983009808
    %v1672 = vunpack.c.0.s8 %v1671
    %v1673 = vlaneseq
    %v1674 = vshrl.u32 %v1673, 7
    %v1675 = vsub.s32 %v1672, %v1674
    %v1676 = vrot.slane %v1421, %v1675
    %v1678 = vunpack.c.l.s4 1983009808
    %v1679 = vunpack.c.0.s8 %v1678
    %v1680 = vlaneseq
    %v1681 = vshrl.u32 %v1680, 7
    %v1682 = vsub.s32 %v1679, %v1681
    %v1683 = vrot.slane %v1669, %v1682
    %v1684 = vcombine.high %v1676, %v1676
    %v1685 = vcombine.high %v1683, %v1683
    %v1686 = vcombine.high %v1422, %v1422
    %v1688 = vunpack.c.l.s4 1983009808
    %v1689 = vunpack.c.0.s8 %v1688
    %v1690 = vlaneseq
    %v1691 = vshrl.u32 %v1690, 7
    %v1692 = vsub.s32 %v1689, %v1691
    %v1693 = vrot.slane %v1422, %v1692
    %v1695 = vunpack.c.l.s4 1983009808
    %v1696 = vunpack.c.0.s8 %v1695
    %v1697 = vlaneseq
    %v1698 = vshrl.u32 %v1697, 7
    %v1699 = vsub.s32 %v1696, %v1698
    %v1700 = vrot.slane %v1686, %v1699
    %v1701 = vcombine.high %v1693, %v1693
    %v1702 = vcombine.high %v1700, %v1700
    %v1703 = vcombine.high %v1423, %v1423
    %v1705 = vunpack.c.l.s4 1983009808
    %v1706 = vunpack.c.0.s8 %v1705
    %v1707 = vlaneseq
    %v1708 = vshrl.u32 %v1707, 7
    %v1709 = vsub.s32 %v1706, %v1708
    %v1710 = vrot.slane %v1423, %v1709
    %v1712 = vunpack.c.l.s4 1983009808
    %v1713 = vunpack.c.0.s8 %v1712
    %v1714 = vlaneseq
    %v1715 = vshrl.u32 %v1714, 7
    %v1716 = vsub.s32 %v1713, %v1715
    %v1717 = vrot.slane %v1703, %v1716
    %v1718 = vcombine.high %v1710, %v1710
    %v1719 = vcombine.high %v1717, %v1717
    %v1720 = vcombine.high %v1424, %v1424
    %v1722 = vunpack.c.l.s4 1983009808
    %v1723 = vunpack.c.0.s8 %v1722
    %v1724 = vlaneseq
    %v1725 = vshrl.u32 %v1724, 7
    %v1726 = vsub.s32 %v1723, %v1725
    %v1727 = vrot.slane %v1424, %v1726
    %v1729 = vunpack.c.l.s4 1983009808
    %v1730 = vunpack.c.0.s8 %v1729
    %v1731 = vlaneseq
    %v1732 = vshrl.u32 %v1731, 7
    %v1733 = vsub.s32 %v1730, %v1732
    %v1734 = vrot.slane %v1720, %v1733
    %v1735 = vcombine.high %v1727, %v1727
    %v1736 = vcombine.high %v1734, %v1734
    %v1737 = vcombine.high %v1425, %v1425
    %v1739 = vunpack.c.l.s4 1983009808
    %v1740 = vunpack.c.0.s8 %v1739
    %v1741 = vlaneseq
    %v1742 = vshrl.u32 %v1741, 7
    %v1743 = vsub.s32 %v1740, %v1742
    %v1744 = vrot.slane %v1425, %v1743
    %v1746 = vunpack.c.l.s4 1983009808
    %v1747 = vunpack.c.0.s8 %v1746
    %v1748 = vlaneseq
    %v1749 = vshrl.u32 %v1748, 7
    %v1750 = vsub.s32 %v1747, %v1749
    %v1751 = vrot.slane %v1737, %v1750
    %v1752 = vcombine.high %v1744, %v1744
    %v1753 = vcombine.high %v1751, %v1751
    %v1754 = vcombine.high %v1426, %v1426
    %v1756 = vunpack.c.l.s4 1983009808
    %v1757 = vunpack.c.0.s8 %v1756
    %v1758 = vlaneseq
    %v1759 = vshrl.u32 %v1758, 7
    %v1760 = vsub.s32 %v1757, %v1759
    %v1761 = vrot.slane %v1426, %v1760
    %v1763 = vunpack.c.l.s4 1983009808
    %v1764 = vunpack.c.0.s8 %v1763
    %v1765 = vlaneseq
    %v1766 = vshrl.u32 %v1765, 7
    %v1767 = vsub.s32 %v1764, %v1766
    %v1768 = vrot.slane %v1754, %v1767
    %v1769 = vcombine.high %v1761, %v1761
    %v1770 = vcombine.high %v1768, %v1768
    %v1771 = vcombine.high %v1427, %v1427
    %v1773 = vunpack.c.l.s4 1983009808
    %v1774 = vunpack.c.0.s8 %v1773
    %v1775 = vlaneseq
    %v1776 = vshrl.u32 %v1775, 7
    %v1777 = vsub.s32 %v1774, %v1776
    %v1778 = vrot.slane %v1427, %v1777
    %v1780 = vunpack.c.l.s4 1983009808
    %v1781 = vunpack.c.0.s8 %v1780
    %v1782 = vlaneseq
    %v1783 = vshrl.u32 %v1782, 7
    %v1784 = vsub.s32 %v1781, %v1783
    %v1785 = vrot.slane %v1771, %v1784
    %v1786 = vcombine.high %v1778, %v1778
    %v1787 = vcombine.high %v1785, %v1785
    %vm1868 = vcmask 123904
    %v1869 = vsel %vm1868, %v1455, -inf
    %v1870 = vrot.slane %v1869, 4
    %v1871 = vmax.f32 %v1869, %v1870
    %v1872 = vrot.slane %v1871, 2
    %v1873 = vmax.f32 %v1871, %v1872
    %v1874 = vrot.slane %v1873, 1
    %v1875 = vmax.f32 %v1873, %v1874
    %v1876 = vsel %vm1868, %v1463, -inf
    %v1877 = vrot.slane %v1876, 4
    %v1878 = vmax.f32 %v1876, %v1877
    %v1879 = vrot.slane %v1878, 2
    %v1880 = vmax.f32 %v1878, %v1879
    %v1881 = vrot.slane %v1880, 1
    %v1882 = vmax.f32 %v1880, %v1881
    %v1883 = vsel %vm1868, %v1462, -inf
    %v1884 = vrot.slane %v1883, 4
    %v1885 = vmax.f32 %v1883, %v1884
    %v1886 = vrot.slane %v1885, 2
    %v1887 = vmax.f32 %v1885, %v1886
    %v1888 = vrot.slane %v1887, 1
    %v1889 = vmax.f32 %v1887, %v1888
    %v1890 = vsel %vm1868, %v1464, -inf
    %v1891 = vrot.slane %v1890, 4
    %v1892 = vmax.f32 %v1890, %v1891
    %v1893 = vrot.slane %v1892, 2
    %v1894 = vmax.f32 %v1892, %v1893
    %v1895 = vrot.slane %v1894, 1
    %v1896 = vmax.f32 %v1894, %v1895
    %v1897 = vsel %vm1868, %v1472, -inf
    %v1898 = vrot.slane %v1897, 4
    %v1899 = vmax.f32 %v1897, %v1898
    %v1900 = vrot.slane %v1899, 2
    %v1901 = vmax.f32 %v1899, %v1900
    %v1902 = vrot.slane %v1901, 1
    %v1903 = vmax.f32 %v1901, %v1902
    %v1904 = vsel %vm1868, %v1480, -inf
    %v1905 = vrot.slane %v1904, 4
    %v1906 = vmax.f32 %v1904, %v1905
    %v1907 = vrot.slane %v1906, 2
    %v1908 = vmax.f32 %v1906, %v1907
    %v1909 = vrot.slane %v1908, 1
    %v1910 = vmax.f32 %v1908, %v1909
    %v1911 = vsel %vm1868, %v1479, -inf
    %v1912 = vrot.slane %v1911, 4
    %v1913 = vmax.f32 %v1911, %v1912
    %v1914 = vrot.slane %v1913, 2
    %v1915 = vmax.f32 %v1913, %v1914
    %v1916 = vrot.slane %v1915, 1
    %v1917 = vmax.f32 %v1915, %v1916
    %v1918 = vsel %vm1868, %v1481, -inf
    %v1919 = vrot.slane %v1918, 4
    %v1920 = vmax.f32 %v1918, %v1919
    %v1921 = vrot.slane %v1920, 2
    %v1922 = vmax.f32 %v1920, %v1921
    %v1923 = vrot.slane %v1922, 1
    %v1924 = vmax.f32 %v1922, %v1923
    %v1925 = vsel %vm1868, %v1489, -inf
    %v1926 = vrot.slane %v1925, 4
    %v1927 = vmax.f32 %v1925, %v1926
    %v1928 = vrot.slane %v1927, 2
    %v1929 = vmax.f32 %v1927, %v1928
    %v1930 = vrot.slane %v1929, 1
    %v1931 = vmax.f32 %v1929, %v1930
    %v1932 = vsel %vm1868, %v1497, -inf
    %v1933 = vrot.slane %v1932, 4
    %v1934 = vmax.f32 %v1932, %v1933
    %v1935 = vrot.slane %v1934, 2
    %v1936 = vmax.f32 %v1934, %v1935
    %v1937 = vrot.slane %v1936, 1
    %v1938 = vmax.f32 %v1936, %v1937
    %v1939 = vsel %vm1868, %v1496, -inf
    %v1940 = vrot.slane %v1939, 4
    %v1941 = vmax.f32 %v1939, %v1940
    %v1942 = vrot.slane %v1941, 2
    %v1943 = vmax.f32 %v1941, %v1942
    %v1944 = vrot.slane %v1943, 1
    %v1945 = vmax.f32 %v1943, %v1944
    %v1946 = vsel %vm1868, %v1498, -inf
    %v1947 = vrot.slane %v1946, 4
    %v1948 = vmax.f32 %v1946, %v1947
    %v1949 = vrot.slane %v1948, 2
    %v1950 = vmax.f32 %v1948, %v1949
    %v1951 = vrot.slane %v1950, 1
    %v1952 = vmax.f32 %v1950, %v1951
    %v1953 = vsel %vm1868, %v1506, -inf
    %v1954 = vrot.slane %v1953, 4
    %v1955 = vmax.f32 %v1953, %v1954
    %v1956 = vrot.slane %v1955, 2
    %v1957 = vmax.f32 %v1955, %v1956
    %v1958 = vrot.slane %v1957, 1
    %v1959 = vmax.f32 %v1957, %v1958
    %v1960 = vsel %vm1868, %v1514, -inf
    %v1961 = vrot.slane %v1960, 4
    %v1962 = vmax.f32 %v1960, %v1961
    %v1963 = vrot.slane %v1962, 2
    %v1964 = vmax.f32 %v1962, %v1963
    %v1965 = vrot.slane %v1964, 1
    %v1966 = vmax.f32 %v1964, %v1965
    %v1967 = vsel %vm1868, %v1513, -inf
    %v1968 = vrot.slane %v1967, 4
    %v1969 = vmax.f32 %v1967, %v1968
    %v1970 = vrot.slane %v1969, 2
    %v1971 = vmax.f32 %v1969, %v1970
    %v1972 = vrot.slane %v1971, 1
    %v1973 = vmax.f32 %v1971, %v1972
    %v1974 = vsel %vm1868, %v1515, -inf
    %v1975 = vrot.slane %v1974, 4
    %v1976 = vmax.f32 %v1974, %v1975
    %v1977 = vrot.slane %v1976, 2
    %v1978 = vmax.f32 %v1976, %v1977
    %v1979 = vrot.slane %v1978, 1
    %v1980 = vmax.f32 %v1978, %v1979
    %v1981 = vsel %vm1868, %v1523, -inf
    %v1982 = vrot.slane %v1981, 4
    %v1983 = vmax.f32 %v1981, %v1982
    %v1984 = vrot.slane %v1983, 2
    %v1985 = vmax.f32 %v1983, %v1984
    %v1986 = vrot.slane %v1985, 1
    %v1987 = vmax.f32 %v1985, %v1986
    %v1988 = vsel %vm1868, %v1531, -inf
    %v1989 = vrot.slane %v1988, 4
    %v1990 = vmax.f32 %v1988, %v1989
    %v1991 = vrot.slane %v1990, 2
    %v1992 = vmax.f32 %v1990, %v1991
    %v1993 = vrot.slane %v1992, 1
    %v1994 = vmax.f32 %v1992, %v1993
    %v1995 = vsel %vm1868, %v1530, -inf
    %v1996 = vrot.slane %v1995, 4
    %v1997 = vmax.f32 %v1995, %v1996
    %v1998 = vrot.slane %v1997, 2
    %v1999 = vmax.f32 %v1997, %v1998
    %v2000 = vrot.slane %v1999, 1
    %v2001 = vmax.f32 %v1999, %v2000
    %v2002 = vsel %vm1868, %v1532, -inf
    %v2003 = vrot.slane %v2002, 4
    %v2004 = vmax.f32 %v2002, %v2003
    %v2005 = vrot.slane %v2004, 2
    %v2006 = vmax.f32 %v2004, %v2005
    %v2007 = vrot.slane %v2006, 1
    %v2008 = vmax.f32 %v2006, %v2007
    %v2009 = vsel %vm1868, %v1540, -inf
    %v2010 = vrot.slane %v2009, 4
    %v2011 = vmax.f32 %v2009, %v2010
    %v2012 = vrot.slane %v2011, 2
    %v2013 = vmax.f32 %v2011, %v2012
    %v2014 = vrot.slane %v2013, 1
    %v2015 = vmax.f32 %v2013, %v2014
    %v2016 = vsel %vm1868, %v1548, -inf
    %v2017 = vrot.slane %v2016, 4
    %v2018 = vmax.f32 %v2016, %v2017
    %v2019 = vrot.slane %v2018, 2
    %v2020 = vmax.f32 %v2018, %v2019
    %v2021 = vrot.slane %v2020, 1
    %v2022 = vmax.f32 %v2020, %v2021
    %v2023 = vsel %vm1868, %v1547, -inf
    %v2024 = vrot.slane %v2023, 4
    %v2025 = vmax.f32 %v2023, %v2024
    %v2026 = vrot.slane %v2025, 2
    %v2027 = vmax.f32 %v2025, %v2026
    %v2028 = vrot.slane %v2027, 1
    %v2029 = vmax.f32 %v2027, %v2028
    %v2030 = vsel %vm1868, %v1549, -inf
    %v2031 = vrot.slane %v2030, 4
    %v2032 = vmax.f32 %v2030, %v2031
    %v2033 = vrot.slane %v2032, 2
    %v2034 = vmax.f32 %v2032, %v2033
    %v2035 = vrot.slane %v2034, 1
    %v2036 = vmax.f32 %v2034, %v2035
    %v2037 = vsel %vm1868, %v1557, -inf
    %v2038 = vrot.slane %v2037, 4
    %v2039 = vmax.f32 %v2037, %v2038
    %v2040 = vrot.slane %v2039, 2
    %v2041 = vmax.f32 %v2039, %v2040
    %v2042 = vrot.slane %v2041, 1
    %v2043 = vmax.f32 %v2041, %v2042
    %v2044 = vsel %vm1868, %v1565, -inf
    %v2045 = vrot.slane %v2044, 4
    %v2046 = vmax.f32 %v2044, %v2045
    %v2047 = vrot.slane %v2046, 2
    %v2048 = vmax.f32 %v2046, %v2047
    %v2049 = vrot.slane %v2048, 1
    %v2050 = vmax.f32 %v2048, %v2049
    %v2051 = vsel %vm1868, %v1564, -inf
    %v2052 = vrot.slane %v2051, 4
    %v2053 = vmax.f32 %v2051, %v2052
    %v2054 = vrot.slane %v2053, 2
    %v2055 = vmax.f32 %v2053, %v2054
    %v2056 = vrot.slane %v2055, 1
    %v2057 = vmax.f32 %v2055, %v2056
    %v2058 = vsel %vm1868, %v1566, -inf
    %v2059 = vrot.slane %v2058, 4
    %v2060 = vmax.f32 %v2058, %v2059
    %v2061 = vrot.slane %v2060, 2
    %v2062 = vmax.f32 %v2060, %v2061
    %v2063 = vrot.slane %v2062, 1
    %v2064 = vmax.f32 %v2062, %v2063
    %v2065 = vsel %vm1868, %v1574, -inf
    %v2066 = vrot.slane %v2065, 4
    %v2067 = vmax.f32 %v2065, %v2066
    %v2068 = vrot.slane %v2067, 2
    %v2069 = vmax.f32 %v2067, %v2068
    %v2070 = vrot.slane %v2069, 1
    %v2071 = vmax.f32 %v2069, %v2070
    %v2072 = vsel %vm1868, %v1582, -inf
    %v2073 = vrot.slane %v2072, 4
    %v2074 = vmax.f32 %v2072, %v2073
    %v2075 = vrot.slane %v2074, 2
    %v2076 = vmax.f32 %v2074, %v2075
    %v2077 = vrot.slane %v2076, 1
    %v2078 = vmax.f32 %v2076, %v2077
    %v2079 = vsel %vm1868, %v1581, -inf
    %v2080 = vrot.slane %v2079, 4
    %v2081 = vmax.f32 %v2079, %v2080
    %v2082 = vrot.slane %v2081, 2
    %v2083 = vmax.f32 %v2081, %v2082
    %v2084 = vrot.slane %v2083, 1
    %v2085 = vmax.f32 %v2083, %v2084
    %v2086 = vsel %vm1868, %v1583, -inf
    %v2087 = vrot.slane %v2086, 4
    %v2088 = vmax.f32 %v2086, %v2087
    %v2089 = vrot.slane %v2088, 2
    %v2090 = vmax.f32 %v2088, %v2089
    %v2091 = vrot.slane %v2090, 1
    %v2092 = vmax.f32 %v2090, %v2091
    %v2093 = vsel %vm1868, %v1591, -inf
    %v2094 = vrot.slane %v2093, 4
    %v2095 = vmax.f32 %v2093, %v2094
    %v2096 = vrot.slane %v2095, 2
    %v2097 = vmax.f32 %v2095, %v2096
    %v2098 = vrot.slane %v2097, 1
    %v2099 = vmax.f32 %v2097, %v2098
    %v2100 = vsel %vm1868, %v1599, -inf
    %v2101 = vrot.slane %v2100, 4
    %v2102 = vmax.f32 %v2100, %v2101
    %v2103 = vrot.slane %v2102, 2
    %v2104 = vmax.f32 %v2102, %v2103
    %v2105 = vrot.slane %v2104, 1
    %v2106 = vmax.f32 %v2104, %v2105
    %v2107 = vsel %vm1868, %v1598, -inf
    %v2108 = vrot.slane %v2107, 4
    %v2109 = vmax.f32 %v2107, %v2108
    %v2110 = vrot.slane %v2109, 2
    %v2111 = vmax.f32 %v2109, %v2110
    %v2112 = vrot.slane %v2111, 1
    %v2113 = vmax.f32 %v2111, %v2112
    %v2114 = vsel %vm1868, %v1600, -inf
    %v2115 = vrot.slane %v2114, 4
    %v2116 = vmax.f32 %v2114, %v2115
    %v2117 = vrot.slane %v2116, 2
    %v2118 = vmax.f32 %v2116, %v2117
    %v2119 = vrot.slane %v2118, 1
    %v2120 = vmax.f32 %v2118, %v2119
    %v2121 = vsel %vm1868, %v1608, -inf
    %v2122 = vrot.slane %v2121, 4
    %v2123 = vmax.f32 %v2121, %v2122
    %v2124 = vrot.slane %v2123, 2
    %v2125 = vmax.f32 %v2123, %v2124
    %v2126 = vrot.slane %v2125, 1
    %v2127 = vmax.f32 %v2125, %v2126
    %v2128 = vsel %vm1868, %v1616, -inf
    %v2129 = vrot.slane %v2128, 4
    %v2130 = vmax.f32 %v2128, %v2129
    %v2131 = vrot.slane %v2130, 2
    %v2132 = vmax.f32 %v2130, %v2131
    %v2133 = vrot.slane %v2132, 1
    %v2134 = vmax.f32 %v2132, %v2133
    %v2135 = vsel %vm1868, %v1615, -inf
    %v2136 = vrot.slane %v2135, 4
    %v2137 = vmax.f32 %v2135, %v2136
    %v2138 = vrot.slane %v2137, 2
    %v2139 = vmax.f32 %v2137, %v2138
    %v2140 = vrot.slane %v2139, 1
    %v2141 = vmax.f32 %v2139, %v2140
    %v2142 = vsel %vm1868, %v1617, -inf
    %v2143 = vrot.slane %v2142, 4
    %v2144 = vmax.f32 %v2142, %v2143
    %v2145 = vrot.slane %v2144, 2
    %v2146 = vmax.f32 %v2144, %v2145
    %v2147 = vrot.slane %v2146, 1
    %v2148 = vmax.f32 %v2146, %v2147
    %v2149 = vsel %vm1868, %v1625, -inf
    %v2150 = vrot.slane %v2149, 4
    %v2151 = vmax.f32 %v2149, %v2150
    %v2152 = vrot.slane %v2151, 2
    %v2153 = vmax.f32 %v2151, %v2152
    %v2154 = vrot.slane %v2153, 1
    %v2155 = vmax.f32 %v2153, %v2154
    %v2156 = vsel %vm1868, %v1633, -inf
    %v2157 = vrot.slane %v2156, 4
    %v2158 = vmax.f32 %v2156, %v2157
    %v2159 = vrot.slane %v2158, 2
    %v2160 = vmax.f32 %v2158, %v2159
    %v2161 = vrot.slane %v2160, 1
    %v2162 = vmax.f32 %v2160, %v2161
    %v2163 = vsel %vm1868, %v1632, -inf
    %v2164 = vrot.slane %v2163, 4
    %v2165 = vmax.f32 %v2163, %v2164
    %v2166 = vrot.slane %v2165, 2
    %v2167 = vmax.f32 %v2165, %v2166
    %v2168 = vrot.slane %v2167, 1
    %v2169 = vmax.f32 %v2167, %v2168
    %v2170 = vsel %vm1868, %v1634, -inf
    %v2171 = vrot.slane %v2170, 4
    %v2172 = vmax.f32 %v2170, %v2171
    %v2173 = vrot.slane %v2172, 2
    %v2174 = vmax.f32 %v2172, %v2173
    %v2175 = vrot.slane %v2174, 1
    %v2176 = vmax.f32 %v2174, %v2175
    %v2177 = vsel %vm1868, %v1642, -inf
    %v2178 = vrot.slane %v2177, 4
    %v2179 = vmax.f32 %v2177, %v2178
    %v2180 = vrot.slane %v2179, 2
    %v2181 = vmax.f32 %v2179, %v2180
    %v2182 = vrot.slane %v2181, 1
    %v2183 = vmax.f32 %v2181, %v2182
    %v2184 = vsel %vm1868, %v1650, -inf
    %v2185 = vrot.slane %v2184, 4
    %v2186 = vmax.f32 %v2184, %v2185
    %v2187 = vrot.slane %v2186, 2
    %v2188 = vmax.f32 %v2186, %v2187
    %v2189 = vrot.slane %v2188, 1
    %v2190 = vmax.f32 %v2188, %v2189
    %v2191 = vsel %vm1868, %v1649, -inf
    %v2192 = vrot.slane %v2191, 4
    %v2193 = vmax.f32 %v2191, %v2192
    %v2194 = vrot.slane %v2193, 2
    %v2195 = vmax.f32 %v2193, %v2194
    %v2196 = vrot.slane %v2195, 1
    %v2197 = vmax.f32 %v2195, %v2196
    %v2198 = vsel %vm1868, %v1651, -inf
    %v2199 = vrot.slane %v2198, 4
    %v2200 = vmax.f32 %v2198, %v2199
    %v2201 = vrot.slane %v2200, 2
    %v2202 = vmax.f32 %v2200, %v2201
    %v2203 = vrot.slane %v2202, 1
    %v2204 = vmax.f32 %v2202, %v2203
    %v2205 = vsel %vm1868, %v1659, -inf
    %v2206 = vrot.slane %v2205, 4
    %v2207 = vmax.f32 %v2205, %v2206
    %v2208 = vrot.slane %v2207, 2
    %v2209 = vmax.f32 %v2207, %v2208
    %v2210 = vrot.slane %v2209, 1
    %v2211 = vmax.f32 %v2209, %v2210
    %v2212 = vsel %vm1868, %v1667, -inf
    %v2213 = vrot.slane %v2212, 4
    %v2214 = vmax.f32 %v2212, %v2213
    %v2215 = vrot.slane %v2214, 2
    %v2216 = vmax.f32 %v2214, %v2215
    %v2217 = vrot.slane %v2216, 1
    %v2218 = vmax.f32 %v2216, %v2217
    %v2219 = vsel %vm1868, %v1666, -inf
    %v2220 = vrot.slane %v2219, 4
    %v2221 = vmax.f32 %v2219, %v2220
    %v2222 = vrot.slane %v2221, 2
    %v2223 = vmax.f32 %v2221, %v2222
    %v2224 = vrot.slane %v2223, 1
    %v2225 = vmax.f32 %v2223, %v2224
    %v2226 = vsel %vm1868, %v1668, -inf
    %v2227 = vrot.slane %v2226, 4
    %v2228 = vmax.f32 %v2226, %v2227
    %v2229 = vrot.slane %v2228, 2
    %v2230 = vmax.f32 %v2228, %v2229
    %v2231 = vrot.slane %v2230, 1
    %v2232 = vmax.f32 %v2230, %v2231
    %v2233 = vsel %vm1868, %v1676, -inf
    %v2234 = vrot.slane %v2233, 4
    %v2235 = vmax.f32 %v2233, %v2234
    %v2236 = vrot.slane %v2235, 2
    %v2237 = vmax.f32 %v2235, %v2236
    %v2238 = vrot.slane %v2237, 1
    %v2239 = vmax.f32 %v2237, %v2238
    %v2240 = vsel %vm1868, %v1684, -inf
    %v2241 = vrot.slane %v2240, 4
    %v2242 = vmax.f32 %v2240, %v2241
    %v2243 = vrot.slane %v2242, 2
    %v2244 = vmax.f32 %v2242, %v2243
    %v2245 = vrot.slane %v2244, 1
    %v2246 = vmax.f32 %v2244, %v2245
    %v2247 = vsel %vm1868, %v1683, -inf
    %v2248 = vrot.slane %v2247, 4
    %v2249 = vmax.f32 %v2247, %v2248
    %v2250 = vrot.slane %v2249, 2
    %v2251 = vmax.f32 %v2249, %v2250
    %v2252 = vrot.slane %v2251, 1
    %v2253 = vmax.f32 %v2251, %v2252
    %v2254 = vsel %vm1868, %v1685, -inf
    %v2255 = vrot.slane %v2254, 4
    %v2256 = vmax.f32 %v2254, %v2255
    %v2257 = vrot.slane %v2256, 2
    %v2258 = vmax.f32 %v2256, %v2257
    %v2259 = vrot.slane %v2258, 1
    %v2260 = vmax.f32 %v2258, %v2259
    %v2261 = vsel %vm1868, %v1693, -inf
    %v2262 = vrot.slane %v2261, 4
    %v2263 = vmax.f32 %v2261, %v2262
    %v2264 = vrot.slane %v2263, 2
    %v2265 = vmax.f32 %v2263, %v2264
    %v2266 = vrot.slane %v2265, 1
    %v2267 = vmax.f32 %v2265, %v2266
    %v2268 = vsel %vm1868, %v1701, -inf
    %v2269 = vrot.slane %v2268, 4
    %v2270 = vmax.f32 %v2268, %v2269
    %v2271 = vrot.slane %v2270, 2
    %v2272 = vmax.f32 %v2270, %v2271
    %v2273 = vrot.slane %v2272, 1
    %v2274 = vmax.f32 %v2272, %v2273
    %v2275 = vsel %vm1868, %v1700, -inf
    %v2276 = vrot.slane %v2275, 4
    %v2277 = vmax.f32 %v2275, %v2276
    %v2278 = vrot.slane %v2277, 2
    %v2279 = vmax.f32 %v2277, %v2278
    %v2280 = vrot.slane %v2279, 1
    %v2281 = vmax.f32 %v2279, %v2280
    %v2282 = vsel %vm1868, %v1702, -inf
    %v2283 = vrot.slane %v2282, 4
    %v2284 = vmax.f32 %v2282, %v2283
    %v2285 = vrot.slane %v2284, 2
    %v2286 = vmax.f32 %v2284, %v2285
    %v2287 = vrot.slane %v2286, 1
    %v2288 = vmax.f32 %v2286, %v2287
    %v2289 = vsel %vm1868, %v1710, -inf
    %v2290 = vrot.slane %v2289, 4
    %v2291 = vmax.f32 %v2289, %v2290
    %v2292 = vrot.slane %v2291, 2
    %v2293 = vmax.f32 %v2291, %v2292
    %v2294 = vrot.slane %v2293, 1
    %v2295 = vmax.f32 %v2293, %v2294
    %v2296 = vsel %vm1868, %v1718, -inf
    %v2297 = vrot.slane %v2296, 4
    %v2298 = vmax.f32 %v2296, %v2297
    %v2299 = vrot.slane %v2298, 2
    %v2300 = vmax.f32 %v2298, %v2299
    %v2301 = vrot.slane %v2300, 1
    %v2302 = vmax.f32 %v2300, %v2301
    %v2303 = vsel %vm1868, %v1717, -inf
    %v2304 = vrot.slane %v2303, 4
    %v2305 = vmax.f32 %v2303, %v2304
    %v2306 = vrot.slane %v2305, 2
    %v2307 = vmax.f32 %v2305, %v2306
    %v2308 = vrot.slane %v2307, 1
    %v2309 = vmax.f32 %v2307, %v2308
    %v2310 = vsel %vm1868, %v1719, -inf
    %v2311 = vrot.slane %v2310, 4
    %v2312 = vmax.f32 %v2310, %v2311
    %v2313 = vrot.slane %v2312, 2
    %v2314 = vmax.f32 %v2312, %v2313
    %v2315 = vrot.slane %v2314, 1
    %v2316 = vmax.f32 %v2314, %v2315
    %v2317 = vsel %vm1868, %v1727, -inf
    %v2318 = vrot.slane %v2317, 4
    %v2319 = vmax.f32 %v2317, %v2318
    %v2320 = vrot.slane %v2319, 2
    %v2321 = vmax.f32 %v2319, %v2320
    %v2322 = vrot.slane %v2321, 1
    %v2323 = vmax.f32 %v2321, %v2322
    %v2324 = vsel %vm1868, %v1735, -inf
    %v2325 = vrot.slane %v2324, 4
    %v2326 = vmax.f32 %v2324, %v2325
    %v2327 = vrot.slane %v2326, 2
    %v2328 = vmax.f32 %v2326, %v2327
    %v2329 = vrot.slane %v2328, 1
    %v2330 = vmax.f32 %v2328, %v2329
    %v2331 = vsel %vm1868, %v1734, -inf
    %v2332 = vrot.slane %v2331, 4
    %v2333 = vmax.f32 %v2331, %v2332
    %v2334 = vrot.slane %v2333, 2
    %v2335 = vmax.f32 %v2333, %v2334
    %v2336 = vrot.slane %v2335, 1
    %v2337 = vmax.f32 %v2335, %v2336
    %v2338 = vsel %vm1868, %v1736, -inf
    %v2339 = vrot.slane %v2338, 4
    %v2340 = vmax.f32 %v2338, %v2339
    %v2341 = vrot.slane %v2340, 2
    %v2342 = vmax.f32 %v2340, %v2341
    %v2343 = vrot.slane %v2342, 1
    %v2344 = vmax.f32 %v2342, %v2343
    %v2345 = vsel %vm1868, %v1744, -inf
    %v2346 = vrot.slane %v2345, 4
    %v2347 = vmax.f32 %v2345, %v2346
    %v2348 = vrot.slane %v2347, 2
    %v2349 = vmax.f32 %v2347, %v2348
    %v2350 = vrot.slane %v2349, 1
    %v2351 = vmax.f32 %v2349, %v2350
    %v2352 = vsel %vm1868, %v1752, -inf
    %v2353 = vrot.slane %v2352, 4
    %v2354 = vmax.f32 %v2352, %v2353
    %v2355 = vrot.slane %v2354, 2
    %v2356 = vmax.f32 %v2354, %v2355
    %v2357 = vrot.slane %v2356, 1
    %v2358 = vmax.f32 %v2356, %v2357
    %v2359 = vsel %vm1868, %v1751, -inf
    %v2360 = vrot.slane %v2359, 4
    %v2361 = vmax.f32 %v2359, %v2360
    %v2362 = vrot.slane %v2361, 2
    %v2363 = vmax.f32 %v2361, %v2362
    %v2364 = vrot.slane %v2363, 1
    %v2365 = vmax.f32 %v2363, %v2364
    %v2366 = vsel %vm1868, %v1753, -inf
    %v2367 = vrot.slane %v2366, 4
    %v2368 = vmax.f32 %v2366, %v2367
    %v2369 = vrot.slane %v2368, 2
    %v2370 = vmax.f32 %v2368, %v2369
    %v2371 = vrot.slane %v2370, 1
    %v2372 = vmax.f32 %v2370, %v2371
    %v2373 = vsel %vm1868, %v1761, -inf
    %v2374 = vrot.slane %v2373, 4
    %v2375 = vmax.f32 %v2373, %v2374
    %v2376 = vrot.slane %v2375, 2
    %v2377 = vmax.f32 %v2375, %v2376
    %v2378 = vrot.slane %v2377, 1
    %v2379 = vmax.f32 %v2377, %v2378
    %v2380 = vsel %vm1868, %v1769, -inf
    %v2381 = vrot.slane %v2380, 4
    %v2382 = vmax.f32 %v2380, %v2381
    %v2383 = vrot.slane %v2382, 2
    %v2384 = vmax.f32 %v2382, %v2383
    %v2385 = vrot.slane %v2384, 1
    %v2386 = vmax.f32 %v2384, %v2385
    %v2387 = vsel %vm1868, %v1768, -inf
    %v2388 = vrot.slane %v2387, 4
    %v2389 = vmax.f32 %v2387, %v2388
    %v2390 = vrot.slane %v2389, 2
    %v2391 = vmax.f32 %v2389, %v2390
    %v2392 = vrot.slane %v2391, 1
    %v2393 = vmax.f32 %v2391, %v2392
    %v2394 = vsel %vm1868, %v1770, -inf
    %v2395 = vrot.slane %v2394, 4
    %v2396 = vmax.f32 %v2394, %v2395
    %v2397 = vrot.slane %v2396, 2
    %v2398 = vmax.f32 %v2396, %v2397
    %v2399 = vrot.slane %v2398, 1
    %v2400 = vmax.f32 %v2398, %v2399
    %v2401 = vsel %vm1868, %v1778, -inf
    %v2402 = vrot.slane %v2401, 4
    %v2403 = vmax.f32 %v2401, %v2402
    %v2404 = vrot.slane %v2403, 2
    %v2405 = vmax.f32 %v2403, %v2404
    %v2406 = vrot.slane %v2405, 1
    %v2407 = vmax.f32 %v2405, %v2406
    %v2408 = vsel %vm1868, %v1786, -inf
    %v2409 = vrot.slane %v2408, 4
    %v2410 = vmax.f32 %v2408, %v2409
    %v2411 = vrot.slane %v2410, 2
    %v2412 = vmax.f32 %v2410, %v2411
    %v2413 = vrot.slane %v2412, 1
    %v2414 = vmax.f32 %v2412, %v2413
    %v2415 = vsel %vm1868, %v1785, -inf
    %v2416 = vrot.slane %v2415, 4
    %v2417 = vmax.f32 %v2415, %v2416
    %v2418 = vrot.slane %v2417, 2
    %v2419 = vmax.f32 %v2417, %v2418
    %v2420 = vrot.slane %v2419, 1
    %v2421 = vmax.f32 %v2419, %v2420
    %v2422 = vsel %vm1868, %v1787, -inf
    %v2423 = vrot.slane %v2422, 4
    %v2424 = vmax.f32 %v2422, %v2423
    %v2425 = vrot.slane %v2424, 2
    %v2426 = vmax.f32 %v2424, %v2425
    %v2427 = vrot.slane %v2426, 1
    %v2428 = vmax.f32 %v2426, %v2427
    %2429 = vst.msk [vmem:[#allocation2] sm:$0x3] %vm1868, 0.0
    %2430 = vst.msk [vmem:[#allocation2 + $0x30] sm:$0x3] %vm1868, 0.0
    %2431 = vst.msk [vmem:[#allocation2 + $0x2a] sm:$0x3] %vm1868, 0.0
    %2432 = vst.msk [vmem:[#allocation2 + $0x5a] sm:$0x3] %vm1868, 0.0
    %vm2513 = vcmask 1041409
    %v2514 = vsel %vm2513, %v1882, %v1875
    %vm2515 = vcmask 1042434
    %v2516 = vsel %vm2515, %v1889, %v2514
    %vm2517 = vcmask 1043459
    %v2518 = vsel %vm2517, %v1896, %v2516
    %vm2519 = vcmask 1044484
    %v2520 = vsel %vm2519, %v1903, %v2518
    %vm2521 = vcmask 1045509
    %v2522 = vsel %vm2521, %v1910, %v2520
    %vm2523 = vcmask 1046534
    %v2524 = vsel %vm2523, %v1917, %v2522
    %vm2525 = vcmask 1047559
    %v2526 = vsel %vm2525, %v1924, %v2524
    %v2527 = vsel %vm2513, %v1938, %v1931
    %v2528 = vsel %vm2515, %v1945, %v2527
    %v2529 = vsel %vm2517, %v1952, %v2528
    %v2530 = vsel %vm2519, %v1959, %v2529
    %v2531 = vsel %vm2521, %v1966, %v2530
    %v2532 = vsel %vm2523, %v1973, %v2531
    %v2533 = vsel %vm2525, %v1980, %v2532
    %v2534 = vsel %vm2513, %v1994, %v1987
    %v2535 = vsel %vm2515, %v2001, %v2534
    %v2536 = vsel %vm2517, %v2008, %v2535
    %v2537 = vsel %vm2519, %v2015, %v2536
    %v2538 = vsel %vm2521, %v2022, %v2537
    %v2539 = vsel %vm2523, %v2029, %v2538
    %v2540 = vsel %vm2525, %v2036, %v2539
    %v2541 = vsel %vm2513, %v2050, %v2043
    %v2542 = vsel %vm2515, %v2057, %v2541
    %v2543 = vsel %vm2517, %v2064, %v2542
    %v2544 = vsel %vm2519, %v2071, %v2543
    %v2545 = vsel %vm2521, %v2078, %v2544
    %v2546 = vsel %vm2523, %v2085, %v2545
    %v2547 = vsel %vm2525, %v2092, %v2546
    %v2548 = vsel %vm2513, %v2106, %v2099
    %v2549 = vsel %vm2515, %v2113, %v2548
    %v2550 = vsel %vm2517, %v2120, %v2549
    %v2551 = vsel %vm2519, %v2127, %v2550
    %v2552 = vsel %vm2521, %v2134, %v2551
    %v2553 = vsel %vm2523, %v2141, %v2552
    %v2554 = vsel %vm2525, %v2148, %v2553
    %v2555 = vsel %vm2513, %v2162, %v2155
    %v2556 = vsel %vm2515, %v2169, %v2555
    %v2557 = vsel %vm2517, %v2176, %v2556
    %v2558 = vsel %vm2519, %v2183, %v2557
    %v2559 = vsel %vm2521, %v2190, %v2558
    %v2560 = vsel %vm2523, %v2197, %v2559
    %v2561 = vsel %vm2525, %v2204, %v2560
    %v2562 = vsel %vm2513, %v2218, %v2211
    %v2563 = vsel %vm2515, %v2225, %v2562
    %v2564 = vsel %vm2517, %v2232, %v2563
    %v2565 = vsel %vm2519, %v2239, %v2564
    %v2566 = vsel %vm2521, %v2246, %v2565
    %v2567 = vsel %vm2523, %v2253, %v2566
    %v2568 = vsel %vm2525, %v2260, %v2567
    %v2569 = vsel %vm2513, %v2274, %v2267
    %v2570 = vsel %vm2515, %v2281, %v2569
    %v2571 = vsel %vm2517, %v2288, %v2570
    %v2572 = vsel %vm2519, %v2295, %v2571
    %v2573 = vsel %vm2521, %v2302, %v2572
    %v2574 = vsel %vm2523, %v2309, %v2573
    %v2575 = vsel %vm2525, %v2316, %v2574
    %v2576 = vsel %vm2513, %v2330, %v2323
    %v2577 = vsel %vm2515, %v2337, %v2576
    %v2578 = vsel %vm2517, %v2344, %v2577
    %v2579 = vsel %vm2519, %v2351, %v2578
    %v2580 = vsel %vm2521, %v2358, %v2579
    %v2581 = vsel %vm2523, %v2365, %v2580
    %v2582 = vsel %vm2525, %v2372, %v2581
    %v2583 = vsel %vm2513, %v2386, %v2379
    %v2584 = vsel %vm2515, %v2393, %v2583
    %v2585 = vsel %vm2517, %v2400, %v2584
    %v2586 = vsel %vm2519, %v2407, %v2585
    %v2587 = vsel %vm2521, %v2414, %v2586
    %v2588 = vsel %vm2523, %v2421, %v2587
    %v2589 = vsel %vm2525, %v2428, %v2588
    %vm2600 = vcmask 130048
    %2601 = vst.msk [vmem:[#allocation2 + $0x2] sm:$0xff] %vm2600, %v2526
    %2602 = vst.msk [vmem:[#allocation2 + $0xa] sm:$0xff] %vm2600, %v2533
    %2603 = vst.msk [vmem:[#allocation2 + $0x12] sm:$0xff] %vm2600, %v2540
    %2604 = vst.msk [vmem:[#allocation2 + $0x1a] sm:$0xff] %vm2600, %v2547
    %2605 = vst.msk [vmem:[#allocation2 + $0x22] sm:$0xff] %vm2600, %v2554
    %2606 = vst.msk [vmem:[#allocation2 + $0x32] sm:$0xff] %vm2600, %v2561
    %2607 = vst.msk [vmem:[#allocation2 + $0x3a] sm:$0xff] %vm2600, %v2568
    %2608 = vst.msk [vmem:[#allocation2 + $0x42] sm:$0xff] %vm2600, %v2575
    %2609 = vst.msk [vmem:[#allocation2 + $0x4a] sm:$0xff] %vm2600, %v2582
    %2610 = vst.msk [vmem:[#allocation2 + $0x52] sm:$0xff] %vm2600, %v2589
    %v2611 = vld [vmem:[#allocation2] sm:$0xff]
    %v2612 = vld [vmem:[#allocation2 + $0x8] sm:$0xff]
    %v2613 = vld [vmem:[#allocation2 + $0x10] sm:$0xff]
    %v2614 = vld [vmem:[#allocation2 + $0x18] sm:$0xff]
    %v2615 = vld [vmem:[#allocation2 + $0x20] sm:$0xff]
    %v2616 = vld [vmem:[#allocation2 + $0x28] sm:$0xf]
    %v2617 = vld [vmem:[#allocation2 + $0x30] sm:$0xff]
    %v2618 = vld [vmem:[#allocation2 + $0x38] sm:$0xff]
    %v2619 = vld [vmem:[#allocation2 + $0x40] sm:$0xff]
    %v2620 = vld [vmem:[#allocation2 + $0x48] sm:$0xff]
    %v2621 = vld [vmem:[#allocation2 + $0x50] sm:$0xff]
    %v2622 = vld [vmem:[#allocation2 + $0x58] sm:$0xf]
    %v2623 = vld [vmem:[%s3] sm:$0xff]
    %v2624 = vld [vmem:[%s3 + $0x8] sm:$0xff]
    %v2637 = vrot.slane %v2611, 1
    %v2638 = vrot.slane %v2612, 1
    %v2639 = vsel %vm100, %v2637, %v2638
    %v2640 = vrot.slane %v2613, 1
    %v2641 = vsel %vm100, %v2638, %v2640
    %v2642 = vrot.slane %v2614, 1
    %v2643 = vsel %vm100, %v2640, %v2642
    %v2644 = vrot.slane %v2615, 1
    %v2645 = vsel %vm100, %v2642, %v2644
    %v2646 = vrot.slane %v2616, 1
    %v2647 = vsel %vm100, %v2644, %v2646
    %v2648 = vrot.slane %v2617, 1
    %v2649 = vrot.slane %v2618, 1
    %v2650 = vsel %vm100, %v2648, %v2649
    %v2651 = vrot.slane %v2619, 1
    %v2652 = vsel %vm100, %v2649, %v2651
    %v2653 = vrot.slane %v2620, 1
    %v2654 = vsel %vm100, %v2651, %v2653
    %v2655 = vrot.slane %v2621, 1
    %v2656 = vsel %vm100, %v2653, %v2655
    %v2657 = vrot.slane %v2622, 1
    %v2658 = vsel %vm100, %v2655, %v2657
    %s2659 = scalar_lea.vmem %s3, 16
    %v2660 = vld [vmem:[%s2659] sm:$0xff]
    %v2661 = vld [vmem:[%s2659 + $0x8] sm:$0xff]
    %v2662 = vsel %vm2600, %v2639, 0
    %v2664 = vsel %vm2600, %v2641, 0
    %v2666 = vsel %vm2600, %v2643, 0
    %v2668 = vsel %vm2600, %v2645, 0
    %v2670 = vsel %vm2600, %v2647, 0
    %v2672 = vsel %vm2600, %v2650, 0
    %v2674 = vsel %vm2600, %v2652, 0
    %v2676 = vsel %vm2600, %v2654, 0
    %v2678 = vsel %vm2600, %v2656, 0
    %v2680 = vsel %vm2600, %v2658, 0
    %2682 = vmatprep.subr.mxu0 0.0
    %2683 = vmatpush1.msra.mxu0 %v2660
    %2684 = vmatprep.subr.mxu0 0.0
    %2685 = vmatpush1.msra.mxu0 %v2661
    %2686 = vmatprep.subr.mxu0 0.0
    %2687 = vmatpush1.msra.mxu0 0.0
    %2688 = vmatprep.subr.mxu0 0.0
    %2689 = vmatpush1.msra.mxu0 0.0
    %2690 = vmatprep.subr.mxu0 0.0
    %2691 = vmatpush1.msra.mxu0 0.0
    %2692 = vmatprep.subr.mxu0 0.0
    %2693 = vmatpush1.msra.mxu0 0.0
    %2694 = vmatprep.subr.mxu0 0.0
    %2695 = vmatpush1.msra.mxu0 0.0
    %2696 = vmatprep.subr.mxu0 0.0
    %2697 = vmatpush1.msra.mxu0 0.0
    %2698 = vmatprep.subr.mxu0 0.0
    %2699 = vmatpush1.msra.mxu0 0.0
    %2700 = vmatprep.subr.mxu0 0.0
    %2701 = vmatpush1.msra.mxu0 0.0
    %2702 = vmatprep.subr.mxu0 0.0
    %2703 = vmatpush1.msra.mxu0 0.0
    %2704 = vmatprep.subr.mxu0 0.0
    %2705 = vmatpush1.msra.mxu0 0.0
    %2706 = vmatprep.subr.mxu0 0.0
    %2707 = vmatpush1.msra.mxu0 0.0
    %2708 = vmatprep.subr.mxu0 0.0
    %2709 = vmatpush1.msra.mxu0 0.0
    %2710 = vmatprep.subr.mxu0 0.0
    %2711 = vmatpush1.msra.mxu0 0.0
    %2712 = vmatprep.subr.mxu0 0.0
    %2713 = vmatpush1.msra.mxu0 0.0
    %2714 = vmatprep.subr.mxu0 0.0
    %2715 = vmatpush1.msra.mxu0 0.0
    %2716 = vmatprep.subr.mxu0 0.0
    %2717 = vmatpush1.msra.mxu0 0.0
    %2718 = vmatprep.subr.mxu0 0.0
    %2719 = vmatpush1.msra.mxu0 0.0
    %2720 = vmatprep.subr.mxu0 0.0
    %2721 = vmatpush1.msra.mxu0 0.0
    %2722 = vmatprep.subr.mxu0 0.0
    %2723 = vmatpush1.msra.mxu0 0.0
    %2724 = vmatprep.subr.mxu0 0.0
    %2725 = vmatpush1.msra.mxu0 0.0
    %2726 = vmatprep.subr.mxu0 0.0
    %2727 = vmatpush1.msra.mxu0 0.0
    %2728 = vmatprep.subr.mxu0 0.0
    %2729 = vmatpush1.msra.mxu0 0.0
    %2730 = vmatprep.subr.mxu0 0.0
    %2731 = vmatpush1.msra.mxu0 0.0
    %2732 = vmatprep.subr.mxu0 0.0
    %2733 = vmatpush1.msra.mxu0 0.0
    %2734 = vmatprep.subr.mxu0 0.0
    %2735 = vmatpush1.msra.mxu0 0.0
    %2736 = vmatprep.subr.mxu0 0.0
    %2737 = vmatpush1.msra.mxu0 0.0
    %2738 = vmatprep.subr.mxu0 0.0
    %2739 = vmatpush1.msra.mxu0 0.0
    %2740 = vmatprep.subr.mxu0 0.0
    %2741 = vmatpush1.msra.mxu0 0.0
    %2742 = vmatprep.subr.mxu0 0.0
    %2743 = vmatpush1.msra.mxu0 0.0
    %2744 = vmatprep.subr.mxu0 0.0
    %2745 = vmatpush1.msra.mxu0 0.0
    %2746 = vmatprep.mubr.f32.mxu0 0.0
    %2747 = vmatmul.mubr.f32.gmra.mrb[0].mxu0 %v2662
    %v2748 = vpop.f32.mrb[0].mxu0
    %v2749 = vadd.f32 0.0, %v2748
    %v2750 = vpop.f32.mrb[0].mxu0
    %2751 = vmatprep.mubr.f32.mxu0 0.0
    %2752 = vmatmul.mubr.f32.gmra.mrb[0].mxu0 %v2664
    %v2753 = vpop.f32.mrb[0].mxu0
    %v2754 = vadd.f32 0.0, %v2753
    %v2755 = vpop.f32.mrb[0].mxu0
    %2756 = vmatprep.mubr.f32.mxu0 0.0
    %2757 = vmatmul.mubr.f32.gmra.mrb[0].mxu0 %v2666
    %v2758 = vpop.f32.mrb[0].mxu0
    %v2759 = vadd.f32 0.0, %v2758
    %v2760 = vpop.f32.mrb[0].mxu0
    %2761 = vmatprep.mubr.f32.mxu0 0.0
    %2762 = vmatmul.mubr.f32.gmra.mrb[0].mxu0 %v2668
    %v2763 = vpop.f32.mrb[0].mxu0
    %v2764 = vadd.f32 0.0, %v2763
    %v2765 = vpop.f32.mrb[0].mxu0
    %2766 = vmatprep.mubr.f32.mxu0 0.0
    %2767 = vmatmul.mubr.f32.gmra.mrb[0].mxu0 %v2670
    %v2768 = vpop.f32.mrb[0].mxu0
    %v2769 = vadd.f32 0.0, %v2768
    %v2770 = vpop.f32.mrb[0].mxu0
    %2771 = vmatprep.mubr.f32.mxu0 0.0
    %2772 = vmatmul.mubr.f32.gmra.mrb[0].mxu0 %v2672
    %v2773 = vpop.f32.mrb[0].mxu0
    %v2774 = vadd.f32 0.0, %v2773
    %v2775 = vpop.f32.mrb[0].mxu0
    %2776 = vmatprep.mubr.f32.mxu0 0.0
    %2777 = vmatmul.mubr.f32.gmra.mrb[0].mxu0 %v2674
    %v2778 = vpop.f32.mrb[0].mxu0
    %v2779 = vadd.f32 0.0, %v2778
    %v2780 = vpop.f32.mrb[0].mxu0
    %2781 = vmatprep.mubr.f32.mxu0 0.0
    %2782 = vmatmul.mubr.f32.gmra.mrb[0].mxu0 %v2676
    %v2783 = vpop.f32.mrb[0].mxu0
    %v2784 = vadd.f32 0.0, %v2783
    %v2785 = vpop.f32.mrb[0].mxu0
    %2786 = vmatprep.mubr.f32.mxu0 0.0
    %2787 = vmatmul.mubr.f32.gmra.mrb[0].mxu0 %v2678
    %v2788 = vpop.f32.mrb[0].mxu0
    %v2789 = vadd.f32 0.0, %v2788
    %v2790 = vpop.f32.mrb[0].mxu0
    %2791 = vmatprep.mubr.f32.mxu0 0.0
    %2792 = vmatmul.mubr.f32.gmra.mrb[0].mxu0 %v2680
    %v2793 = vpop.f32.mrb[0].mxu0
    %v2794 = vadd.f32 0.0, %v2793
    %v2795 = vpop.f32.mrb[0].mxu0
    %2796 = vdwg.mxu0
    %v2797 = vsel %vm2600, %v2611, 0
    %v2799 = vsel %vm2600, %v2612, 0
    %v2801 = vsel %vm2600, %v2613, 0
    %v2803 = vsel %vm2600, %v2614, 0
    %v2805 = vsel %vm2600, %v2615, 0
    %v2807 = vsel %vm2600, %v2617, 0
    %v2809 = vsel %vm2600, %v2618, 0
    %v2811 = vsel %vm2600, %v2619, 0
    %v2813 = vsel %vm2600, %v2620, 0
    %v2815 = vsel %vm2600, %v2621, 0
    %2817 = vmatprep.subr.mxu0 0.0
    %2818 = vmatpush1.msra.mxu0 %v2623
    %2819 = vmatprep.subr.mxu0 0.0
    %2820 = vmatpush1.msra.mxu0 %v2624
    %2821 = vmatprep.subr.mxu0 0.0
    %2822 = vmatpush1.msra.mxu0 0.0
    %2823 = vmatprep.subr.mxu0 0.0
    %2824 = vmatpush1.msra.mxu0 0.0
    %2825 = vmatprep.subr.mxu0 0.0
    %2826 = vmatpush1.msra.mxu0 0.0
    %2827 = vmatprep.subr.mxu0 0.0
    %2828 = vmatpush1.msra.mxu0 0.0
    %2829 = vmatprep.subr.mxu0 0.0
    %2830 = vmatpush1.msra.mxu0 0.0
    %2831 = vmatprep.subr.mxu0 0.0
    %2832 = vmatpush1.msra.mxu0 0.0
    %2833 = vmatprep.subr.mxu0 0.0
    %2834 = vmatpush1.msra.mxu0 0.0
    %2835 = vmatprep.subr.mxu0 0.0
    %2836 = vmatpush1.msra.mxu0 0.0
    %2837 = vmatprep.subr.mxu0 0.0
    %2838 = vmatpush1.msra.mxu0 0.0
    %2839 = vmatprep.subr.mxu0 0.0
    %2840 = vmatpush1.msra.mxu0 0.0
    %2841 = vmatprep.subr.mxu0 0.0
    %2842 = vmatpush1.msra.mxu0 0.0
    %2843 = vmatprep.subr.mxu0 0.0
    %2844 = vmatpush1.msra.mxu0 0.0
    %2845 = vmatprep.subr.mxu0 0.0
    %2846 = vmatpush1.msra.mxu0 0.0
    %2847 = vmatprep.subr.mxu0 0.0
    %2848 = vmatpush1.msra.mxu0 0.0
    %2849 = vmatprep.subr.mxu0 0.0
    %2850 = vmatpush1.msra.mxu0 0.0
    %2851 = vmatprep.subr.mxu0 0.0
    %2852 = vmatpush1.msra.mxu0 0.0
    %2853 = vmatprep.subr.mxu0 0.0
    %2854 = vmatpush1.msra.mxu0 0.0
    %2855 = vmatprep.subr.mxu0 0.0
    %2856 = vmatpush1.msra.mxu0 0.0
    %2857 = vmatprep.subr.mxu0 0.0
    %2858 = vmatpush1.msra.mxu0 0.0
    %2859 = vmatprep.subr.mxu0 0.0
    %2860 = vmatpush1.msra.mxu0 0.0
    %2861 = vmatprep.subr.mxu0 0.0
    %2862 = vmatpush1.msra.mxu0 0.0
    %2863 = vmatprep.subr.mxu0 0.0
    %2864 = vmatpush1.msra.mxu0 0.0
    %2865 = vmatprep.subr.mxu0 0.0
    %2866 = vmatpush1.msra.mxu0 0.0
    %2867 = vmatprep.subr.mxu0 0.0
    %2868 = vmatpush1.msra.mxu0 0.0
    %2869 = vmatprep.subr.mxu0 0.0
    %2870 = vmatpush1.msra.mxu0 0.0
    %2871 = vmatprep.subr.mxu0 0.0
    %2872 = vmatpush1.msra.mxu0 0.0
    %2873 = vmatprep.subr.mxu0 0.0
    %2874 = vmatpush1.msra.mxu0 0.0
    %2875 = vmatprep.subr.mxu0 0.0
    %2876 = vmatpush1.msra.mxu0 0.0
    %2877 = vmatprep.subr.mxu0 0.0
    %2878 = vmatpush1.msra.mxu0 0.0
    %2879 = vmatprep.subr.mxu0 0.0
    %2880 = vmatpush1.msra.mxu0 0.0
    %2881 = vmatprep.mubr.f32.mxu0 0.0
    %2882 = vmatmul.mubr.f32.gmra.mrb[0].mxu0 %v2797
    %v2883 = vpop.f32.mrb[0].mxu0
    %v2884 = vadd.f32 %v2749, %v2883
    %v2885 = vpop.f32.mrb[0].mxu0
    %2886 = vmatprep.mubr.f32.mxu0 0.0
    %2887 = vmatmul.mubr.f32.gmra.mrb[0].mxu0 %v2799
    %v2888 = vpop.f32.mrb[0].mxu0
    %v2889 = vadd.f32 %v2754, %v2888
    %v2890 = vpop.f32.mrb[0].mxu0
    %2891 = vmatprep.mubr.f32.mxu0 0.0
    %2892 = vmatmul.mubr.f32.gmra.mrb[0].mxu0 %v2801
    %v2893 = vpop.f32.mrb[0].mxu0
    %v2894 = vadd.f32 %v2759, %v2893
    %v2895 = vpop.f32.mrb[0].mxu0
    %2896 = vmatprep.mubr.f32.mxu0 0.0
    %2897 = vmatmul.mubr.f32.gmra.mrb[0].mxu0 %v2803
    %v2898 = vpop.f32.mrb[0].mxu0
    %v2899 = vadd.f32 %v2764, %v2898
    %v2900 = vpop.f32.mrb[0].mxu0
    %2901 = vmatprep.mubr.f32.mxu0 0.0
    %2902 = vmatmul.mubr.f32.gmra.mrb[0].mxu0 %v2805
    %v2903 = vpop.f32.mrb[0].mxu0
    %v2904 = vadd.f32 %v2769, %v2903
    %v2905 = vpop.f32.mrb[0].mxu0
    %2906 = vmatprep.mubr.f32.mxu0 0.0
    %2907 = vmatmul.mubr.f32.gmra.mrb[0].mxu0 %v2807
    %v2908 = vpop.f32.mrb[0].mxu0
    %v2909 = vadd.f32 %v2774, %v2908
    %v2910 = vpop.f32.mrb[0].mxu0
    %2911 = vmatprep.mubr.f32.mxu0 0.0
    %2912 = vmatmul.mubr.f32.gmra.mrb[0].mxu0 %v2809
    %v2913 = vpop.f32.mrb[0].mxu0
    %v2914 = vadd.f32 %v2779, %v2913
    %v2915 = vpop.f32.mrb[0].mxu0
    %2916 = vmatprep.mubr.f32.mxu0 0.0
    %2917 = vmatmul.mubr.f32.gmra.mrb[0].mxu0 %v2811
    %v2918 = vpop.f32.mrb[0].mxu0
    %v2919 = vadd.f32 %v2784, %v2918
    %v2920 = vpop.f32.mrb[0].mxu0
    %2921 = vmatprep.mubr.f32.mxu0 0.0
    %2922 = vmatmul.mubr.f32.gmra.mrb[0].mxu0 %v2813
    %v2923 = vpop.f32.mrb[0].mxu0
    %v2924 = vadd.f32 %v2789, %v2923
    %v2925 = vpop.f32.mrb[0].mxu0
    %2926 = vmatprep.mubr.f32.mxu0 0.0
    %2927 = vmatmul.mubr.f32.gmra.mrb[0].mxu0 %v2815
    %v2928 = vpop.f32.mrb[0].mxu0
    %v2929 = vadd.f32 %v2794, %v2928
    %v2930 = vpop.f32.mrb[0].mxu0
    %2931 = vdwg.mxu0
    %v2932 = vrot.slane %v2611, 2
    %v2933 = vrot.slane %v2612, 2
    %v2934 = vsel %vm563, %v2932, %v2933
    %v2935 = vrot.slane %v2613, 2
    %v2936 = vsel %vm563, %v2933, %v2935
    %v2937 = vrot.slane %v2614, 2
    %v2938 = vsel %vm563, %v2935, %v2937
    %v2939 = vrot.slane %v2615, 2
    %v2940 = vsel %vm563, %v2937, %v2939
    %v2941 = vrot.slane %v2616, 2
    %v2942 = vsel %vm563, %v2939, %v2941
    %v2943 = vrot.slane %v2617, 2
    %v2944 = vrot.slane %v2618, 2
    %v2945 = vsel %vm563, %v2943, %v2944
    %v2946 = vrot.slane %v2619, 2
    %v2947 = vsel %vm563, %v2944, %v2946
    %v2948 = vrot.slane %v2620, 2
    %v2949 = vsel %vm563, %v2946, %v2948
    %v2950 = vrot.slane %v2621, 2
    %v2951 = vsel %vm563, %v2948, %v2950
    %v2952 = vrot.slane %v2622, 2
    %v2953 = vsel %vm563, %v2950, %v2952
    %s2954 = scalar_lea.vmem %s3, 32
    %v2955 = vld [vmem:[%s2954] sm:$0xff]
    %v2956 = vld [vmem:[%s2954 + $0x8] sm:$0xff]
    %v2957 = vsel %vm2600, %v2934, 0
    %v2959 = vsel %vm2600, %v2936, 0
    %v2961 = vsel %vm2600, %v2938, 0
    %v2963 = vsel %vm2600, %v2940, 0
    %v2965 = vsel %vm2600, %v2942, 0
    %v2967 = vsel %vm2600, %v2945, 0
    %v2969 = vsel %vm2600, %v2947, 0
    %v2971 = vsel %vm2600, %v2949, 0
    %v2973 = vsel %vm2600, %v2951, 0
    %v2975 = vsel %vm2600, %v2953, 0
    %2977 = vmatprep.subr.mxu0 0.0
    %2978 = vmatpush1.msra.mxu0 %v2955
    %2979 = vmatprep.subr.mxu0 0.0
    %2980 = vmatpush1.msra.mxu0 %v2956
    %2981 = vmatprep.subr.mxu0 0.0
    %2982 = vmatpush1.msra.mxu0 0.0
    %2983 = vmatprep.subr.mxu0 0.0
    %2984 = vmatpush1.msra.mxu0 0.0
    %2985 = vmatprep.subr.mxu0 0.0
    %2986 = vmatpush1.msra.mxu0 0.0
    %2987 = vmatprep.subr.mxu0 0.0
    %2988 = vmatpush1.msra.mxu0 0.0
    %2989 = vmatprep.subr.mxu0 0.0
    %2990 = vmatpush1.msra.mxu0 0.0
    %2991 = vmatprep.subr.mxu0 0.0
    %2992 = vmatpush1.msra.mxu0 0.0
    %2993 = vmatprep.subr.mxu0 0.0
    %2994 = vmatpush1.msra.mxu0 0.0
    %2995 = vmatprep.subr.mxu0 0.0
    %2996 = vmatpush1.msra.mxu0 0.0
    %2997 = vmatprep.subr.mxu0 0.0
    %2998 = vmatpush1.msra.mxu0 0.0
    %2999 = vmatprep.subr.mxu0 0.0
    %3000 = vmatpush1.msra.mxu0 0.0
    %3001 = vmatprep.subr.mxu0 0.0
    %3002 = vmatpush1.msra.mxu0 0.0
    %3003 = vmatprep.subr.mxu0 0.0
    %3004 = vmatpush1.msra.mxu0 0.0
    %3005 = vmatprep.subr.mxu0 0.0
    %3006 = vmatpush1.msra.mxu0 0.0
    %3007 = vmatprep.subr.mxu0 0.0
    %3008 = vmatpush1.msra.mxu0 0.0
    %3009 = vmatprep.subr.mxu0 0.0
    %3010 = vmatpush1.msra.mxu0 0.0
    %3011 = vmatprep.subr.mxu0 0.0
    %3012 = vmatpush1.msra.mxu0 0.0
    %3013 = vmatprep.subr.mxu0 0.0
    %3014 = vmatpush1.msra.mxu0 0.0
    %3015 = vmatprep.subr.mxu0 0.0
    %3016 = vmatpush1.msra.mxu0 0.0
    %3017 = vmatprep.subr.mxu0 0.0
    %3018 = vmatpush1.msra.mxu0 0.0
    %3019 = vmatprep.subr.mxu0 0.0
    %3020 = vmatpush1.msra.mxu0 0.0
    %3021 = vmatprep.subr.mxu0 0.0
    %3022 = vmatpush1.msra.mxu0 0.0
    %3023 = vmatprep.subr.mxu0 0.0
    %3024 = vmatpush1.msra.mxu0 0.0
    %3025 = vmatprep.subr.mxu0 0.0
    %3026 = vmatpush1.msra.mxu0 0.0
    %3027 = vmatprep.subr.mxu0 0.0
    %3028 = vmatpush1.msra.mxu0 0.0
    %3029 = vmatprep.subr.mxu0 0.0
    %3030 = vmatpush1.msra.mxu0 0.0
    %3031 = vmatprep.subr.mxu0 0.0
    %3032 = vmatpush1.msra.mxu0 0.0
    %3033 = vmatprep.subr.mxu0 0.0
    %3034 = vmatpush1.msra.mxu0 0.0
    %3035 = vmatprep.subr.mxu0 0.0
    %3036 = vmatpush1.msra.mxu0 0.0
    %3037 = vmatprep.subr.mxu0 0.0
    %3038 = vmatpush1.msra.mxu0 0.0
    %3039 = vmatprep.subr.mxu0 0.0
    %3040 = vmatpush1.msra.mxu0 0.0
    %3041 = vmatprep.mubr.f32.mxu0 0.0
    %3042 = vmatmul.mubr.f32.gmra.mrb[0].mxu0 %v2957
    %v3043 = vpop.f32.mrb[0].mxu0
    %v3044 = vadd.f32 0.0, %v3043
    %v3045 = vpop.f32.mrb[0].mxu0
    %3046 = vmatprep.mubr.f32.mxu0 0.0
    %3047 = vmatmul.mubr.f32.gmra.mrb[0].mxu0 %v2959
    %v3048 = vpop.f32.mrb[0].mxu0
    %v3049 = vadd.f32 0.0, %v3048
    %v3050 = vpop.f32.mrb[0].mxu0
    %3051 = vmatprep.mubr.f32.mxu0 0.0
    %3052 = vmatmul.mubr.f32.gmra.mrb[0].mxu0 %v2961
    %v3053 = vpop.f32.mrb[0].mxu0
    %v3054 = vadd.f32 0.0, %v3053
    %v3055 = vpop.f32.mrb[0].mxu0
    %3056 = vmatprep.mubr.f32.mxu0 0.0
    %3057 = vmatmul.mubr.f32.gmra.mrb[0].mxu0 %v2963
    %v3058 = vpop.f32.mrb[0].mxu0
    %v3059 = vadd.f32 0.0, %v3058
    %v3060 = vpop.f32.mrb[0].mxu0
    %3061 = vmatprep.mubr.f32.mxu0 0.0
    %3062 = vmatmul.mubr.f32.gmra.mrb[0].mxu0 %v2965
    %v3063 = vpop.f32.mrb[0].mxu0
    %v3064 = vadd.f32 0.0, %v3063
    %v3065 = vpop.f32.mrb[0].mxu0
    %3066 = vmatprep.mubr.f32.mxu0 0.0
    %3067 = vmatmul.mubr.f32.gmra.mrb[0].mxu0 %v2967
    %v3068 = vpop.f32.mrb[0].mxu0
    %v3069 = vadd.f32 0.0, %v3068
    %v3070 = vpop.f32.mrb[0].mxu0
    %3071 = vmatprep.mubr.f32.mxu0 0.0
    %3072 = vmatmul.mubr.f32.gmra.mrb[0].mxu0 %v2969
    %v3073 = vpop.f32.mrb[0].mxu0
    %v3074 = vadd.f32 0.0, %v3073
    %v3075 = vpop.f32.mrb[0].mxu0
    %3076 = vmatprep.mubr.f32.mxu0 0.0
    %3077 = vmatmul.mubr.f32.gmra.mrb[0].mxu0 %v2971
    %v3078 = vpop.f32.mrb[0].mxu0
    %v3079 = vadd.f32 0.0, %v3078
    %v3080 = vpop.f32.mrb[0].mxu0
    %3081 = vmatprep.mubr.f32.mxu0 0.0
    %3082 = vmatmul.mubr.f32.gmra.mrb[0].mxu0 %v2973
    %v3083 = vpop.f32.mrb[0].mxu0
    %v3084 = vadd.f32 0.0, %v3083
    %v3085 = vpop.f32.mrb[0].mxu0
    %3086 = vmatprep.mubr.f32.mxu0 0.0
    %3087 = vmatmul.mubr.f32.gmra.mrb[0].mxu0 %v2975
    %v3088 = vpop.f32.mrb[0].mxu0
    %v3089 = vadd.f32 0.0, %v3088
    %v3090 = vpop.f32.mrb[0].mxu0
    %3091 = vdwg.mxu0
    %v3092 = vadd.f32 %v2884, %v3044
    %v3093 = vadd.f32 %v2889, %v3049
    %v3094 = vadd.f32 %v2894, %v3054
    %v3095 = vadd.f32 %v2899, %v3059
    %v3096 = vadd.f32 %v2904, %v3064
    %v3097 = vadd.f32 %v2909, %v3069
    %v3098 = vadd.f32 %v2914, %v3074
    %v3099 = vadd.f32 %v2919, %v3079
    %v3100 = vadd.f32 %v2924, %v3084
    %v3101 = vadd.f32 %v2929, %v3089
    %v3102 = vrot.slane %v2611, 3
    %v3103 = vrot.slane %v2612, 3
    %v3104 = vsel %vm836, %v3102, %v3103
    %v3105 = vrot.slane %v2613, 3
    %v3106 = vsel %vm836, %v3103, %v3105
    %v3107 = vrot.slane %v2614, 3
    %v3108 = vsel %vm836, %v3105, %v3107
    %v3109 = vrot.slane %v2615, 3
    %v3110 = vsel %vm836, %v3107, %v3109
    %v3111 = vrot.slane %v2616, 3
    %v3112 = vsel %vm836, %v3109, %v3111
    %v3113 = vrot.slane %v2617, 3
    %v3114 = vrot.slane %v2618, 3
    %v3115 = vsel %vm836, %v3113, %v3114
    %v3116 = vrot.slane %v2619, 3
    %v3117 = vsel %vm836, %v3114, %v3116
    %v3118 = vrot.slane %v2620, 3
    %v3119 = vsel %vm836, %v3116, %v3118
    %v3120 = vrot.slane %v2621, 3
    %v3121 = vsel %vm836, %v3118, %v3120
    %v3122 = vrot.slane %v2622, 3
    %v3123 = vsel %vm836, %v3120, %v3122
    %s3124 = scalar_lea.vmem %s3, 48
    %v3125 = vld [vmem:[%s3124] sm:$0xff]
    %v3126 = vld [vmem:[%s3124 + $0x8] sm:$0xff]
    %v3127 = vsel %vm2600, %v3104, 0
    %v3129 = vsel %vm2600, %v3106, 0
    %v3131 = vsel %vm2600, %v3108, 0
    %v3133 = vsel %vm2600, %v3110, 0
    %v3135 = vsel %vm2600, %v3112, 0
    %v3137 = vsel %vm2600, %v3115, 0
    %v3139 = vsel %vm2600, %v3117, 0
    %v3141 = vsel %vm2600, %v3119, 0
    %v3143 = vsel %vm2600, %v3121, 0
    %v3145 = vsel %vm2600, %v3123, 0
    %3147 = vmatprep.subr.mxu0 0.0
    %3148 = vmatpush1.msra.mxu0 %v3125
    %3149 = vmatprep.subr.mxu0 0.0
    %3150 = vmatpush1.msra.mxu0 %v3126
    %3151 = vmatprep.subr.mxu0 0.0
    %3152 = vmatpush1.msra.mxu0 0.0
    %3153 = vmatprep.subr.mxu0 0.0
    %3154 = vmatpush1.msra.mxu0 0.0
    %3155 = vmatprep.subr.mxu0 0.0
    %3156 = vmatpush1.msra.mxu0 0.0
    %3157 = vmatprep.subr.mxu0 0.0
    %3158 = vmatpush1.msra.mxu0 0.0
    %3159 = vmatprep.subr.mxu0 0.0
    %3160 = vmatpush1.msra.mxu0 0.0
    %3161 = vmatprep.subr.mxu0 0.0
    %3162 = vmatpush1.msra.mxu0 0.0
    %3163 = vmatprep.subr.mxu0 0.0
    %3164 = vmatpush1.msra.mxu0 0.0
    %3165 = vmatprep.subr.mxu0 0.0
    %3166 = vmatpush1.msra.mxu0 0.0
    %3167 = vmatprep.subr.mxu0 0.0
    %3168 = vmatpush1.msra.mxu0 0.0
    %3169 = vmatprep.subr.mxu0 0.0
    %3170 = vmatpush1.msra.mxu0 0.0
    %3171 = vmatprep.subr.mxu0 0.0
    %3172 = vmatpush1.msra.mxu0 0.0
    %3173 = vmatprep.subr.mxu0 0.0
    %3174 = vmatpush1.msra.mxu0 0.0
    %3175 = vmatprep.subr.mxu0 0.0
    %3176 = vmatpush1.msra.mxu0 0.0
    %3177 = vmatprep.subr.mxu0 0.0
    %3178 = vmatpush1.msra.mxu0 0.0
    %3179 = vmatprep.subr.mxu0 0.0
    %3180 = vmatpush1.msra.mxu0 0.0
    %3181 = vmatprep.subr.mxu0 0.0
    %3182 = vmatpush1.msra.mxu0 0.0
    %3183 = vmatprep.subr.mxu0 0.0
    %3184 = vmatpush1.msra.mxu0 0.0
    %3185 = vmatprep.subr.mxu0 0.0
    %3186 = vmatpush1.msra.mxu0 0.0
    %3187 = vmatprep.subr.mxu0 0.0
    %3188 = vmatpush1.msra.mxu0 0.0
    %3189 = vmatprep.subr.mxu0 0.0
    %3190 = vmatpush1.msra.mxu0 0.0
    %3191 = vmatprep.subr.mxu0 0.0
    %3192 = vmatpush1.msra.mxu0 0.0
    %3193 = vmatprep.subr.mxu0 0.0
    %3194 = vmatpush1.msra.mxu0 0.0
    %3195 = vmatprep.subr.mxu0 0.0
    %3196 = vmatpush1.msra.mxu0 0.0
    %3197 = vmatprep.subr.mxu0 0.0
    %3198 = vmatpush1.msra.mxu0 0.0
    %3199 = vmatprep.subr.mxu0 0.0
    %3200 = vmatpush1.msra.mxu0 0.0
    %3201 = vmatprep.subr.mxu0 0.0
    %3202 = vmatpush1.msra.mxu0 0.0
    %3203 = vmatprep.subr.mxu0 0.0
    %3204 = vmatpush1.msra.mxu0 0.0
    %3205 = vmatprep.subr.mxu0 0.0
    %3206 = vmatpush1.msra.mxu0 0.0
    %3207 = vmatprep.subr.mxu0 0.0
    %3208 = vmatpush1.msra.mxu0 0.0
    %3209 = vmatprep.subr.mxu0 0.0
    %3210 = vmatpush1.msra.mxu0 0.0
    %3211 = vmatprep.mubr.f32.mxu0 0.0
    %3212 = vmatmul.mubr.f32.gmra.mrb[0].mxu0 %v3127
    %v3213 = vpop.f32.mrb[0].mxu0
    %v3214 = vadd.f32 0.0, %v3213
    %v3215 = vpop.f32.mrb[0].mxu0
    %3216 = vmatprep.mubr.f32.mxu0 0.0
    %3217 = vmatmul.mubr.f32.gmra.mrb[0].mxu0 %v3129
    %v3218 = vpop.f32.mrb[0].mxu0
    %v3219 = vadd.f32 0.0, %v3218
    %v3220 = vpop.f32.mrb[0].mxu0
    %3221 = vmatprep.mubr.f32.mxu0 0.0
    %3222 = vmatmul.mubr.f32.gmra.mrb[0].mxu0 %v3131
    %v3223 = vpop.f32.mrb[0].mxu0
    %v3224 = vadd.f32 0.0, %v3223
    %v3225 = vpop.f32.mrb[0].mxu0
    %3226 = vmatprep.mubr.f32.mxu0 0.0
    %3227 = vmatmul.mubr.f32.gmra.mrb[0].mxu0 %v3133
    %v3228 = vpop.f32.mrb[0].mxu0
    %v3229 = vadd.f32 0.0, %v3228
    %v3230 = vpop.f32.mrb[0].mxu0
    %3231 = vmatprep.mubr.f32.mxu0 0.0
    %3232 = vmatmul.mubr.f32.gmra.mrb[0].mxu0 %v3135
    %v3233 = vpop.f32.mrb[0].mxu0
    %v3234 = vadd.f32 0.0, %v3233
    %v3235 = vpop.f32.mrb[0].mxu0
    %3236 = vmatprep.mubr.f32.mxu0 0.0
    %3237 = vmatmul.mubr.f32.gmra.mrb[0].mxu0 %v3137
    %v3238 = vpop.f32.mrb[0].mxu0
    %v3239 = vadd.f32 0.0, %v3238
    %v3240 = vpop.f32.mrb[0].mxu0
    %3241 = vmatprep.mubr.f32.mxu0 0.0
    %3242 = vmatmul.mubr.f32.gmra.mrb[0].mxu0 %v3139
    %v3243 = vpop.f32.mrb[0].mxu0
    %v3244 = vadd.f32 0.0, %v3243
    %v3245 = vpop.f32.mrb[0].mxu0
    %3246 = vmatprep.mubr.f32.mxu0 0.0
    %3247 = vmatmul.mubr.f32.gmra.mrb[0].mxu0 %v3141
    %v3248 = vpop.f32.mrb[0].mxu0
    %v3249 = vadd.f32 0.0, %v3248
    %v3250 = vpop.f32.mrb[0].mxu0
    %3251 = vmatprep.mubr.f32.mxu0 0.0
    %3252 = vmatmul.mubr.f32.gmra.mrb[0].mxu0 %v3143
    %v3253 = vpop.f32.mrb[0].mxu0
    %v3254 = vadd.f32 0.0, %v3253
    %v3255 = vpop.f32.mrb[0].mxu0
    %3256 = vmatprep.mubr.f32.mxu0 0.0
    %3257 = vmatmul.mubr.f32.gmra.mrb[0].mxu0 %v3145
    %v3258 = vpop.f32.mrb[0].mxu0
    %v3259 = vadd.f32 0.0, %v3258
    %v3260 = vpop.f32.mrb[0].mxu0
    %3261 = vdwg.mxu0
    %v3262 = vadd.f32 %v3092, %v3214
    %v3263 = vadd.f32 %v3093, %v3219
    %v3264 = vadd.f32 %v3094, %v3224
    %v3265 = vadd.f32 %v3095, %v3229
    %v3266 = vadd.f32 %v3096, %v3234
    %v3267 = vadd.f32 %v3097, %v3239
    %v3268 = vadd.f32 %v3098, %v3244
    %v3269 = vadd.f32 %v3099, %v3249
    %v3270 = vadd.f32 %v3100, %v3254
    %v3271 = vadd.f32 %v3101, %v3259
    %v3272 = vrot.slane %v2611, 4
    %v3273 = vrot.slane %v2612, 4
    %v3274 = vsel %vm186, %v3272, %v3273
    %v3275 = vrot.slane %v2613, 4
    %v3276 = vsel %vm186, %v3273, %v3275
    %v3277 = vrot.slane %v2614, 4
    %v3278 = vsel %vm186, %v3275, %v3277
    %v3279 = vrot.slane %v2615, 4
    %v3280 = vsel %vm186, %v3277, %v3279
    %v3281 = vrot.slane %v2616, 4
    %v3282 = vsel %vm186, %v3279, %v3281
    %v3283 = vrot.slane %v2617, 4
    %v3284 = vrot.slane %v2618, 4
    %v3285 = vsel %vm186, %v3283, %v3284
    %v3286 = vrot.slane %v2619, 4
    %v3287 = vsel %vm186, %v3284, %v3286
    %v3288 = vrot.slane %v2620, 4
    %v3289 = vsel %vm186, %v3286, %v3288
    %v3290 = vrot.slane %v2621, 4
    %v3291 = vsel %vm186, %v3288, %v3290
    %v3292 = vrot.slane %v2622, 4
    %v3293 = vsel %vm186, %v3290, %v3292
    %s3294 = scalar_lea.vmem %s3, 64
    %v3295 = vld [vmem:[%s3294] sm:$0xff]
    %v3296 = vld [vmem:[%s3294 + $0x8] sm:$0xff]
    %v3297 = vsel %vm2600, %v3274, 0
    %v3299 = vsel %vm2600, %v3276, 0
    %v3301 = vsel %vm2600, %v3278, 0
    %v3303 = vsel %vm2600, %v3280, 0
    %v3305 = vsel %vm2600, %v3282, 0
    %v3307 = vsel %vm2600, %v3285, 0
    %v3309 = vsel %vm2600, %v3287, 0
    %v3311 = vsel %vm2600, %v3289, 0
    %v3313 = vsel %vm2600, %v3291, 0
    %v3315 = vsel %vm2600, %v3293, 0
    %3317 = vmatprep.subr.mxu0 0.0
    %3318 = vmatpush1.msra.mxu0 %v3295
    %3319 = vmatprep.subr.mxu0 0.0
    %3320 = vmatpush1.msra.mxu0 %v3296
    %3321 = vmatprep.subr.mxu0 0.0
    %3322 = vmatpush1.msra.mxu0 0.0
    %3323 = vmatprep.subr.mxu0 0.0
    %3324 = vmatpush1.msra.mxu0 0.0
    %3325 = vmatprep.subr.mxu0 0.0
    %3326 = vmatpush1.msra.mxu0 0.0
    %3327 = vmatprep.subr.mxu0 0.0
    %3328 = vmatpush1.msra.mxu0 0.0
    %3329 = vmatprep.subr.mxu0 0.0
    %3330 = vmatpush1.msra.mxu0 0.0
    %3331 = vmatprep.subr.mxu0 0.0
    %3332 = vmatpush1.msra.mxu0 0.0
    %3333 = vmatprep.subr.mxu0 0.0
    %3334 = vmatpush1.msra.mxu0 0.0
    %3335 = vmatprep.subr.mxu0 0.0
    %3336 = vmatpush1.msra.mxu0 0.0
    %3337 = vmatprep.subr.mxu0 0.0
    %3338 = vmatpush1.msra.mxu0 0.0
    %3339 = vmatprep.subr.mxu0 0.0
    %3340 = vmatpush1.msra.mxu0 0.0
    %3341 = vmatprep.subr.mxu0 0.0
    %3342 = vmatpush1.msra.mxu0 0.0
    %3343 = vmatprep.subr.mxu0 0.0
    %3344 = vmatpush1.msra.mxu0 0.0
    %3345 = vmatprep.subr.mxu0 0.0
    %3346 = vmatpush1.msra.mxu0 0.0
    %3347 = vmatprep.subr.mxu0 0.0
    %3348 = vmatpush1.msra.mxu0 0.0
    %3349 = vmatprep.subr.mxu0 0.0
    %3350 = vmatpush1.msra.mxu0 0.0
    %3351 = vmatprep.subr.mxu0 0.0
    %3352 = vmatpush1.msra.mxu0 0.0
    %3353 = vmatprep.subr.mxu0 0.0
    %3354 = vmatpush1.msra.mxu0 0.0
    %3355 = vmatprep.subr.mxu0 0.0
    %3356 = vmatpush1.msra.mxu0 0.0
    %3357 = vmatprep.subr.mxu0 0.0
    %3358 = vmatpush1.msra.mxu0 0.0
    %3359 = vmatprep.subr.mxu0 0.0
    %3360 = vmatpush1.msra.mxu0 0.0
    %3361 = vmatprep.subr.mxu0 0.0
    %3362 = vmatpush1.msra.mxu0 0.0
    %3363 = vmatprep.subr.mxu0 0.0
    %3364 = vmatpush1.msra.mxu0 0.0
    %3365 = vmatprep.subr.mxu0 0.0
    %3366 = vmatpush1.msra.mxu0 0.0
    %3367 = vmatprep.subr.mxu0 0.0
    %3368 = vmatpush1.msra.mxu0 0.0
    %3369 = vmatprep.subr.mxu0 0.0
    %3370 = vmatpush1.msra.mxu0 0.0
    %3371 = vmatprep.subr.mxu0 0.0
    %3372 = vmatpush1.msra.mxu0 0.0
    %3373 = vmatprep.subr.mxu0 0.0
    %3374 = vmatpush1.msra.mxu0 0.0
    %3375 = vmatprep.subr.mxu0 0.0
    %3376 = vmatpush1.msra.mxu0 0.0
    %3377 = vmatprep.subr.mxu0 0.0
    %3378 = vmatpush1.msra.mxu0 0.0
    %3379 = vmatprep.subr.mxu0 0.0
    %3380 = vmatpush1.msra.mxu0 0.0
    %3381 = vmatprep.mubr.f32.mxu0 0.0
    %3382 = vmatmul.mubr.f32.gmra.mrb[0].mxu0 %v3297
    %v3383 = vpop.f32.mrb[0].mxu0
    %v3384 = vadd.f32 0.0, %v3383
    %v3385 = vpop.f32.mrb[0].mxu0
    %3386 = vmatprep.mubr.f32.mxu0 0.0
    %3387 = vmatmul.mubr.f32.gmra.mrb[0].mxu0 %v3299
    %v3388 = vpop.f32.mrb[0].mxu0
    %v3389 = vadd.f32 0.0, %v3388
    %v3390 = vpop.f32.mrb[0].mxu0
    %3391 = vmatprep.mubr.f32.mxu0 0.0
    %3392 = vmatmul.mubr.f32.gmra.mrb[0].mxu0 %v3301
    %v3393 = vpop.f32.mrb[0].mxu0
    %v3394 = vadd.f32 0.0, %v3393
    %v3395 = vpop.f32.mrb[0].mxu0
    %3396 = vmatprep.mubr.f32.mxu0 0.0
    %3397 = vmatmul.mubr.f32.gmra.mrb[0].mxu0 %v3303
    %v3398 = vpop.f32.mrb[0].mxu0
    %v3399 = vadd.f32 0.0, %v3398
    %v3400 = vpop.f32.mrb[0].mxu0
    %3401 = vmatprep.mubr.f32.mxu0 0.0
    %3402 = vmatmul.mubr.f32.gmra.mrb[0].mxu0 %v3305
    %v3403 = vpop.f32.mrb[0].mxu0
    %v3404 = vadd.f32 0.0, %v3403
    %v3405 = vpop.f32.mrb[0].mxu0
    %3406 = vmatprep.mubr.f32.mxu0 0.0
    %3407 = vmatmul.mubr.f32.gmra.mrb[0].mxu0 %v3307
    %v3408 = vpop.f32.mrb[0].mxu0
    %v3409 = vadd.f32 0.0, %v3408
    %v3410 = vpop.f32.mrb[0].mxu0
    %3411 = vmatprep.mubr.f32.mxu0 0.0
    %3412 = vmatmul.mubr.f32.gmra.mrb[0].mxu0 %v3309
    %v3413 = vpop.f32.mrb[0].mxu0
    %v3414 = vadd.f32 0.0, %v3413
    %v3415 = vpop.f32.mrb[0].mxu0
    %3416 = vmatprep.mubr.f32.mxu0 0.0
    %3417 = vmatmul.mubr.f32.gmra.mrb[0].mxu0 %v3311
    %v3418 = vpop.f32.mrb[0].mxu0
    %v3419 = vadd.f32 0.0, %v3418
    %v3420 = vpop.f32.mrb[0].mxu0
    %3421 = vmatprep.mubr.f32.mxu0 0.0
    %3422 = vmatmul.mubr.f32.gmra.mrb[0].mxu0 %v3313
    %v3423 = vpop.f32.mrb[0].mxu0
    %v3424 = vadd.f32 0.0, %v3423
    %v3425 = vpop.f32.mrb[0].mxu0
    %3426 = vmatprep.mubr.f32.mxu0 0.0
    %3427 = vmatmul.mubr.f32.gmra.mrb[0].mxu0 %v3315
    %v3428 = vpop.f32.mrb[0].mxu0
    %v3429 = vadd.f32 0.0, %v3428
    %v3430 = vpop.f32.mrb[0].mxu0
    %3431 = vdwg.mxu0
    %v3432 = vadd.f32 %v3262, %v3384
    %v3433 = vadd.f32 %v3263, %v3389
    %v3434 = vadd.f32 %v3264, %v3394
    %v3435 = vadd.f32 %v3265, %v3399
    %v3436 = vadd.f32 %v3266, %v3404
    %v3437 = vadd.f32 %v3267, %v3409
    %v3438 = vadd.f32 %v3268, %v3414
    %v3439 = vadd.f32 %v3269, %v3419
    %v3440 = vadd.f32 %v3270, %v3424
    %v3441 = vadd.f32 %v3271, %v3429
    %v3442 = vld [vmem:[%s4] sm:$0x1]
    %v3444 = vlaneseq
    %v3445 = vshrl.u32 %v3444, 7
    %v3446 = vsub.s32 0, %v3445
    %v3447 = vrot.slane %v3442, %v3446
    %v3449 = vadd.f32 %v3432, %v3447
    %v3450 = vadd.f32 %v3433, %v3447
    %v3451 = vadd.f32 %v3434, %v3447
    %v3452 = vadd.f32 %v3435, %v3447
    %v3453 = vadd.f32 %v3436, %v3447
    %v3454 = vadd.f32 %v3437, %v3447
    %v3455 = vadd.f32 %v3438, %v3447
    %v3456 = vadd.f32 %v3439, %v3447
    %v3457 = vadd.f32 %v3440, %v3447
    %v3458 = vadd.f32 %v3441, %v3447
    %v3459 = vmax.f32 %v3449, 0.0
    %v3460 = vmax.f32 %v3450, 0.0
    %v3461 = vmax.f32 %v3451, 0.0
    %v3462 = vmax.f32 %v3452, 0.0
    %v3463 = vmax.f32 %v3453, 0.0
    %v3464 = vmax.f32 %v3454, 0.0
    %v3465 = vmax.f32 %v3455, 0.0
    %v3466 = vmax.f32 %v3456, 0.0
    %v3467 = vmax.f32 %v3457, 0.0
    %v3468 = vmax.f32 %v3458, 0.0
    %v3479 = vcombine.high %v3459, %v3459
    %v3481 = vunpack.c.l.s4 1983009808
    %v3482 = vunpack.c.0.s8 %v3481
    %v3483 = vlaneseq
    %v3484 = vshrl.u32 %v3483, 7
    %v3485 = vsub.s32 %v3482, %v3484
    %v3486 = vrot.slane %v3459, %v3485
    %v3488 = vunpack.c.l.s4 1983009808
    %v3489 = vunpack.c.0.s8 %v3488
    %v3490 = vlaneseq
    %v3491 = vshrl.u32 %v3490, 7
    %v3492 = vsub.s32 %v3489, %v3491
    %v3493 = vrot.slane %v3479, %v3492
    %v3494 = vcombine.high %v3486, %v3486
    %v3495 = vcombine.high %v3493, %v3493
    %v3496 = vcombine.high %v3460, %v3460
    %v3498 = vunpack.c.l.s4 1983009808
    %v3499 = vunpack.c.0.s8 %v3498
    %v3500 = vlaneseq
    %v3501 = vshrl.u32 %v3500, 7
    %v3502 = vsub.s32 %v3499, %v3501
    %v3503 = vrot.slane %v3460, %v3502
    %v3505 = vunpack.c.l.s4 1983009808
    %v3506 = vunpack.c.0.s8 %v3505
    %v3507 = vlaneseq
    %v3508 = vshrl.u32 %v3507, 7
    %v3509 = vsub.s32 %v3506, %v3508
    %v3510 = vrot.slane %v3496, %v3509
    %v3511 = vcombine.high %v3503, %v3503
    %v3512 = vcombine.high %v3510, %v3510
    %v3513 = vcombine.high %v3461, %v3461
    %v3515 = vunpack.c.l.s4 1983009808
    %v3516 = vunpack.c.0.s8 %v3515
    %v3517 = vlaneseq
    %v3518 = vshrl.u32 %v3517, 7
    %v3519 = vsub.s32 %v3516, %v3518
    %v3520 = vrot.slane %v3461, %v3519
    %v3522 = vunpack.c.l.s4 1983009808
    %v3523 = vunpack.c.0.s8 %v3522
    %v3524 = vlaneseq
    %v3525 = vshrl.u32 %v3524, 7
    %v3526 = vsub.s32 %v3523, %v3525
    %v3527 = vrot.slane %v3513, %v3526
    %v3528 = vcombine.high %v3520, %v3520
    %v3529 = vcombine.high %v3527, %v3527
    %v3530 = vcombine.high %v3462, %v3462
    %v3532 = vunpack.c.l.s4 1983009808
    %v3533 = vunpack.c.0.s8 %v3532
    %v3534 = vlaneseq
    %v3535 = vshrl.u32 %v3534, 7
    %v3536 = vsub.s32 %v3533, %v3535
    %v3537 = vrot.slane %v3462, %v3536
    %v3539 = vunpack.c.l.s4 1983009808
    %v3540 = vunpack.c.0.s8 %v3539
    %v3541 = vlaneseq
    %v3542 = vshrl.u32 %v3541, 7
    %v3543 = vsub.s32 %v3540, %v3542
    %v3544 = vrot.slane %v3530, %v3543
    %v3545 = vcombine.high %v3537, %v3537
    %v3546 = vcombine.high %v3544, %v3544
    %v3547 = vcombine.high %v3463, %v3463
    %v3549 = vunpack.c.l.s4 1983009808
    %v3550 = vunpack.c.0.s8 %v3549
    %v3551 = vlaneseq
    %v3552 = vshrl.u32 %v3551, 7
    %v3553 = vsub.s32 %v3550, %v3552
    %v3554 = vrot.slane %v3463, %v3553
    %v3556 = vunpack.c.l.s4 1983009808
    %v3557 = vunpack.c.0.s8 %v3556
    %v3558 = vlaneseq
    %v3559 = vshrl.u32 %v3558, 7
    %v3560 = vsub.s32 %v3557, %v3559
    %v3561 = vrot.slane %v3547, %v3560
    %v3562 = vcombine.high %v3554, %v3554
    %v3563 = vcombine.high %v3561, %v3561
    %v3564 = vcombine.high %v3464, %v3464
    %v3566 = vunpack.c.l.s4 1983009808
    %v3567 = vunpack.c.0.s8 %v3566
    %v3568 = vlaneseq
    %v3569 = vshrl.u32 %v3568, 7
    %v3570 = vsub.s32 %v3567, %v3569
    %v3571 = vrot.slane %v3464, %v3570
    %v3573 = vunpack.c.l.s4 1983009808
    %v3574 = vunpack.c.0.s8 %v3573
    %v3575 = vlaneseq
    %v3576 = vshrl.u32 %v3575, 7
    %v3577 = vsub.s32 %v3574, %v3576
    %v3578 = vrot.slane %v3564, %v3577
    %v3579 = vcombine.high %v3571, %v3571
    %v3580 = vcombine.high %v3578, %v3578
    %v3581 = vcombine.high %v3465, %v3465
    %v3583 = vunpack.c.l.s4 1983009808
    %v3584 = vunpack.c.0.s8 %v3583
    %v3585 = vlaneseq
    %v3586 = vshrl.u32 %v3585, 7
    %v3587 = vsub.s32 %v3584, %v3586
    %v3588 = vrot.slane %v3465, %v3587
    %v3590 = vunpack.c.l.s4 1983009808
    %v3591 = vunpack.c.0.s8 %v3590
    %v3592 = vlaneseq
    %v3593 = vshrl.u32 %v3592, 7
    %v3594 = vsub.s32 %v3591, %v3593
    %v3595 = vrot.slane %v3581, %v3594
    %v3596 = vcombine.high %v3588, %v3588
    %v3597 = vcombine.high %v3595, %v3595
    %v3598 = vcombine.high %v3466, %v3466
    %v3600 = vunpack.c.l.s4 1983009808
    %v3601 = vunpack.c.0.s8 %v3600
    %v3602 = vlaneseq
    %v3603 = vshrl.u32 %v3602, 7
    %v3604 = vsub.s32 %v3601, %v3603
    %v3605 = vrot.slane %v3466, %v3604
    %v3607 = vunpack.c.l.s4 1983009808
    %v3608 = vunpack.c.0.s8 %v3607
    %v3609 = vlaneseq
    %v3610 = vshrl.u32 %v3609, 7
    %v3611 = vsub.s32 %v3608, %v3610
    %v3612 = vrot.slane %v3598, %v3611
    %v3613 = vcombine.high %v3605, %v3605
    %v3614 = vcombine.high %v3612, %v3612
    %v3615 = vcombine.high %v3467, %v3467
    %v3617 = vunpack.c.l.s4 1983009808
    %v3618 = vunpack.c.0.s8 %v3617
    %v3619 = vlaneseq
    %v3620 = vshrl.u32 %v3619, 7
    %v3621 = vsub.s32 %v3618, %v3620
    %v3622 = vrot.slane %v3467, %v3621
    %v3624 = vunpack.c.l.s4 1983009808
    %v3625 = vunpack.c.0.s8 %v3624
    %v3626 = vlaneseq
    %v3627 = vshrl.u32 %v3626, 7
    %v3628 = vsub.s32 %v3625, %v3627
    %v3629 = vrot.slane %v3615, %v3628
    %v3630 = vcombine.high %v3622, %v3622
    %v3631 = vcombine.high %v3629, %v3629
    %v3632 = vcombine.high %v3468, %v3468
    %v3634 = vunpack.c.l.s4 1983009808
    %v3635 = vunpack.c.0.s8 %v3634
    %v3636 = vlaneseq
    %v3637 = vshrl.u32 %v3636, 7
    %v3638 = vsub.s32 %v3635, %v3637
    %v3639 = vrot.slane %v3468, %v3638
    %v3641 = vunpack.c.l.s4 1983009808
    %v3642 = vunpack.c.0.s8 %v3641
    %v3643 = vlaneseq
    %v3644 = vshrl.u32 %v3643, 7
    %v3645 = vsub.s32 %v3642, %v3644
    %v3646 = vrot.slane %v3632, %v3645
    %v3647 = vcombine.high %v3639, %v3639
    %v3648 = vcombine.high %v3646, %v3646
    %vm3689 = vcmask 254976
    %v3690 = vsel %vm3689, %v3486, 0.0
    %v3691 = vrot.slane %v3690, 4
    %v3692 = vadd.f32 %v3690, %v3691
    %v3693 = vrot.slane %v3692, 2
    %v3694 = vadd.f32 %v3692, %v3693
    %v3695 = vrot.slane %v3694, 1
    %v3696 = vadd.f32 %v3694, %v3695
    %v3697 = vsel %vm3689, %v3494, 0.0
    %v3698 = vrot.slane %v3697, 4
    %v3699 = vadd.f32 %v3697, %v3698
    %v3700 = vrot.slane %v3699, 2
    %v3701 = vadd.f32 %v3699, %v3700
    %v3702 = vrot.slane %v3701, 1
    %v3703 = vadd.f32 %v3701, %v3702
    %v3704 = vsel %vm3689, %v3493, 0.0
    %v3705 = vrot.slane %v3704, 4
    %v3706 = vadd.f32 %v3704, %v3705
    %v3707 = vrot.slane %v3706, 2
    %v3708 = vadd.f32 %v3706, %v3707
    %v3709 = vrot.slane %v3708, 1
    %v3710 = vadd.f32 %v3708, %v3709
    %v3711 = vsel %vm3689, %v3495, 0.0
    %v3712 = vrot.slane %v3711, 4
    %v3713 = vadd.f32 %v3711, %v3712
    %v3714 = vrot.slane %v3713, 2
    %v3715 = vadd.f32 %v3713, %v3714
    %v3716 = vrot.slane %v3715, 1
    %v3717 = vadd.f32 %v3715, %v3716
    %v3718 = vsel %vm3689, %v3503, 0.0
    %v3719 = vrot.slane %v3718, 4
    %v3720 = vadd.f32 %v3718, %v3719
    %v3721 = vrot.slane %v3720, 2
    %v3722 = vadd.f32 %v3720, %v3721
    %v3723 = vrot.slane %v3722, 1
    %v3724 = vadd.f32 %v3722, %v3723
    %v3725 = vsel %vm3689, %v3511, 0.0
    %v3726 = vrot.slane %v3725, 4
    %v3727 = vadd.f32 %v3725, %v3726
    %v3728 = vrot.slane %v3727, 2
    %v3729 = vadd.f32 %v3727, %v3728
    %v3730 = vrot.slane %v3729, 1
    %v3731 = vadd.f32 %v3729, %v3730
    %v3732 = vsel %vm3689, %v3510, 0.0
    %v3733 = vrot.slane %v3732, 4
    %v3734 = vadd.f32 %v3732, %v3733
    %v3735 = vrot.slane %v3734, 2
    %v3736 = vadd.f32 %v3734, %v3735
    %v3737 = vrot.slane %v3736, 1
    %v3738 = vadd.f32 %v3736, %v3737
    %v3739 = vsel %vm3689, %v3512, 0.0
    %v3740 = vrot.slane %v3739, 4
    %v3741 = vadd.f32 %v3739, %v3740
    %v3742 = vrot.slane %v3741, 2
    %v3743 = vadd.f32 %v3741, %v3742
    %v3744 = vrot.slane %v3743, 1
    %v3745 = vadd.f32 %v3743, %v3744
    %v3746 = vsel %vm3689, %v3520, 0.0
    %v3747 = vrot.slane %v3746, 4
    %v3748 = vadd.f32 %v3746, %v3747
    %v3749 = vrot.slane %v3748, 2
    %v3750 = vadd.f32 %v3748, %v3749
    %v3751 = vrot.slane %v3750, 1
    %v3752 = vadd.f32 %v3750, %v3751
    %v3753 = vsel %vm3689, %v3528, 0.0
    %v3754 = vrot.slane %v3753, 4
    %v3755 = vadd.f32 %v3753, %v3754
    %v3756 = vrot.slane %v3755, 2
    %v3757 = vadd.f32 %v3755, %v3756
    %v3758 = vrot.slane %v3757, 1
    %v3759 = vadd.f32 %v3757, %v3758
    %v3760 = vsel %vm3689, %v3527, 0.0
    %v3761 = vrot.slane %v3760, 4
    %v3762 = vadd.f32 %v3760, %v3761
    %v3763 = vrot.slane %v3762, 2
    %v3764 = vadd.f32 %v3762, %v3763
    %v3765 = vrot.slane %v3764, 1
    %v3766 = vadd.f32 %v3764, %v3765
    %v3767 = vsel %vm3689, %v3529, 0.0
    %v3768 = vrot.slane %v3767, 4
    %v3769 = vadd.f32 %v3767, %v3768
    %v3770 = vrot.slane %v3769, 2
    %v3771 = vadd.f32 %v3769, %v3770
    %v3772 = vrot.slane %v3771, 1
    %v3773 = vadd.f32 %v3771, %v3772
    %v3774 = vsel %vm3689, %v3537, 0.0
    %v3775 = vrot.slane %v3774, 4
    %v3776 = vadd.f32 %v3774, %v3775
    %v3777 = vrot.slane %v3776, 2
    %v3778 = vadd.f32 %v3776, %v3777
    %v3779 = vrot.slane %v3778, 1
    %v3780 = vadd.f32 %v3778, %v3779
    %v3781 = vsel %vm3689, %v3545, 0.0
    %v3782 = vrot.slane %v3781, 4
    %v3783 = vadd.f32 %v3781, %v3782
    %v3784 = vrot.slane %v3783, 2
    %v3785 = vadd.f32 %v3783, %v3784
    %v3786 = vrot.slane %v3785, 1
    %v3787 = vadd.f32 %v3785, %v3786
    %v3788 = vsel %vm3689, %v3544, 0.0
    %v3789 = vrot.slane %v3788, 4
    %v3790 = vadd.f32 %v3788, %v3789
    %v3791 = vrot.slane %v3790, 2
    %v3792 = vadd.f32 %v3790, %v3791
    %v3793 = vrot.slane %v3792, 1
    %v3794 = vadd.f32 %v3792, %v3793
    %v3795 = vsel %vm3689, %v3546, 0.0
    %v3796 = vrot.slane %v3795, 4
    %v3797 = vadd.f32 %v3795, %v3796
    %v3798 = vrot.slane %v3797, 2
    %v3799 = vadd.f32 %v3797, %v3798
    %v3800 = vrot.slane %v3799, 1
    %v3801 = vadd.f32 %v3799, %v3800
    %v3802 = vsel %vm3689, %v3554, 0.0
    %v3803 = vrot.slane %v3802, 4
    %v3804 = vadd.f32 %v3802, %v3803
    %v3805 = vrot.slane %v3804, 2
    %v3806 = vadd.f32 %v3804, %v3805
    %v3807 = vrot.slane %v3806, 1
    %v3808 = vadd.f32 %v3806, %v3807
    %v3809 = vsel %vm3689, %v3562, 0.0
    %v3810 = vrot.slane %v3809, 4
    %v3811 = vadd.f32 %v3809, %v3810
    %v3812 = vrot.slane %v3811, 2
    %v3813 = vadd.f32 %v3811, %v3812
    %v3814 = vrot.slane %v3813, 1
    %v3815 = vadd.f32 %v3813, %v3814
    %v3816 = vsel %vm3689, %v3561, 0.0
    %v3817 = vrot.slane %v3816, 4
    %v3818 = vadd.f32 %v3816, %v3817
    %v3819 = vrot.slane %v3818, 2
    %v3820 = vadd.f32 %v3818, %v3819
    %v3821 = vrot.slane %v3820, 1
    %v3822 = vadd.f32 %v3820, %v3821
    %v3823 = vsel %vm3689, %v3563, 0.0
    %v3824 = vrot.slane %v3823, 4
    %v3825 = vadd.f32 %v3823, %v3824
    %v3826 = vrot.slane %v3825, 2
    %v3827 = vadd.f32 %v3825, %v3826
    %v3828 = vrot.slane %v3827, 1
    %v3829 = vadd.f32 %v3827, %v3828
    %v3830 = vsel %vm3689, %v3571, 0.0
    %v3831 = vrot.slane %v3830, 4
    %v3832 = vadd.f32 %v3830, %v3831
    %v3833 = vrot.slane %v3832, 2
    %v3834 = vadd.f32 %v3832, %v3833
    %v3835 = vrot.slane %v3834, 1
    %v3836 = vadd.f32 %v3834, %v3835
    %v3837 = vsel %vm3689, %v3579, 0.0
    %v3838 = vrot.slane %v3837, 4
    %v3839 = vadd.f32 %v3837, %v3838
    %v3840 = vrot.slane %v3839, 2
    %v3841 = vadd.f32 %v3839, %v3840
    %v3842 = vrot.slane %v3841, 1
    %v3843 = vadd.f32 %v3841, %v3842
    %v3844 = vsel %vm3689, %v3578, 0.0
    %v3845 = vrot.slane %v3844, 4
    %v3846 = vadd.f32 %v3844, %v3845
    %v3847 = vrot.slane %v3846, 2
    %v3848 = vadd.f32 %v3846, %v3847
    %v3849 = vrot.slane %v3848, 1
    %v3850 = vadd.f32 %v3848, %v3849
    %v3851 = vsel %vm3689, %v3580, 0.0
    %v3852 = vrot.slane %v3851, 4
    %v3853 = vadd.f32 %v3851, %v3852
    %v3854 = vrot.slane %v3853, 2
    %v3855 = vadd.f32 %v3853, %v3854
    %v3856 = vrot.slane %v3855, 1
    %v3857 = vadd.f32 %v3855, %v3856
    %v3858 = vsel %vm3689, %v3588, 0.0
    %v3859 = vrot.slane %v3858, 4
    %v3860 = vadd.f32 %v3858, %v3859
    %v3861 = vrot.slane %v3860, 2
    %v3862 = vadd.f32 %v3860, %v3861
    %v3863 = vrot.slane %v3862, 1
    %v3864 = vadd.f32 %v3862, %v3863
    %v3865 = vsel %vm3689, %v3596, 0.0
    %v3866 = vrot.slane %v3865, 4
    %v3867 = vadd.f32 %v3865, %v3866
    %v3868 = vrot.slane %v3867, 2
    %v3869 = vadd.f32 %v3867, %v3868
    %v3870 = vrot.slane %v3869, 1
    %v3871 = vadd.f32 %v3869, %v3870
    %v3872 = vsel %vm3689, %v3595, 0.0
    %v3873 = vrot.slane %v3872, 4
    %v3874 = vadd.f32 %v3872, %v3873
    %v3875 = vrot.slane %v3874, 2
    %v3876 = vadd.f32 %v3874, %v3875
    %v3877 = vrot.slane %v3876, 1
    %v3878 = vadd.f32 %v3876, %v3877
    %v3879 = vsel %vm3689, %v3597, 0.0
    %v3880 = vrot.slane %v3879, 4
    %v3881 = vadd.f32 %v3879, %v3880
    %v3882 = vrot.slane %v3881, 2
    %v3883 = vadd.f32 %v3881, %v3882
    %v3884 = vrot.slane %v3883, 1
    %v3885 = vadd.f32 %v3883, %v3884
    %v3886 = vsel %vm3689, %v3605, 0.0
    %v3887 = vrot.slane %v3886, 4
    %v3888 = vadd.f32 %v3886, %v3887
    %v3889 = vrot.slane %v3888, 2
    %v3890 = vadd.f32 %v3888, %v3889
    %v3891 = vrot.slane %v3890, 1
    %v3892 = vadd.f32 %v3890, %v3891
    %v3893 = vsel %vm3689, %v3613, 0.0
    %v3894 = vrot.slane %v3893, 4
    %v3895 = vadd.f32 %v3893, %v3894
    %v3896 = vrot.slane %v3895, 2
    %v3897 = vadd.f32 %v3895, %v3896
    %v3898 = vrot.slane %v3897, 1
    %v3899 = vadd.f32 %v3897, %v3898
    %v3900 = vsel %vm3689, %v3612, 0.0
    %v3901 = vrot.slane %v3900, 4
    %v3902 = vadd.f32 %v3900, %v3901
    %v3903 = vrot.slane %v3902, 2
    %v3904 = vadd.f32 %v3902, %v3903
    %v3905 = vrot.slane %v3904, 1
    %v3906 = vadd.f32 %v3904, %v3905
    %v3907 = vsel %vm3689, %v3614, 0.0
    %v3908 = vrot.slane %v3907, 4
    %v3909 = vadd.f32 %v3907, %v3908
    %v3910 = vrot.slane %v3909, 2
    %v3911 = vadd.f32 %v3909, %v3910
    %v3912 = vrot.slane %v3911, 1
    %v3913 = vadd.f32 %v3911, %v3912
    %v3914 = vsel %vm3689, %v3622, 0.0
    %v3915 = vrot.slane %v3914, 4
    %v3916 = vadd.f32 %v3914, %v3915
    %v3917 = vrot.slane %v3916, 2
    %v3918 = vadd.f32 %v3916, %v3917
    %v3919 = vrot.slane %v3918, 1
    %v3920 = vadd.f32 %v3918, %v3919
    %v3921 = vsel %vm3689, %v3630, 0.0
    %v3922 = vrot.slane %v3921, 4
    %v3923 = vadd.f32 %v3921, %v3922
    %v3924 = vrot.slane %v3923, 2
    %v3925 = vadd.f32 %v3923, %v3924
    %v3926 = vrot.slane %v3925, 1
    %v3927 = vadd.f32 %v3925, %v3926
    %v3928 = vsel %vm3689, %v3629, 0.0
    %v3929 = vrot.slane %v3928, 4
    %v3930 = vadd.f32 %v3928, %v3929
    %v3931 = vrot.slane %v3930, 2
    %v3932 = vadd.f32 %v3930, %v3931
    %v3933 = vrot.slane %v3932, 1
    %v3934 = vadd.f32 %v3932, %v3933
    %v3935 = vsel %vm3689, %v3631, 0.0
    %v3936 = vrot.slane %v3935, 4
    %v3937 = vadd.f32 %v3935, %v3936
    %v3938 = vrot.slane %v3937, 2
    %v3939 = vadd.f32 %v3937, %v3938
    %v3940 = vrot.slane %v3939, 1
    %v3941 = vadd.f32 %v3939, %v3940
    %v3942 = vsel %vm3689, %v3639, 0.0
    %v3943 = vrot.slane %v3942, 4
    %v3944 = vadd.f32 %v3942, %v3943
    %v3945 = vrot.slane %v3944, 2
    %v3946 = vadd.f32 %v3944, %v3945
    %v3947 = vrot.slane %v3946, 1
    %v3948 = vadd.f32 %v3946, %v3947
    %v3949 = vsel %vm3689, %v3647, 0.0
    %v3950 = vrot.slane %v3949, 4
    %v3951 = vadd.f32 %v3949, %v3950
    %v3952 = vrot.slane %v3951, 2
    %v3953 = vadd.f32 %v3951, %v3952
    %v3954 = vrot.slane %v3953, 1
    %v3955 = vadd.f32 %v3953, %v3954
    %v3956 = vsel %vm3689, %v3646, 0.0
    %v3957 = vrot.slane %v3956, 4
    %v3958 = vadd.f32 %v3956, %v3957
    %v3959 = vrot.slane %v3958, 2
    %v3960 = vadd.f32 %v3958, %v3959
    %v3961 = vrot.slane %v3960, 1
    %v3962 = vadd.f32 %v3960, %v3961
    %v3963 = vsel %vm3689, %v3648, 0.0
    %v3964 = vrot.slane %v3963, 4
    %v3965 = vadd.f32 %v3963, %v3964
    %v3966 = vrot.slane %v3965, 2
    %v3967 = vadd.f32 %v3965, %v3966
    %v3968 = vrot.slane %v3967, 1
    %v3969 = vadd.f32 %v3967, %v3968
    %v3970 = vmul.f32 %v3696, 0.5
    %v3971 = vmul.f32 %v3703, 0.5
    %v3972 = vmul.f32 %v3710, 0.5
    %v3973 = vmul.f32 %v3717, 0.5
    %v3974 = vmul.f32 %v3724, 0.5
    %v3975 = vmul.f32 %v3731, 0.5
    %v3976 = vmul.f32 %v3738, 0.5
    %v3977 = vmul.f32 %v3745, 0.5
    %v3978 = vmul.f32 %v3752, 0.5
    %v3979 = vmul.f32 %v3759, 0.5
    %v3980 = vmul.f32 %v3766, 0.5
    %v3981 = vmul.f32 %v3773, 0.5
    %v3982 = vmul.f32 %v3780, 0.5
    %v3983 = vmul.f32 %v3787, 0.5
    %v3984 = vmul.f32 %v3794, 0.5
    %v3985 = vmul.f32 %v3801, 0.5
    %v3986 = vmul.f32 %v3808, 0.5
    %v3987 = vmul.f32 %v3815, 0.5
    %v3988 = vmul.f32 %v3822, 0.5
    %v3989 = vmul.f32 %v3829, 0.5
    %v3990 = vmul.f32 %v3836, 0.5
    %v3991 = vmul.f32 %v3843, 0.5
    %v3992 = vmul.f32 %v3850, 0.5
    %v3993 = vmul.f32 %v3857, 0.5
    %v3994 = vmul.f32 %v3864, 0.5
    %v3995 = vmul.f32 %v3871, 0.5
    %v3996 = vmul.f32 %v3878, 0.5
    %v3997 = vmul.f32 %v3885, 0.5
    %v3998 = vmul.f32 %v3892, 0.5
    %v3999 = vmul.f32 %v3899, 0.5
    %v4000 = vmul.f32 %v3906, 0.5
    %v4001 = vmul.f32 %v3913, 0.5
    %v4002 = vmul.f32 %v3920, 0.5
    %v4003 = vmul.f32 %v3927, 0.5
    %v4004 = vmul.f32 %v3934, 0.5
    %v4005 = vmul.f32 %v3941, 0.5
    %v4006 = vmul.f32 %v3948, 0.5
    %v4007 = vmul.f32 %v3955, 0.5
    %v4008 = vmul.f32 %v3962, 0.5
    %v4009 = vmul.f32 %v3969, 0.5
    %v4013 = vunpack.c.l.s4 1983009808
    %v4014 = vunpack.c.0.s8 %v4013
    %v4015 = vlaneseq
    %v4016 = vshrl.u32 %v4015, 7
    %v4017 = vsub.s32 %v4014, %v4016
    %v4018 = vrot.slane %v3970, %v4017
    %v4020 = vunpack.c.l.s4 1983009808
    %v4021 = vunpack.c.0.s8 %v4020
    %v4022 = vlaneseq
    %v4023 = vshrl.u32 %v4022, 7
    %v4024 = vsub.s32 %v4021, %v4023
    %v4025 = vrot.slane %v3990, %v4024
    %v4026 = vsel %vm2519, %v4018, %v4018
    %v4027 = vsel %vm2523, %v4018, %v4026
    %v4028 = vrot.slane %v4025, 7
    %v4029 = vsel %vm2513, %v4028, %v4027
    %v4030 = vsel %vm2517, %v4028, %v4029
    %v4031 = vsel %vm2521, %v4028, %v4030
    %v4032 = vsel %vm2525, %v4028, %v4031
    %4034 = vst.msk [vmem:[#allocation3] sm:$0x3] %vm3689, %v4032
    %v4038 = vunpack.c.l.s4 1983009808
    %v4039 = vunpack.c.0.s8 %v4038
    %v4040 = vlaneseq
    %v4041 = vshrl.u32 %v4040, 7
    %v4042 = vsub.s32 %v4039, %v4041
    %v4043 = vrot.slane %v3971, %v4042
    %v4045 = vunpack.c.l.s4 1983009808
    %v4046 = vunpack.c.0.s8 %v4045
    %v4047 = vlaneseq
    %v4048 = vshrl.u32 %v4047, 7
    %v4049 = vsub.s32 %v4046, %v4048
    %v4050 = vrot.slane %v3991, %v4049
    %v4051 = vsel %vm2519, %v4043, %v4043
    %v4052 = vsel %vm2523, %v4043, %v4051
    %v4053 = vrot.slane %v4050, 7
    %v4054 = vsel %vm2513, %v4053, %v4052
    %v4055 = vsel %vm2517, %v4053, %v4054
    %v4056 = vsel %vm2521, %v4053, %v4055
    %v4057 = vsel %vm2525, %v4053, %v4056
    %4058 = vrot.lane.b32.xlu0 %v4057, 32
    %v4059 = vpop.permute.xlu0 %4058
    %vm4061 = vcmask 517376
    %4062 = vst.msk [vmem:[#allocation3] sm:$0x3] %vm4061, %v4059
    %v4066 = vunpack.c.l.s4 1983009808
    %v4067 = vunpack.c.0.s8 %v4066
    %v4068 = vlaneseq
    %v4069 = vshrl.u32 %v4068, 7
    %v4070 = vsub.s32 %v4067, %v4069
    %v4071 = vrot.slane %v3972, %v4070
    %v4073 = vunpack.c.l.s4 1983009808
    %v4074 = vunpack.c.0.s8 %v4073
    %v4075 = vlaneseq
    %v4076 = vshrl.u32 %v4075, 7
    %v4077 = vsub.s32 %v4074, %v4076
    %v4078 = vrot.slane %v3992, %v4077
    %v4079 = vsel %vm2519, %v4071, %v4071
    %v4080 = vsel %vm2523, %v4071, %v4079
    %v4081 = vrot.slane %v4078, 7
    %v4082 = vsel %vm2513, %v4081, %v4080
    %v4083 = vsel %vm2517, %v4081, %v4082
    %v4084 = vsel %vm2521, %v4081, %v4083
    %v4085 = vsel %vm2525, %v4081, %v4084
    %4086 = vrot.lane.b32.xlu0 %v4085, 64
    %v4087 = vpop.permute.xlu0 %4086
    %vm4089 = vcmask 779776
    %4090 = vst.msk [vmem:[#allocation3] sm:$0x3] %vm4089, %v4087
    %v4094 = vunpack.c.l.s4 1983009808
    %v4095 = vunpack.c.0.s8 %v4094
    %v4096 = vlaneseq
    %v4097 = vshrl.u32 %v4096, 7
    %v4098 = vsub.s32 %v4095, %v4097
    %v4099 = vrot.slane %v3973, %v4098
    %v4101 = vunpack.c.l.s4 1983009808
    %v4102 = vunpack.c.0.s8 %v4101
    %v4103 = vlaneseq
    %v4104 = vshrl.u32 %v4103, 7
    %v4105 = vsub.s32 %v4102, %v4104
    %v4106 = vrot.slane %v3993, %v4105
    %v4107 = vsel %vm2519, %v4099, %v4099
    %v4108 = vsel %vm2523, %v4099, %v4107
    %v4109 = vrot.slane %v4106, 7
    %v4110 = vsel %vm2513, %v4109, %v4108
    %v4111 = vsel %vm2517, %v4109, %v4110
    %v4112 = vsel %vm2521, %v4109, %v4111
    %v4113 = vsel %vm2525, %v4109, %v4112
    %4114 = vrot.lane.b32.xlu0 %v4113, 96
    %v4115 = vpop.permute.xlu0 %4114
    %vm4117 = vcmask 1042176
    %4118 = vst.msk [vmem:[#allocation3] sm:$0x3] %vm4117, %v4115
    %v4122 = vunpack.c.l.s4 1983009808
    %v4123 = vunpack.c.0.s8 %v4122
    %v4124 = vlaneseq
    %v4125 = vshrl.u32 %v4124, 7
    %v4126 = vsub.s32 %v4123, %v4125
    %v4127 = vrot.slane %v3974, %v4126
    %v4129 = vunpack.c.l.s4 1983009808
    %v4130 = vunpack.c.0.s8 %v4129
    %v4131 = vlaneseq
    %v4132 = vshrl.u32 %v4131, 7
    %v4133 = vsub.s32 %v4130, %v4132
    %v4134 = vrot.slane %v3994, %v4133
    %v4135 = vsel %vm2519, %v4127, %v4127
    %v4136 = vsel %vm2523, %v4127, %v4135
    %v4137 = vrot.slane %v4134, 7
    %v4138 = vsel %vm2513, %v4137, %v4136
    %v4139 = vsel %vm2517, %v4137, %v4138
    %v4140 = vsel %vm2521, %v4137, %v4139
    %v4141 = vsel %vm2525, %v4137, %v4140
    %4143 = vst.msk [vmem:[#allocation3 + $0x2] sm:$0x3] %vm3689, %v4141
    %v4147 = vunpack.c.l.s4 1983009808
    %v4148 = vunpack.c.0.s8 %v4147
    %v4149 = vlaneseq
    %v4150 = vshrl.u32 %v4149, 7
    %v4151 = vsub.s32 %v4148, %v4150
    %v4152 = vrot.slane %v3975, %v4151
    %v4154 = vunpack.c.l.s4 1983009808
    %v4155 = vunpack.c.0.s8 %v4154
    %v4156 = vlaneseq
    %v4157 = vshrl.u32 %v4156, 7
    %v4158 = vsub.s32 %v4155, %v4157
    %v4159 = vrot.slane %v3995, %v4158
    %v4160 = vsel %vm2519, %v4152, %v4152
    %v4161 = vsel %vm2523, %v4152, %v4160
    %v4162 = vrot.slane %v4159, 7
    %v4163 = vsel %vm2513, %v4162, %v4161
    %v4164 = vsel %vm2517, %v4162, %v4163
    %v4165 = vsel %vm2521, %v4162, %v4164
    %v4166 = vsel %vm2525, %v4162, %v4165
    %4167 = vrot.lane.b32.xlu0 %v4166, 32
    %v4168 = vpop.permute.xlu0 %4167
    %4170 = vst.msk [vmem:[#allocation3 + $0x2] sm:$0x3] %vm4061, %v4168
    %v4174 = vunpack.c.l.s4 1983009808
    %v4175 = vunpack.c.0.s8 %v4174
    %v4176 = vlaneseq
    %v4177 = vshrl.u32 %v4176, 7
    %v4178 = vsub.s32 %v4175, %v4177
    %v4179 = vrot.slane %v3976, %v4178
    %v4181 = vunpack.c.l.s4 1983009808
    %v4182 = vunpack.c.0.s8 %v4181
    %v4183 = vlaneseq
    %v4184 = vshrl.u32 %v4183, 7
    %v4185 = vsub.s32 %v4182, %v4184
    %v4186 = vrot.slane %v3996, %v4185
    %v4187 = vsel %vm2519, %v4179, %v4179
    %v4188 = vsel %vm2523, %v4179, %v4187
    %v4189 = vrot.slane %v4186, 7
    %v4190 = vsel %vm2513, %v4189, %v4188
    %v4191 = vsel %vm2517, %v4189, %v4190
    %v4192 = vsel %vm2521, %v4189, %v4191
    %v4193 = vsel %vm2525, %v4189, %v4192
    %4194 = vrot.lane.b32.xlu0 %v4193, 64
    %v4195 = vpop.permute.xlu0 %4194
    %4197 = vst.msk [vmem:[#allocation3 + $0x2] sm:$0x3] %vm4089, %v4195
    %v4201 = vunpack.c.l.s4 1983009808
    %v4202 = vunpack.c.0.s8 %v4201
    %v4203 = vlaneseq
    %v4204 = vshrl.u32 %v4203, 7
    %v4205 = vsub.s32 %v4202, %v4204
    %v4206 = vrot.slane %v3977, %v4205
    %v4208 = vunpack.c.l.s4 1983009808
    %v4209 = vunpack.c.0.s8 %v4208
    %v4210 = vlaneseq
    %v4211 = vshrl.u32 %v4210, 7
    %v4212 = vsub.s32 %v4209, %v4211
    %v4213 = vrot.slane %v3997, %v4212
    %v4214 = vsel %vm2519, %v4206, %v4206
    %v4215 = vsel %vm2523, %v4206, %v4214
    %v4216 = vrot.slane %v4213, 7
    %v4217 = vsel %vm2513, %v4216, %v4215
    %v4218 = vsel %vm2517, %v4216, %v4217
    %v4219 = vsel %vm2521, %v4216, %v4218
    %v4220 = vsel %vm2525, %v4216, %v4219
    %4221 = vrot.lane.b32.xlu0 %v4220, 96
    %v4222 = vpop.permute.xlu0 %4221
    %4224 = vst.msk [vmem:[#allocation3 + $0x2] sm:$0x3] %vm4117, %v4222
    %v4228 = vunpack.c.l.s4 1983009808
    %v4229 = vunpack.c.0.s8 %v4228
    %v4230 = vlaneseq
    %v4231 = vshrl.u32 %v4230, 7
    %v4232 = vsub.s32 %v4229, %v4231
    %v4233 = vrot.slane %v3978, %v4232
    %v4235 = vunpack.c.l.s4 1983009808
    %v4236 = vunpack.c.0.s8 %v4235
    %v4237 = vlaneseq
    %v4238 = vshrl.u32 %v4237, 7
    %v4239 = vsub.s32 %v4236, %v4238
    %v4240 = vrot.slane %v3998, %v4239
    %v4241 = vsel %vm2519, %v4233, %v4233
    %v4242 = vsel %vm2523, %v4233, %v4241
    %v4243 = vrot.slane %v4240, 7
    %v4244 = vsel %vm2513, %v4243, %v4242
    %v4245 = vsel %vm2517, %v4243, %v4244
    %v4246 = vsel %vm2521, %v4243, %v4245
    %v4247 = vsel %vm2525, %v4243, %v4246
    %4249 = vst.msk [vmem:[#allocation3 + $0x4] sm:$0x3] %vm3689, %v4247
    %v4253 = vunpack.c.l.s4 1983009808
    %v4254 = vunpack.c.0.s8 %v4253
    %v4255 = vlaneseq
    %v4256 = vshrl.u32 %v4255, 7
    %v4257 = vsub.s32 %v4254, %v4256
    %v4258 = vrot.slane %v3979, %v4257
    %v4260 = vunpack.c.l.s4 1983009808
    %v4261 = vunpack.c.0.s8 %v4260
    %v4262 = vlaneseq
    %v4263 = vshrl.u32 %v4262, 7
    %v4264 = vsub.s32 %v4261, %v4263
    %v4265 = vrot.slane %v3999, %v4264
    %v4266 = vsel %vm2519, %v4258, %v4258
    %v4267 = vsel %vm2523, %v4258, %v4266
    %v4268 = vrot.slane %v4265, 7
    %v4269 = vsel %vm2513, %v4268, %v4267
    %v4270 = vsel %vm2517, %v4268, %v4269
    %v4271 = vsel %vm2521, %v4268, %v4270
    %v4272 = vsel %vm2525, %v4268, %v4271
    %4273 = vrot.lane.b32.xlu0 %v4272, 32
    %v4274 = vpop.permute.xlu0 %4273
    %4276 = vst.msk [vmem:[#allocation3 + $0x4] sm:$0x3] %vm4061, %v4274
    %v4280 = vunpack.c.l.s4 1983009808
    %v4281 = vunpack.c.0.s8 %v4280
    %v4282 = vlaneseq
    %v4283 = vshrl.u32 %v4282, 7
    %v4284 = vsub.s32 %v4281, %v4283
    %v4285 = vrot.slane %v3980, %v4284
    %v4287 = vunpack.c.l.s4 1983009808
    %v4288 = vunpack.c.0.s8 %v4287
    %v4289 = vlaneseq
    %v4290 = vshrl.u32 %v4289, 7
    %v4291 = vsub.s32 %v4288, %v4290
    %v4292 = vrot.slane %v4000, %v4291
    %v4293 = vsel %vm2519, %v4285, %v4285
    %v4294 = vsel %vm2523, %v4285, %v4293
    %v4295 = vrot.slane %v4292, 7
    %v4296 = vsel %vm2513, %v4295, %v4294
    %v4297 = vsel %vm2517, %v4295, %v4296
    %v4298 = vsel %vm2521, %v4295, %v4297
    %v4299 = vsel %vm2525, %v4295, %v4298
    %4300 = vrot.lane.b32.xlu0 %v4299, 64
    %v4301 = vpop.permute.xlu0 %4300
    %4303 = vst.msk [vmem:[#allocation3 + $0x4] sm:$0x3] %vm4089, %v4301
    %v4307 = vunpack.c.l.s4 1983009808
    %v4308 = vunpack.c.0.s8 %v4307
    %v4309 = vlaneseq
    %v4310 = vshrl.u32 %v4309, 7
    %v4311 = vsub.s32 %v4308, %v4310
    %v4312 = vrot.slane %v3981, %v4311
    %v4314 = vunpack.c.l.s4 1983009808
    %v4315 = vunpack.c.0.s8 %v4314
    %v4316 = vlaneseq
    %v4317 = vshrl.u32 %v4316, 7
    %v4318 = vsub.s32 %v4315, %v4317
    %v4319 = vrot.slane %v4001, %v4318
    %v4320 = vsel %vm2519, %v4312, %v4312
    %v4321 = vsel %vm2523, %v4312, %v4320
    %v4322 = vrot.slane %v4319, 7
    %v4323 = vsel %vm2513, %v4322, %v4321
    %v4324 = vsel %vm2517, %v4322, %v4323
    %v4325 = vsel %vm2521, %v4322, %v4324
    %v4326 = vsel %vm2525, %v4322, %v4325
    %4327 = vrot.lane.b32.xlu0 %v4326, 96
    %v4328 = vpop.permute.xlu0 %4327
    %4330 = vst.msk [vmem:[#allocation3 + $0x4] sm:$0x3] %vm4117, %v4328
    %v4334 = vunpack.c.l.s4 1983009808
    %v4335 = vunpack.c.0.s8 %v4334
    %v4336 = vlaneseq
    %v4337 = vshrl.u32 %v4336, 7
    %v4338 = vsub.s32 %v4335, %v4337
    %v4339 = vrot.slane %v3982, %v4338
    %v4341 = vunpack.c.l.s4 1983009808
    %v4342 = vunpack.c.0.s8 %v4341
    %v4343 = vlaneseq
    %v4344 = vshrl.u32 %v4343, 7
    %v4345 = vsub.s32 %v4342, %v4344
    %v4346 = vrot.slane %v4002, %v4345
    %v4347 = vsel %vm2519, %v4339, %v4339
    %v4348 = vsel %vm2523, %v4339, %v4347
    %v4349 = vrot.slane %v4346, 7
    %v4350 = vsel %vm2513, %v4349, %v4348
    %v4351 = vsel %vm2517, %v4349, %v4350
    %v4352 = vsel %vm2521, %v4349, %v4351
    %v4353 = vsel %vm2525, %v4349, %v4352
    %4355 = vst.msk [vmem:[#allocation3 + $0x6] sm:$0x3] %vm3689, %v4353
    %v4359 = vunpack.c.l.s4 1983009808
    %v4360 = vunpack.c.0.s8 %v4359
    %v4361 = vlaneseq
    %v4362 = vshrl.u32 %v4361, 7
    %v4363 = vsub.s32 %v4360, %v4362
    %v4364 = vrot.slane %v3983, %v4363
    %v4366 = vunpack.c.l.s4 1983009808
    %v4367 = vunpack.c.0.s8 %v4366
    %v4368 = vlaneseq
    %v4369 = vshrl.u32 %v4368, 7
    %v4370 = vsub.s32 %v4367, %v4369
    %v4371 = vrot.slane %v4003, %v4370
    %v4372 = vsel %vm2519, %v4364, %v4364
    %v4373 = vsel %vm2523, %v4364, %v4372
    %v4374 = vrot.slane %v4371, 7
    %v4375 = vsel %vm2513, %v4374, %v4373
    %v4376 = vsel %vm2517, %v4374, %v4375
    %v4377 = vsel %vm2521, %v4374, %v4376
    %v4378 = vsel %vm2525, %v4374, %v4377
    %4379 = vrot.lane.b32.xlu0 %v4378, 32
    %v4380 = vpop.permute.xlu0 %4379
    %4382 = vst.msk [vmem:[#allocation3 + $0x6] sm:$0x3] %vm4061, %v4380
    %v4386 = vunpack.c.l.s4 1983009808
    %v4387 = vunpack.c.0.s8 %v4386
    %v4388 = vlaneseq
    %v4389 = vshrl.u32 %v4388, 7
    %v4390 = vsub.s32 %v4387, %v4389
    %v4391 = vrot.slane %v3984, %v4390
    %v4393 = vunpack.c.l.s4 1983009808
    %v4394 = vunpack.c.0.s8 %v4393
    %v4395 = vlaneseq
    %v4396 = vshrl.u32 %v4395, 7
    %v4397 = vsub.s32 %v4394, %v4396
    %v4398 = vrot.slane %v4004, %v4397
    %v4399 = vsel %vm2519, %v4391, %v4391
    %v4400 = vsel %vm2523, %v4391, %v4399
    %v4401 = vrot.slane %v4398, 7
    %v4402 = vsel %vm2513, %v4401, %v4400
    %v4403 = vsel %vm2517, %v4401, %v4402
    %v4404 = vsel %vm2521, %v4401, %v4403
    %v4405 = vsel %vm2525, %v4401, %v4404
    %4406 = vrot.lane.b32.xlu0 %v4405, 64
    %v4407 = vpop.permute.xlu0 %4406
    %4409 = vst.msk [vmem:[#allocation3 + $0x6] sm:$0x3] %vm4089, %v4407
    %v4413 = vunpack.c.l.s4 1983009808
    %v4414 = vunpack.c.0.s8 %v4413
    %v4415 = vlaneseq
    %v4416 = vshrl.u32 %v4415, 7
    %v4417 = vsub.s32 %v4414, %v4416
    %v4418 = vrot.slane %v3985, %v4417
    %v4420 = vunpack.c.l.s4 1983009808
    %v4421 = vunpack.c.0.s8 %v4420
    %v4422 = vlaneseq
    %v4423 = vshrl.u32 %v4422, 7
    %v4424 = vsub.s32 %v4421, %v4423
    %v4425 = vrot.slane %v4005, %v4424
    %v4426 = vsel %vm2519, %v4418, %v4418
    %v4427 = vsel %vm2523, %v4418, %v4426
    %v4428 = vrot.slane %v4425, 7
    %v4429 = vsel %vm2513, %v4428, %v4427
    %v4430 = vsel %vm2517, %v4428, %v4429
    %v4431 = vsel %vm2521, %v4428, %v4430
    %v4432 = vsel %vm2525, %v4428, %v4431
    %4433 = vrot.lane.b32.xlu0 %v4432, 96
    %v4434 = vpop.permute.xlu0 %4433
    %4436 = vst.msk [vmem:[#allocation3 + $0x6] sm:$0x3] %vm4117, %v4434
    %v4440 = vunpack.c.l.s4 1983009808
    %v4441 = vunpack.c.0.s8 %v4440
    %v4442 = vlaneseq
    %v4443 = vshrl.u32 %v4442, 7
    %v4444 = vsub.s32 %v4441, %v4443
    %v4445 = vrot.slane %v3986, %v4444
    %v4447 = vunpack.c.l.s4 1983009808
    %v4448 = vunpack.c.0.s8 %v4447
    %v4449 = vlaneseq
    %v4450 = vshrl.u32 %v4449, 7
    %v4451 = vsub.s32 %v4448, %v4450
    %v4452 = vrot.slane %v4006, %v4451
    %v4453 = vsel %vm2519, %v4445, %v4445
    %v4454 = vsel %vm2523, %v4445, %v4453
    %v4455 = vrot.slane %v4452, 7
    %v4456 = vsel %vm2513, %v4455, %v4454
    %v4457 = vsel %vm2517, %v4455, %v4456
    %v4458 = vsel %vm2521, %v4455, %v4457
    %v4459 = vsel %vm2525, %v4455, %v4458
    %4461 = vst.msk [vmem:[#allocation3 + $0x8] sm:$0x3] %vm3689, %v4459
    %v4465 = vunpack.c.l.s4 1983009808
    %v4466 = vunpack.c.0.s8 %v4465
    %v4467 = vlaneseq
    %v4468 = vshrl.u32 %v4467, 7
    %v4469 = vsub.s32 %v4466, %v4468
    %v4470 = vrot.slane %v3987, %v4469
    %v4472 = vunpack.c.l.s4 1983009808
    %v4473 = vunpack.c.0.s8 %v4472
    %v4474 = vlaneseq
    %v4475 = vshrl.u32 %v4474, 7
    %v4476 = vsub.s32 %v4473, %v4475
    %v4477 = vrot.slane %v4007, %v4476
    %v4478 = vsel %vm2519, %v4470, %v4470
    %v4479 = vsel %vm2523, %v4470, %v4478
    %v4480 = vrot.slane %v4477, 7
    %v4481 = vsel %vm2513, %v4480, %v4479
    %v4482 = vsel %vm2517, %v4480, %v4481
    %v4483 = vsel %vm2521, %v4480, %v4482
    %v4484 = vsel %vm2525, %v4480, %v4483
    %4485 = vrot.lane.b32.xlu0 %v4484, 32
    %v4486 = vpop.permute.xlu0 %4485
    %4488 = vst.msk [vmem:[#allocation3 + $0x8] sm:$0x3] %vm4061, %v4486
    %v4492 = vunpack.c.l.s4 1983009808
    %v4493 = vunpack.c.0.s8 %v4492
    %v4494 = vlaneseq
    %v4495 = vshrl.u32 %v4494, 7
    %v4496 = vsub.s32 %v4493, %v4495
    %v4497 = vrot.slane %v3988, %v4496
    %v4499 = vunpack.c.l.s4 1983009808
    %v4500 = vunpack.c.0.s8 %v4499
    %v4501 = vlaneseq
    %v4502 = vshrl.u32 %v4501, 7
    %v4503 = vsub.s32 %v4500, %v4502
    %v4504 = vrot.slane %v4008, %v4503
    %v4505 = vsel %vm2519, %v4497, %v4497
    %v4506 = vsel %vm2523, %v4497, %v4505
    %v4507 = vrot.slane %v4504, 7
    %v4508 = vsel %vm2513, %v4507, %v4506
    %v4509 = vsel %vm2517, %v4507, %v4508
    %v4510 = vsel %vm2521, %v4507, %v4509
    %v4511 = vsel %vm2525, %v4507, %v4510
    %4512 = vrot.lane.b32.xlu0 %v4511, 64
    %v4513 = vpop.permute.xlu0 %4512
    %4515 = vst.msk [vmem:[#allocation3 + $0x8] sm:$0x3] %vm4089, %v4513
    %v4519 = vunpack.c.l.s4 1983009808
    %v4520 = vunpack.c.0.s8 %v4519
    %v4521 = vlaneseq
    %v4522 = vshrl.u32 %v4521, 7
    %v4523 = vsub.s32 %v4520, %v4522
    %v4524 = vrot.slane %v3989, %v4523
    %v4526 = vunpack.c.l.s4 1983009808
    %v4527 = vunpack.c.0.s8 %v4526
    %v4528 = vlaneseq
    %v4529 = vshrl.u32 %v4528, 7
    %v4530 = vsub.s32 %v4527, %v4529
    %v4531 = vrot.slane %v4009, %v4530
    %v4532 = vsel %vm2519, %v4524, %v4524
    %v4533 = vsel %vm2523, %v4524, %v4532
    %v4534 = vrot.slane %v4531, 7
    %v4535 = vsel %vm2513, %v4534, %v4533
    %v4536 = vsel %vm2517, %v4534, %v4535
    %v4537 = vsel %vm2521, %v4534, %v4536
    %v4538 = vsel %vm2525, %v4534, %v4537
    %4539 = vrot.lane.b32.xlu0 %v4538, 96
    %v4540 = vpop.permute.xlu0 %4539
    %4542 = vst.msk [vmem:[#allocation3 + $0x8] sm:$0x3] %vm4117, %v4540
    %v4543 = vld [vmem:[#allocation3] sm:$0xff]
    %v4544 = vld [vmem:[#allocation3 + $0x8] sm:$0x3]
    %v4547 = vcombine.high %v4543, %v4543
    %v4549 = vunpack.c.l.s4 1983009808
    %v4550 = vunpack.c.0.s8 %v4549
    %v4551 = vlaneseq
    %v4552 = vshrl.u32 %v4551, 7
    %v4553 = vsub.s32 %v4550, %v4552
    %v4554 = vrot.slane %v4543, %v4553
    %v4556 = vunpack.c.l.s4 1983009808
    %v4557 = vunpack.c.0.s8 %v4556
    %v4558 = vlaneseq
    %v4559 = vshrl.u32 %v4558, 7
    %v4560 = vsub.s32 %v4557, %v4559
    %v4561 = vrot.slane %v4547, %v4560
    %v4562 = vcombine.high %v4554, %v4554
    %v4563 = vcombine.high %v4561, %v4561
    %v4565 = vunpack.c.l.s4 1983009808
    %v4566 = vunpack.c.0.s8 %v4565
    %v4567 = vlaneseq
    %v4568 = vshrl.u32 %v4567, 7
    %v4569 = vsub.s32 %v4566, %v4568
    %v4570 = vrot.slane %v4544, %v4569
    %v4576 = vpack.c.bf16 %v4554, %v4554
    %v4577 = vpack.c.bf16 %v4562, %v4562
    %v4578 = vpack.c.bf16 %v4561, %v4561
    %v4579 = vpack.c.bf16 %v4563, %v4563
    %v4580 = vpack.c.bf16 %v4570, %v4570
    %v4581 = vld [vmem:[#allocation5] sm:$0xff]
    %v4582 = vld [vmem:[#allocation5 + $0x8] sm:$0xff]
    %v4583 = vld [vmem:[#allocation5 + $0x10] sm:$0xff]
    %v4584 = vld [vmem:[#allocation5 + $0x18] sm:$0xff]
    %v4585 = vld [vmem:[#allocation5 + $0x20] sm:$0xff]
    %v4586 = vld [vmem:[#allocation5 + $0x28] sm:$0xff]
    %v4587 = vld [vmem:[#allocation5 + $0x30] sm:$0xff]
    %v4588 = vld [vmem:[#allocation5 + $0x38] sm:$0xff]
    %v4589 = vld [vmem:[#allocation5 + $0x40] sm:$0xff]
    %v4590 = vld [vmem:[#allocation5 + $0x48] sm:$0xff]
    %v4591 = vld [vmem:[#allocation5 + $0x50] sm:$0xff]
    %v4592 = vld [vmem:[#allocation5 + $0x58] sm:$0xff]
    %v4593 = vld [vmem:[#allocation5 + $0x60] sm:$0xff]
    %v4594 = vld [vmem:[#allocation5 + $0x68] sm:$0xff]
    %v4595 = vld [vmem:[#allocation5 + $0x70] sm:$0xff]
    %v4596 = vld [vmem:[#allocation5 + $0x78] sm:$0xff]
    %v4597 = vld [vmem:[#allocation5 + $0x80] sm:$0xff]
    %v4598 = vld [vmem:[#allocation5 + $0x88] sm:$0xff]
    %v4599 = vld [vmem:[#allocation5 + $0x90] sm:$0xff]
    %v4600 = vld [vmem:[#allocation5 + $0x98] sm:$0xff]
    %v4601 = vld [vmem:[#allocation5 + $0xa0] sm:$0xff]
    %v4602 = vld [vmem:[#allocation5 + $0xa8] sm:$0xff]
    %v4603 = vld [vmem:[#allocation5 + $0xb0] sm:$0xff]
    %v4604 = vld [vmem:[#allocation5 + $0xb8] sm:$0xff]
    %v4605 = vld [vmem:[#allocation5 + $0xc0] sm:$0xff]
    %v4606 = vld [vmem:[#allocation5 + $0xc8] sm:$0xff]
    %v4607 = vld [vmem:[#allocation5 + $0xd0] sm:$0xff]
    %v4608 = vld [vmem:[#allocation5 + $0xd8] sm:$0xff]
    %v4609 = vld [vmem:[#allocation5 + $0xe0] sm:$0xff]
    %v4610 = vld [vmem:[#allocation5 + $0xe8] sm:$0xff]
    %v4611 = vld [vmem:[#allocation5 + $0xf0] sm:$0xff]
    %v4612 = vld [vmem:[#allocation5 + $0xf8] sm:$0xff]
    %v4613 = vld [vmem:[#allocation5 + $0x100] sm:$0xff]
    %v4614 = vld [vmem:[#allocation5 + $0x108] sm:$0xff]
    %v4615 = vld [vmem:[#allocation5 + $0x110] sm:$0xff]
    %v4616 = vld [vmem:[#allocation5 + $0x118] sm:$0xff]
    %v4617 = vld [vmem:[#allocation5 + $0x120] sm:$0xff]
    %v4618 = vld [vmem:[#allocation5 + $0x128] sm:$0xff]
    %v4619 = vld [vmem:[#allocation5 + $0x130] sm:$0xff]
    %v4620 = vld [vmem:[#allocation5 + $0x138] sm:$0xff]
    %v4621 = vld [vmem:[#allocation5 + $0x140] sm:$0xff]
    %v4622 = vld [vmem:[#allocation5 + $0x148] sm:$0xff]
    %v4623 = vld [vmem:[#allocation5 + $0x150] sm:$0xff]
    %v4624 = vld [vmem:[#allocation5 + $0x158] sm:$0xff]
    %v4625 = vld [vmem:[#allocation5 + $0x160] sm:$0xff]
    %v4626 = vld [vmem:[#allocation5 + $0x168] sm:$0xff]
    %v4627 = vld [vmem:[#allocation5 + $0x170] sm:$0xff]
    %v4628 = vld [vmem:[#allocation5 + $0x178] sm:$0xff]
    %v4629 = vld [vmem:[#allocation5 + $0x180] sm:$0xff]
    %v4630 = vld [vmem:[#allocation5 + $0x188] sm:$0xff]
    %v4631 = vld [vmem:[#allocation5 + $0x190] sm:$0xff]
    %v4632 = vld [vmem:[#allocation5 + $0x198] sm:$0xff]
    %v4633 = vld [vmem:[#allocation5 + $0x1a0] sm:$0xff]
    %v4634 = vld [vmem:[#allocation5 + $0x1a8] sm:$0xff]
    %v4635 = vld [vmem:[#allocation5 + $0x1b0] sm:$0xff]
    %v4636 = vld [vmem:[#allocation5 + $0x1b8] sm:$0xff]
    %v4637 = vld [vmem:[#allocation5 + $0x1c0] sm:$0xff]
    %v4638 = vld [vmem:[#allocation5 + $0x1c8] sm:$0xff]
    %v4639 = vld [vmem:[#allocation5 + $0x1d0] sm:$0xff]
    %v4640 = vld [vmem:[#allocation5 + $0x1d8] sm:$0xff]
    %v4641 = vld [vmem:[#allocation5 + $0x1e0] sm:$0xff]
    %v4642 = vld [vmem:[#allocation5 + $0x1e8] sm:$0xff]
    %v4643 = vld [vmem:[#allocation5 + $0x1f0] sm:$0xff]
    %v4644 = vld [vmem:[#allocation5 + $0x1f8] sm:$0xff]
    %v4645 = vld [vmem:[#allocation5 + $0x200] sm:$0xff]
    %v4646 = vld [vmem:[#allocation5 + $0x208] sm:$0xff]
    %v4647 = vld [vmem:[#allocation5 + $0x210] sm:$0xff]
    %v4648 = vld [vmem:[#allocation5 + $0x218] sm:$0xff]
    %v4649 = vld [vmem:[#allocation5 + $0x220] sm:$0xff]
    %v4650 = vld [vmem:[#allocation5 + $0x228] sm:$0xff]
    %v4651 = vld [vmem:[#allocation5 + $0x230] sm:$0xff]
    %v4652 = vld [vmem:[#allocation5 + $0x238] sm:$0xff]
    %v4653 = vld [vmem:[#allocation5 + $0x240] sm:$0xff]
    %v4654 = vld [vmem:[#allocation5 + $0x248] sm:$0xff]
    %v4655 = vld [vmem:[#allocation5 + $0x250] sm:$0xff]
    %v4656 = vld [vmem:[#allocation5 + $0x258] sm:$0xff]
    %v4657 = vld [vmem:[#allocation5 + $0x260] sm:$0xff]
    %v4658 = vld [vmem:[#allocation5 + $0x268] sm:$0xff]
    %v4659 = vld [vmem:[#allocation5 + $0x270] sm:$0xff]
    %v4660 = vld [vmem:[#allocation5 + $0x278] sm:$0xff]
    %v4661 = vld [vmem:[%s6] sm:$0x3]
    %v4663 = vlaneseq
    %v4664 = vshrl.u32 %v4663, 7
    %v4665 = vsub.s32 0, %v4664
    %v4666 = vrot.slane %v4661, %v4665
    %v4667 = vlaneseq
    %v4668 = vshrl.u32 %v4667, 7
    %v4669 = vsub.s32 1, %v4668
    %v4670 = vrot.slane %v4661, %v4669
    %v4753 = vunpack.c.l.b16 %v4581
    %v4754 = vunpack.c.h.b16 %v4581
    %v4755 = vunpack.c.l.b16 %v4582
    %v4756 = vunpack.c.h.b16 %v4582
    %v4757 = vunpack.c.l.b16 %v4583
    %v4758 = vunpack.c.h.b16 %v4583
    %v4759 = vunpack.c.l.b16 %v4584
    %v4760 = vunpack.c.h.b16 %v4584
    %v4761 = vunpack.c.l.b16 %v4585
    %v4762 = vunpack.c.h.b16 %v4585
    %v4763 = vunpack.c.l.b16 %v4586
    %v4764 = vunpack.c.h.b16 %v4586
    %v4765 = vunpack.c.l.b16 %v4587
    %v4766 = vunpack.c.h.b16 %v4587
    %v4767 = vunpack.c.l.b16 %v4588
    %v4768 = vunpack.c.h.b16 %v4588
    %v4769 = vunpack.c.l.b16 %v4589
    %v4770 = vunpack.c.h.b16 %v4589
    %v4771 = vunpack.c.l.b16 %v4590
    %v4772 = vunpack.c.h.b16 %v4590
    %v4773 = vunpack.c.l.b16 %v4591
    %v4774 = vunpack.c.h.b16 %v4591
    %v4775 = vunpack.c.l.b16 %v4592
    %v4776 = vunpack.c.h.b16 %v4592
    %v4777 = vunpack.c.l.b16 %v4593
    %v4778 = vunpack.c.h.b16 %v4593
    %v4779 = vunpack.c.l.b16 %v4594
    %v4780 = vunpack.c.h.b16 %v4594
    %v4781 = vunpack.c.l.b16 %v4595
    %v4782 = vunpack.c.h.b16 %v4595
    %v4783 = vunpack.c.l.b16 %v4596
    %v4784 = vunpack.c.h.b16 %v4596
    %v4785 = vunpack.c.l.b16 %v4597
    %v4786 = vunpack.c.h.b16 %v4597
    %v4787 = vunpack.c.l.b16 %v4598
    %v4788 = vunpack.c.h.b16 %v4598
    %v4789 = vunpack.c.l.b16 %v4599
    %v4790 = vunpack.c.h.b16 %v4599
    %v4791 = vunpack.c.l.b16 %v4600
    %v4792 = vunpack.c.h.b16 %v4600
    %v4793 = vunpack.c.l.b16 %v4601
    %v4794 = vunpack.c.h.b16 %v4601
    %v4795 = vunpack.c.l.b16 %v4602
    %v4796 = vunpack.c.h.b16 %v4602
    %v4797 = vunpack.c.l.b16 %v4603
    %v4798 = vunpack.c.h.b16 %v4603
    %v4799 = vunpack.c.l.b16 %v4604
    %v4800 = vunpack.c.h.b16 %v4604
    %v4801 = vunpack.c.l.b16 %v4605
    %v4802 = vunpack.c.h.b16 %v4605
    %v4803 = vunpack.c.l.b16 %v4606
    %v4804 = vunpack.c.h.b16 %v4606
    %v4805 = vunpack.c.l.b16 %v4607
    %v4806 = vunpack.c.h.b16 %v4607
    %v4807 = vunpack.c.l.b16 %v4608
    %v4808 = vunpack.c.h.b16 %v4608
    %v4809 = vunpack.c.l.b16 %v4609
    %v4810 = vunpack.c.h.b16 %v4609
    %v4811 = vunpack.c.l.b16 %v4610
    %v4812 = vunpack.c.h.b16 %v4610
    %v4813 = vunpack.c.l.b16 %v4611
    %v4814 = vunpack.c.h.b16 %v4611
    %v4815 = vunpack.c.l.b16 %v4612
    %v4816 = vunpack.c.h.b16 %v4612
    %v4817 = vunpack.c.l.b16 %v4613
    %v4818 = vunpack.c.h.b16 %v4613
    %v4819 = vunpack.c.l.b16 %v4614
    %v4820 = vunpack.c.h.b16 %v4614
    %v4821 = vunpack.c.l.b16 %v4615
    %v4822 = vunpack.c.h.b16 %v4615
    %v4823 = vunpack.c.l.b16 %v4616
    %v4824 = vunpack.c.h.b16 %v4616
    %v4825 = vunpack.c.l.b16 %v4617
    %v4826 = vunpack.c.h.b16 %v4617
    %v4827 = vunpack.c.l.b16 %v4618
    %v4828 = vunpack.c.h.b16 %v4618
    %v4829 = vunpack.c.l.b16 %v4619
    %v4830 = vunpack.c.h.b16 %v4619
    %v4831 = vunpack.c.l.b16 %v4620
    %v4832 = vunpack.c.h.b16 %v4620
    %v4833 = vunpack.c.l.b16 %v4621
    %v4834 = vunpack.c.h.b16 %v4621
    %v4835 = vunpack.c.l.b16 %v4622
    %v4836 = vunpack.c.h.b16 %v4622
    %v4837 = vunpack.c.l.b16 %v4623
    %v4838 = vunpack.c.h.b16 %v4623
    %v4839 = vunpack.c.l.b16 %v4624
    %v4840 = vunpack.c.h.b16 %v4624
    %v4841 = vunpack.c.l.b16 %v4625
    %v4842 = vunpack.c.h.b16 %v4625
    %v4843 = vunpack.c.l.b16 %v4626
    %v4844 = vunpack.c.h.b16 %v4626
    %v4845 = vunpack.c.l.b16 %v4627
    %v4846 = vunpack.c.h.b16 %v4627
    %v4847 = vunpack.c.l.b16 %v4628
    %v4848 = vunpack.c.h.b16 %v4628
    %v4849 = vunpack.c.l.b16 %v4629
    %v4850 = vunpack.c.h.b16 %v4629
    %v4851 = vunpack.c.l.b16 %v4630
    %v4852 = vunpack.c.h.b16 %v4630
    %v4853 = vunpack.c.l.b16 %v4631
    %v4854 = vunpack.c.h.b16 %v4631
    %v4855 = vunpack.c.l.b16 %v4632
    %v4856 = vunpack.c.h.b16 %v4632
    %v4857 = vunpack.c.l.b16 %v4633
    %v4858 = vunpack.c.h.b16 %v4633
    %v4859 = vunpack.c.l.b16 %v4634
    %v4860 = vunpack.c.h.b16 %v4634
    %v4861 = vunpack.c.l.b16 %v4635
    %v4862 = vunpack.c.h.b16 %v4635
    %v4863 = vunpack.c.l.b16 %v4636
    %v4864 = vunpack.c.h.b16 %v4636
    %v4865 = vunpack.c.l.b16 %v4637
    %v4866 = vunpack.c.h.b16 %v4637
    %v4867 = vunpack.c.l.b16 %v4638
    %v4868 = vunpack.c.h.b16 %v4638
    %v4869 = vunpack.c.l.b16 %v4639
    %v4870 = vunpack.c.h.b16 %v4639
    %v4871 = vunpack.c.l.b16 %v4640
    %v4872 = vunpack.c.h.b16 %v4640
    %v4873 = vunpack.c.l.b16 %v4641
    %v4874 = vunpack.c.h.b16 %v4641
    %v4875 = vunpack.c.l.b16 %v4642
    %v4876 = vunpack.c.h.b16 %v4642
    %v4877 = vunpack.c.l.b16 %v4643
    %v4878 = vunpack.c.h.b16 %v4643
    %v4879 = vunpack.c.l.b16 %v4644
    %v4880 = vunpack.c.h.b16 %v4644
    %v4881 = vunpack.c.l.b16 %v4645
    %v4882 = vunpack.c.h.b16 %v4645
    %v4883 = vunpack.c.l.b16 %v4646
    %v4884 = vunpack.c.h.b16 %v4646
    %v4885 = vunpack.c.l.b16 %v4647
    %v4886 = vunpack.c.h.b16 %v4647
    %v4887 = vunpack.c.l.b16 %v4648
    %v4888 = vunpack.c.h.b16 %v4648
    %v4889 = vunpack.c.l.b16 %v4649
    %v4890 = vunpack.c.h.b16 %v4649
    %v4891 = vunpack.c.l.b16 %v4650
    %v4892 = vunpack.c.h.b16 %v4650
    %v4893 = vunpack.c.l.b16 %v4651
    %v4894 = vunpack.c.h.b16 %v4651
    %v4895 = vunpack.c.l.b16 %v4652
    %v4896 = vunpack.c.h.b16 %v4652
    %v4897 = vunpack.c.l.b16 %v4653
    %v4898 = vunpack.c.h.b16 %v4653
    %v4899 = vunpack.c.l.b16 %v4654
    %v4900 = vunpack.c.h.b16 %v4654
    %v4901 = vunpack.c.l.b16 %v4655
    %v4902 = vunpack.c.h.b16 %v4655
    %v4903 = vunpack.c.l.b16 %v4656
    %v4904 = vunpack.c.h.b16 %v4656
    %v4905 = vunpack.c.l.b16 %v4657
    %v4906 = vunpack.c.h.b16 %v4657
    %v4907 = vunpack.c.l.b16 %v4658
    %v4908 = vunpack.c.h.b16 %v4658
    %v4909 = vunpack.c.l.b16 %v4659
    %v4910 = vunpack.c.h.b16 %v4659
    %v4911 = vunpack.c.l.b16 %v4660
    %v4912 = vunpack.c.h.b16 %v4660
    %v4913 = vpack.c.b16 %v4755, %v4753
    %v4914 = vpack.c.b16 %v4756, %v4754
    %v4915 = vpack.c.b16 %v4759, %v4757
    %v4916 = vpack.c.b16 %v4760, %v4758
    %v4917 = vpack.c.b16 %v4763, %v4761
    %v4918 = vpack.c.b16 %v4764, %v4762
    %v4919 = vpack.c.b16 %v4767, %v4765
    %v4920 = vpack.c.b16 %v4768, %v4766
    %v4921 = vpack.c.b16 %v4771, %v4769
    %v4922 = vpack.c.b16 %v4772, %v4770
    %v4923 = vpack.c.b16 %v4775, %v4773
    %v4924 = vpack.c.b16 %v4776, %v4774
    %v4925 = vpack.c.b16 %v4779, %v4777
    %v4926 = vpack.c.b16 %v4780, %v4778
    %v4927 = vpack.c.b16 %v4783, %v4781
    %v4928 = vpack.c.b16 %v4784, %v4782
    %v4929 = vpack.c.b16 %v4787, %v4785
    %v4930 = vpack.c.b16 %v4788, %v4786
    %v4931 = vpack.c.b16 %v4791, %v4789
    %v4932 = vpack.c.b16 %v4792, %v4790
    %v4933 = vpack.c.b16 %v4795, %v4793
    %v4934 = vpack.c.b16 %v4796, %v4794
    %v4935 = vpack.c.b16 %v4799, %v4797
    %v4936 = vpack.c.b16 %v4800, %v4798
    %v4937 = vpack.c.b16 %v4803, %v4801
    %v4938 = vpack.c.b16 %v4804, %v4802
    %v4939 = vpack.c.b16 %v4807, %v4805
    %v4940 = vpack.c.b16 %v4808, %v4806
    %v4941 = vpack.c.b16 %v4811, %v4809
    %v4942 = vpack.c.b16 %v4812, %v4810
    %v4943 = vpack.c.b16 %v4815, %v4813
    %v4944 = vpack.c.b16 %v4816, %v4814
    %v4945 = vpack.c.b16 %v4819, %v4817
    %v4946 = vpack.c.b16 %v4820, %v4818
    %v4947 = vpack.c.b16 %v4823, %v4821
    %v4948 = vpack.c.b16 %v4824, %v4822
    %v4949 = vpack.c.b16 %v4827, %v4825
    %v4950 = vpack.c.b16 %v4828, %v4826
    %v4951 = vpack.c.b16 %v4831, %v4829
    %v4952 = vpack.c.b16 %v4832, %v4830
    %v4953 = vpack.c.b16 %v4835, %v4833
    %v4954 = vpack.c.b16 %v4836, %v4834
    %v4955 = vpack.c.b16 %v4839, %v4837
    %v4956 = vpack.c.b16 %v4840, %v4838
    %v4957 = vpack.c.b16 %v4843, %v4841
    %v4958 = vpack.c.b16 %v4844, %v4842
    %v4959 = vpack.c.b16 %v4847, %v4845
    %v4960 = vpack.c.b16 %v4848, %v4846
    %v4961 = vpack.c.b16 %v4851, %v4849
    %v4962 = vpack.c.b16 %v4852, %v4850
    %v4963 = vpack.c.b16 %v4855, %v4853
    %v4964 = vpack.c.b16 %v4856, %v4854
    %v4965 = vpack.c.b16 %v4859, %v4857
    %v4966 = vpack.c.b16 %v4860, %v4858
    %v4967 = vpack.c.b16 %v4863, %v4861
    %v4968 = vpack.c.b16 %v4864, %v4862
    %v4969 = vpack.c.b16 %v4867, %v4865
    %v4970 = vpack.c.b16 %v4868, %v4866
    %v4971 = vpack.c.b16 %v4871, %v4869
    %v4972 = vpack.c.b16 %v4872, %v4870
    %v4973 = vpack.c.b16 %v4875, %v4873
    %v4974 = vpack.c.b16 %v4876, %v4874
    %v4975 = vpack.c.b16 %v4879, %v4877
    %v4976 = vpack.c.b16 %v4880, %v4878
    %v4977 = vpack.c.b16 %v4883, %v4881
    %v4978 = vpack.c.b16 %v4884, %v4882
    %v4979 = vpack.c.b16 %v4887, %v4885
    %v4980 = vpack.c.b16 %v4888, %v4886
    %v4981 = vpack.c.b16 %v4891, %v4889
    %v4982 = vpack.c.b16 %v4892, %v4890
    %v4983 = vpack.c.b16 %v4895, %v4893
    %v4984 = vpack.c.b16 %v4896, %v4894
    %v4985 = vpack.c.b16 %v4899, %v4897
    %v4986 = vpack.c.b16 %v4900, %v4898
    %v4987 = vpack.c.b16 %v4903, %v4901
    %v4988 = vpack.c.b16 %v4904, %v4902
    %v4989 = vpack.c.b16 %v4907, %v4905
    %v4990 = vpack.c.b16 %v4908, %v4906
    %v4991 = vpack.c.b16 %v4911, %v4909
    %v4992 = vpack.c.b16 %v4912, %v4910
    %5073 = vmatprep.subr.bf16.mxu0 %v4914
    %5074 = vmatpush1.bf16.msra.mxu0 %v4913
    %5075 = vmatprep.subr.bf16.mxu0 %v4916
    %5076 = vmatpush1.bf16.msra.mxu0 %v4915
    %5077 = vmatprep.subr.bf16.mxu0 %v4918
    %5078 = vmatpush1.bf16.msra.mxu0 %v4917
    %5079 = vmatprep.subr.bf16.mxu0 %v4920
    %5080 = vmatpush1.bf16.msra.mxu0 %v4919
    %5081 = vmatprep.subr.bf16.mxu0 %v4922
    %5082 = vmatpush1.bf16.msra.mxu0 %v4921
    %5083 = vmatprep.subr.bf16.mxu0 %v4924
    %5084 = vmatpush1.bf16.msra.mxu0 %v4923
    %5085 = vmatprep.subr.bf16.mxu0 %v4926
    %5086 = vmatpush1.bf16.msra.mxu0 %v4925
    %5087 = vmatprep.subr.bf16.mxu0 %v4928
    %5088 = vmatpush1.bf16.msra.mxu0 %v4927
    %5089 = vmatprep.subr.bf16.mxu0 %v4930
    %5090 = vmatpush1.bf16.msra.mxu0 %v4929
    %5091 = vmatprep.subr.bf16.mxu0 %v4932
    %5092 = vmatpush1.bf16.msra.mxu0 %v4931
    %5093 = vmatprep.subr.bf16.mxu0 %v4934
    %5094 = vmatpush1.bf16.msra.mxu0 %v4933
    %5095 = vmatprep.subr.bf16.mxu0 %v4936
    %5096 = vmatpush1.bf16.msra.mxu0 %v4935
    %5097 = vmatprep.subr.bf16.mxu0 %v4938
    %5098 = vmatpush1.bf16.msra.mxu0 %v4937
    %5099 = vmatprep.subr.bf16.mxu0 %v4940
    %5100 = vmatpush1.bf16.msra.mxu0 %v4939
    %5101 = vmatprep.subr.bf16.mxu0 %v4942
    %5102 = vmatpush1.bf16.msra.mxu0 %v4941
    %5103 = vmatprep.subr.bf16.mxu0 %v4944
    %5104 = vmatpush1.bf16.msra.mxu0 %v4943
    %5105 = vmatprep.mubr.bf16.mxu0 %v4577
    %5106 = vmatmul.mubr.bf16.gmra.mrb[0].mxu0 %v4576
    %v5107 = vpop.f32.mrb[0].mxu0
    %v5108 = vadd.f32 %v4666, %v5107
    %v5109 = vpop.f32.mrb[0].mxu0
    %v5110 = vadd.f32 %v4670, %v5109
    %v5111 = vpop.f32.mrb[0].mxu0
    %v5112 = vpop.f32.mrb[0].mxu0
    %5113 = vdwg.mxu0
    %5114 = vmatprep.subr.bf16.mxu0 %v4946
    %5115 = vmatpush1.bf16.msra.mxu0 %v4945
    %5116 = vmatprep.subr.bf16.mxu0 %v4948
    %5117 = vmatpush1.bf16.msra.mxu0 %v4947
    %5118 = vmatprep.subr.bf16.mxu0 %v4950
    %5119 = vmatpush1.bf16.msra.mxu0 %v4949
    %5120 = vmatprep.subr.bf16.mxu0 %v4952
    %5121 = vmatpush1.bf16.msra.mxu0 %v4951
    %5122 = vmatprep.subr.bf16.mxu0 %v4954
    %5123 = vmatpush1.bf16.msra.mxu0 %v4953
    %5124 = vmatprep.subr.bf16.mxu0 %v4956
    %5125 = vmatpush1.bf16.msra.mxu0 %v4955
    %5126 = vmatprep.subr.bf16.mxu0 %v4958
    %5127 = vmatpush1.bf16.msra.mxu0 %v4957
    %5128 = vmatprep.subr.bf16.mxu0 %v4960
    %5129 = vmatpush1.bf16.msra.mxu0 %v4959
    %5130 = vmatprep.subr.bf16.mxu0 %v4962
    %5131 = vmatpush1.bf16.msra.mxu0 %v4961
    %5132 = vmatprep.subr.bf16.mxu0 %v4964
    %5133 = vmatpush1.bf16.msra.mxu0 %v4963
    %5134 = vmatprep.subr.bf16.mxu0 %v4966
    %5135 = vmatpush1.bf16.msra.mxu0 %v4965
    %5136 = vmatprep.subr.bf16.mxu0 %v4968
    %5137 = vmatpush1.bf16.msra.mxu0 %v4967
    %5138 = vmatprep.subr.bf16.mxu0 %v4970
    %5139 = vmatpush1.bf16.msra.mxu0 %v4969
    %5140 = vmatprep.subr.bf16.mxu0 %v4972
    %5141 = vmatpush1.bf16.msra.mxu0 %v4971
    %5142 = vmatprep.subr.bf16.mxu0 %v4974
    %5143 = vmatpush1.bf16.msra.mxu0 %v4973
    %5144 = vmatprep.subr.bf16.mxu0 %v4976
    %5145 = vmatpush1.bf16.msra.mxu0 %v4975
    %5146 = vmatprep.mubr.bf16.mxu0 %v4579
    %5147 = vmatmul.mubr.bf16.gmra.mrb[0].mxu0 %v4578
    %v5148 = vpop.f32.mrb[0].mxu0
    %v5149 = vadd.f32 %v5108, %v5148
    %v5150 = vpop.f32.mrb[0].mxu0
    %v5151 = vadd.f32 %v5110, %v5150
    %v5152 = vpop.f32.mrb[0].mxu0
    %v5153 = vpop.f32.mrb[0].mxu0
    %5154 = vdwg.mxu0
    %5155 = vmatprep.subr.bf16.mxu0 %v4978
    %5156 = vmatpush1.bf16.msra.mxu0 %v4977
    %5157 = vmatprep.subr.bf16.mxu0 %v4980
    %5158 = vmatpush1.bf16.msra.mxu0 %v4979
    %5159 = vmatprep.subr.bf16.mxu0 %v4982
    %5160 = vmatpush1.bf16.msra.mxu0 %v4981
    %5161 = vmatprep.subr.bf16.mxu0 %v4984
    %5162 = vmatpush1.bf16.msra.mxu0 %v4983
    %5163 = vmatprep.subr.bf16.mxu0 %v4986
    %5164 = vmatpush1.bf16.msra.mxu0 %v4985
    %5165 = vmatprep.subr.bf16.mxu0 %v4988
    %5166 = vmatpush1.bf16.msra.mxu0 %v4987
    %5167 = vmatprep.subr.bf16.mxu0 %v4990
    %5168 = vmatpush1.bf16.msra.mxu0 %v4989
    %5169 = vmatprep.subr.bf16.mxu0 %v4992
    %5170 = vmatpush1.bf16.msra.mxu0 %v4991
    %5171 = vmatprep.subr.bf16.mxu0 0
    %5172 = vmatpush1.bf16.msra.mxu0 0
    %5173 = vmatprep.subr.bf16.mxu0 0
    %5174 = vmatpush1.bf16.msra.mxu0 0
    %5175 = vmatprep.subr.bf16.mxu0 0
    %5176 = vmatpush1.bf16.msra.mxu0 0
    %5177 = vmatprep.subr.bf16.mxu0 0
    %5178 = vmatpush1.bf16.msra.mxu0 0
    %5179 = vmatprep.subr.bf16.mxu0 0
    %5180 = vmatpush1.bf16.msra.mxu0 0
    %5181 = vmatprep.subr.bf16.mxu0 0
    %5182 = vmatpush1.bf16.msra.mxu0 0
    %5183 = vmatprep.subr.bf16.mxu0 0
    %5184 = vmatpush1.bf16.msra.mxu0 0
    %5185 = vmatprep.subr.bf16.mxu0 0
    %5186 = vmatpush1.bf16.msra.mxu0 0
    %5187 = vmatprep.mubr.bf16.mxu0 0
    %5188 = vmatmul.mubr.bf16.gmra.mrb[0].mxu0 %v4580
    %v5189 = vpop.f32.mrb[0].mxu0
    %v5190 = vadd.f32 %v5149, %v5189
    %v5191 = vpop.f32.mrb[0].mxu0
    %v5192 = vadd.f32 %v5151, %v5191
    %v5193 = vpop.f32.mrb[0].mxu0
    %v5194 = vpop.f32.mrb[0].mxu0
    %5195 = vdwg.mxu0
    %v5196 = vmax.f32 %v5190, 0.0
    %v5197 = vmax.f32 %v5192, 0.0
    %v5198 = vpack.c.bf16 %v5196, %v5196
    %v5199 = vpack.c.bf16 %v5197, %v5197
    %v5200 = vld [vmem:[%s7] sm:$0xf]
    %v5201 = vld [vmem:[%s7 + $0x4] sm:$0xf]
    %v5202 = vld [vmem:[%s7 + $0x8] sm:$0xf]
    %v5203 = vld [vmem:[%s7 + $0xc] sm:$0xf]
    %v5204 = vld [vmem:[%s7 + $0x10] sm:$0xf]
    %v5205 = vld [vmem:[%s7 + $0x14] sm:$0xf]
    %v5206 = vld [vmem:[%s7 + $0x18] sm:$0xf]
    %v5207 = vld [vmem:[%s7 + $0x1c] sm:$0xf]
    %v5208 = vld [vmem:[%s7 + $0x20] sm:$0xf]
    %v5209 = vld [vmem:[%s7 + $0x24] sm:$0xf]
    %v5210 = vld [vmem:[%s7 + $0x28] sm:$0xf]
    %v5211 = vld [vmem:[%s7 + $0x2c] sm:$0xf]
    %v5212 = vld [vmem:[%s7 + $0x30] sm:$0xf]
    %v5213 = vld [vmem:[%s7 + $0x34] sm:$0xf]
    %v5214 = vld [vmem:[%s7 + $0x38] sm:$0xf]
    %v5215 = vld [vmem:[%s7 + $0x3c] sm:$0xf]
    %v5216 = vld [vmem:[%s7 + $0x40] sm:$0xf]
    %v5217 = vld [vmem:[%s7 + $0x44] sm:$0xf]
    %v5218 = vld [vmem:[%s7 + $0x48] sm:$0xf]
    %v5219 = vld [vmem:[%s7 + $0x4c] sm:$0xf]
    %v5220 = vld [vmem:[%s7 + $0x50] sm:$0xf]
    %v5221 = vld [vmem:[%s7 + $0x54] sm:$0xf]
    %v5222 = vld [vmem:[%s7 + $0x58] sm:$0xf]
    %v5223 = vld [vmem:[%s7 + $0x5c] sm:$0xf]
    %v5224 = vld [vmem:[%s7 + $0x60] sm:$0xf]
    %v5225 = vld [vmem:[%s7 + $0x64] sm:$0xf]
    %v5226 = vld [vmem:[%s7 + $0x68] sm:$0xf]
    %v5227 = vld [vmem:[%s7 + $0x6c] sm:$0xf]
    %v5228 = vld [vmem:[%s7 + $0x70] sm:$0xf]
    %v5229 = vld [vmem:[%s7 + $0x74] sm:$0xf]
    %v5230 = vld [vmem:[%s7 + $0x78] sm:$0xf]
    %v5231 = vld [vmem:[%s7 + $0x7c] sm:$0xf]
    %v5232 = vld [vmem:[%s8] sm:$0x1]
    %v5234 = vlaneseq
    %v5235 = vshrl.u32 %v5234, 7
    %v5236 = vsub.s32 0, %v5235
    %v5237 = vrot.slane %v5232, %v5236
    %v5271 = vunpack.c.l.b16 %v5200
    %v5272 = vunpack.c.l.b16 %v5201
    %v5273 = vunpack.c.l.b16 %v5202
    %v5274 = vunpack.c.l.b16 %v5203
    %v5275 = vunpack.c.l.b16 %v5204
    %v5276 = vunpack.c.l.b16 %v5205
    %v5277 = vunpack.c.l.b16 %v5206
    %v5278 = vunpack.c.l.b16 %v5207
    %v5279 = vunpack.c.l.b16 %v5208
    %v5280 = vunpack.c.l.b16 %v5209
    %v5281 = vunpack.c.l.b16 %v5210
    %v5282 = vunpack.c.l.b16 %v5211
    %v5283 = vunpack.c.l.b16 %v5212
    %v5284 = vunpack.c.l.b16 %v5213
    %v5285 = vunpack.c.l.b16 %v5214
    %v5286 = vunpack.c.l.b16 %v5215
    %v5287 = vunpack.c.l.b16 %v5216
    %v5288 = vunpack.c.l.b16 %v5217
    %v5289 = vunpack.c.l.b16 %v5218
    %v5290 = vunpack.c.l.b16 %v5219
    %v5291 = vunpack.c.l.b16 %v5220
    %v5292 = vunpack.c.l.b16 %v5221
    %v5293 = vunpack.c.l.b16 %v5222
    %v5294 = vunpack.c.l.b16 %v5223
    %v5295 = vunpack.c.l.b16 %v5224
    %v5296 = vunpack.c.l.b16 %v5225
    %v5297 = vunpack.c.l.b16 %v5226
    %v5298 = vunpack.c.l.b16 %v5227
    %v5299 = vunpack.c.l.b16 %v5228
    %v5300 = vunpack.c.l.b16 %v5229
    %v5301 = vunpack.c.l.b16 %v5230
    %v5302 = vunpack.c.l.b16 %v5231
    %v5303 = vpack.c.b16 %v5272, %v5271
    %v5304 = vpack.c.b16 %v5274, %v5273
    %v5305 = vpack.c.b16 %v5276, %v5275
    %v5306 = vpack.c.b16 %v5278, %v5277
    %v5307 = vpack.c.b16 %v5280, %v5279
    %v5308 = vpack.c.b16 %v5282, %v5281
    %v5309 = vpack.c.b16 %v5284, %v5283
    %v5310 = vpack.c.b16 %v5286, %v5285
    %v5311 = vpack.c.b16 %v5288, %v5287
    %v5312 = vpack.c.b16 %v5290, %v5289
    %v5313 = vpack.c.b16 %v5292, %v5291
    %v5314 = vpack.c.b16 %v5294, %v5293
    %v5315 = vpack.c.b16 %v5296, %v5295
    %v5316 = vpack.c.b16 %v5298, %v5297
    %v5317 = vpack.c.b16 %v5300, %v5299
    %v5318 = vpack.c.b16 %v5302, %v5301
    %5335 = vmatprep.subr.bf16.mxu0 0
    %5336 = vmatpush1.bf16.msra.mxu0 %v5303
    %5337 = vmatprep.subr.bf16.mxu0 0
    %5338 = vmatpush1.bf16.msra.mxu0 %v5304
    %5339 = vmatprep.subr.bf16.mxu0 0
    %5340 = vmatpush1.bf16.msra.mxu0 %v5305
    %5341 = vmatprep.subr.bf16.mxu0 0
    %5342 = vmatpush1.bf16.msra.mxu0 %v5306
    %5343 = vmatprep.subr.bf16.mxu0 0
    %5344 = vmatpush1.bf16.msra.mxu0 %v5307
    %5345 = vmatprep.subr.bf16.mxu0 0
    %5346 = vmatpush1.bf16.msra.mxu0 %v5308
    %5347 = vmatprep.subr.bf16.mxu0 0
    %5348 = vmatpush1.bf16.msra.mxu0 %v5309
    %5349 = vmatprep.subr.bf16.mxu0 0
    %5350 = vmatpush1.bf16.msra.mxu0 %v5310
    %5351 = vmatprep.subr.bf16.mxu0 0
    %5352 = vmatpush1.bf16.msra.mxu0 %v5311
    %5353 = vmatprep.subr.bf16.mxu0 0
    %5354 = vmatpush1.bf16.msra.mxu0 %v5312
    %5355 = vmatprep.subr.bf16.mxu0 0
    %5356 = vmatpush1.bf16.msra.mxu0 %v5313
    %5357 = vmatprep.subr.bf16.mxu0 0
    %5358 = vmatpush1.bf16.msra.mxu0 %v5314
    %5359 = vmatprep.subr.bf16.mxu0 0
    %5360 = vmatpush1.bf16.msra.mxu0 %v5315
    %5361 = vmatprep.subr.bf16.mxu0 0
    %5362 = vmatpush1.bf16.msra.mxu0 %v5316
    %5363 = vmatprep.subr.bf16.mxu0 0
    %5364 = vmatpush1.bf16.msra.mxu0 %v5317
    %5365 = vmatprep.subr.bf16.mxu0 0
    %5366 = vmatpush1.bf16.msra.mxu0 %v5318
    %5367 = vmatprep.mubr.bf16.mxu0 %v5199
    %5368 = vmatmul.mubr.bf16.gmra.mrb[0].mxu0 %v5198
    %v5369 = vpop.f32.mrb[0].mxu0
    %v5370 = vadd.f32 %v5237, %v5369
    %v5371 = vpop.f32.mrb[0].mxu0
    %v5372 = vpop.f32.mrb[0].mxu0
    %v5373 = vpop.f32.mrb[0].mxu0
    %5374 = vdwg.mxu0
    %v5375 = vmax.f32 %v5370, 0.0
    %v5376 = vld [vmem:[%s9] sm:$0x1]
    %v5378 = vlaneseq
    %v5379 = vshrl.u32 %v5378, 7
    %v5380 = vsub.s32 0, %v5379
    %v5381 = vrot.slane %v5376, %v5380
    %v5383 = vmul.f32 %v5375, %v5381
    %vm5384 = vcmask 779264
    %v5385 = vsel %vm5384, %v5383, 0.0
    %5386 = vadd.xlane.f32.xlu0 %v5385
    %v5387 = vpop.xlane.xlu0 %5386
    %v5388 = vld [vmem:[#allocation4] sm:$0x1]
    %v5390 = vlaneseq
    %v5391 = vshrl.u32 %v5390, 7
    %v5392 = vsub.s32 0, %v5391
    %v5393 = vrot.slane %v5388, %v5392
    %v5395 = vadd.f32 %v5387, %v5393
    %vm5396 = vcmask 1024
    %5397 = vst.msk [vmem:[%s11] sm:$0x3] %vm5396, %v5395
    // Predicated region
    $region50: #{simple_cnn_forward.1} parent=1 // pred_check
      _
    $region51: #{simple_cnn_forward.1} parent=1 // pred_check_branch
      %5399 = sbr.rel (0) target = $region53
    $region52: #{simple_cnn_forward.1} parent=1 // pred_region
      _
    $region53: #{simple_cnn_forward.1} parent=1 // pred_fallthru
      _
    // Predicated region
    $region54: #{simple_cnn_forward.1} parent=1 // pred_check
      _
    $region55: #{simple_cnn_forward.1} parent=1 // pred_check_branch
      %5401 = sbr.rel (0) target = $region57
    $region56: #{simple_cnn_forward.1} parent=1 // pred_region
      _
    $region57: #{simple_cnn_forward.1} parent=1 // pred_fallthru
      _
    %5402 = vsyncpa [#allocation6], 1

</llo_original>
